<compile_context>
chip_gen: v6e
topology: v6e:2x2x1
jax: 0.10.0
libtpu: 0.0.40
codegen_flags: <defaults>
</compile_context>

<pallas_src>
import functools

import numpy as np

import jax
import jax.numpy as jnp
from jax.experimental import pallas as pl
from jax.experimental.pallas import tpu as pltpu


# ----------------------------------------------------------------------------- utils
def _gelu(x):
    # tanh-form GELU: transcendental lands on the EUP slot (VALU stays free).
    c = 0.7978845608028654  # sqrt(2/pi)
    return 0.5 * x * (1.0 + jnp.tanh(c * (x + 0.044715 * x * x * x)))


def _rep_spec(arr):
    """Full-array block, same block every grid step (weights / biases)."""
    nd = arr.ndim
    return pl.BlockSpec(arr.shape, lambda *_, _n=nd: (0,) * _n)


def _pick_batch_block(B, C):
    """Batch elements folded into rows per grid step.

    Whole batch in one step when small (single-TC v5e/v6e win); capped at 8 so the
    kron-over-batch variable-mixer weights never scale quadratically (v7x VMEM)."""
    if B <= 8:
        return B
    for bb in range(8, 0, -1):
        if B % bb == 0 and (bb * C) % 8 == 0:
            return bb
    return B  # fall back to a single step (blocks equal full dims -> always legal)


def _row_offsets(P, D):
    """Static offsets of the packed per-mixer row-vector slab."""
    PD, PD2 = P * D, 2 * P * D
    names = ('eb', 'g1', 'b1ln', 'b1', 'b2', 'g2', 'b2ln', 'b3', 'b4')
    widths = (PD, PD, PD, PD2, PD, PD, PD, PD2, PD)
    offs, cur = {}, 0
    for n, w in zip(names, widths):
        offs[n] = cur
        cur += w
    offs['_total'] = cur
    return offs


def do_patching(x, patch_len, stride):
    """(B, C, L) -> (B, C, P, Lp); torch .unfold semantics with `stride` tail padding."""
    B, C, L = x.shape
    pad = jnp.repeat(x[:, :, -1:], stride, axis=-1)
    xn = jnp.concatenate([x, pad], axis=-1)                       # (B, C, L+stride)
    if patch_len == 2 * stride and (L + stride) % stride == 0:
        xh = xn.reshape(B, C, (L + stride) // stride, stride)
        return jnp.concatenate([xh[:, :, :-1, :], xh[:, :, 1:, :]], axis=-1)
    num = (xn.shape[-1] - patch_len) // stride + 1
    return jnp.stack([xn[:, :, p * stride:p * stride + patch_len] for p in range(num)],
                     axis=2)


# ------------------------------------------------------------------ fused Pallas kernel
def _make_fused_kernel(meta):
    C, bb, pred = meta['C'], meta['bb'], meta['pred']
    mix_meta = meta['mixers']
    n_mix = len(mix_meta)
    R = bb * C

    def kernel(*refs):
        # ref order: for each mixer: [xp, wemb, matA, matB, rowslab] (5 each),
        # then tail: [ac, wv1, wv2, colslab, hb], then out_ref.
        xc = None
        for m, mm in enumerate(mix_meta):
            P, D = mm['P'], mm['D']
            PD, PD2 = P * D, 2 * P * D
            xp_ref, wemb_ref, matA_ref, matB_ref, row_ref = refs[m * 5:m * 5 + 5]
            ro = _row_offsets(P, D)

            # ---- patch embedding (BatchNorm folded into the input affine upstream)
            emb = jnp.dot(xp_ref[...].astype(jnp.bfloat16), wemb_ref[...],
                          preferred_element_type=jnp.float32)
            emb = emb + row_ref[:, ro['eb']:ro['eb'] + PD]

            # ---- patch mixer: LayerNorm(D) -> Linear(D,2D) -> GELU -> Linear(2D,D) + res
            ad = matA_ref[:, 0:PD]                     # kron(I_P, 1/D): LN(D) averaging
            mu = jnp.dot(emb.astype(jnp.bfloat16), ad,
                         preferred_element_type=jnp.float32)
            cen = emb - mu
            var = jnp.dot((cen * cen).astype(jnp.bfloat16), ad,
                          preferred_element_type=jnp.float32)
            ln1 = (cen * jax.lax.rsqrt(var + 1e-5)
                   * row_ref[:, ro['g1']:ro['g1'] + PD]
                   + row_ref[:, ro['b1ln']:ro['b1ln'] + PD])
            w1 = matA_ref[:, 2 * PD:2 * PD + PD2]      # kron(I_P, pm1_w^T)
            h1 = _gelu(jnp.dot(ln1.astype(jnp.bfloat16), w1,
                               preferred_element_type=jnp.float32)
                       + row_ref[:, ro['b1']:ro['b1'] + PD2])
            w2 = matB_ref[:, 0:PD]                     # kron(I_P, pm2_w^T)
            pmx = jnp.dot(h1.astype(jnp.bfloat16), w2,
                          preferred_element_type=jnp.float32)
            pmx = pmx + row_ref[:, ro['b2']:ro['b2'] + PD]
            u = pmx + emb

            # ---- time mixer: LayerNorm(P) -> Linear(P,2P) -> GELU -> Linear(2P,P) + res
            ap = matA_ref[:, PD:2 * PD]                # kron(1/P, I_D): LN(P) averaging
            mu2 = jnp.dot(u.astype(jnp.bfloat16), ap,
                          preferred_element_type=jnp.float32)
            cen2 = u - mu2
            var2 = jnp.dot((cen2 * cen2).astype(jnp.bfloat16), ap,
                           preferred_element_type=jnp.float32)
            ln2 = (cen2 * jax.lax.rsqrt(var2 + 1e-5)
                   * row_ref[:, ro['g2']:ro['g2'] + PD]
                   + row_ref[:, ro['b2ln']:ro['b2ln'] + PD])
            w3 = matA_ref[:, 2 * PD + PD2:2 * PD + 2 * PD2]     # kron(tm1_w^T, I_D)
            h2 = _gelu(jnp.dot(ln2.astype(jnp.bfloat16), w3,
                               preferred_element_type=jnp.float32)
                       + row_ref[:, ro['b3']:ro['b3'] + PD2])
            w4 = matB_ref[:, PD:2 * PD]                # kron(tm2_w^T, I_D)
            tmx = jnp.dot(h2.astype(jnp.bfloat16), w4,
                          preferred_element_type=jnp.float32)
            tmx = tmx + row_ref[:, ro['b4']:ro['b4'] + PD]
            v = tmx + u                                # (R, P*D); cols already p*D+d

            # ---- head: torch Flatten is a no-op in this layout; softmax(mix_w) folded
            whead = matA_ref[:, 2 * PD + 2 * PD2:2 * PD + 2 * PD2 + pred]
            hm = jnp.dot(v.astype(jnp.bfloat16), whead,
                         preferred_element_type=jnp.float32)
            xc = hm if xc is None else xc + hm

        ac_ref, wv1_ref, wv2_ref, col_ref, hb_ref = refs[n_mix * 5:n_mix * 5 + 5]
        out_ref = refs[n_mix * 5 + 5]
        xc = xc + hb_ref[...]                          # (R, pred) softmax-combined heads

        # ---- variable mixer: LayerNorm over channels + Linear(C,2C)/(2C,C) + residual
        mu3 = jnp.dot(ac_ref[...], xc.astype(jnp.bfloat16),
                      preferred_element_type=jnp.float32)
        cen3 = xc - mu3
        var3 = jnp.dot(ac_ref[...], (cen3 * cen3).astype(jnp.bfloat16),
                       preferred_element_type=jnp.float32)
        lnv = (cen3 * jax.lax.rsqrt(var3 + 1e-5)
               * col_ref[0:R, 0:1] + col_ref[0:R, 1:2])
        g1 = _gelu(jnp.dot(wv1_ref[...], lnv.astype(jnp.bfloat16),
                           preferred_element_type=jnp.float32) + col_ref[:, 2:3])
        vmx = jnp.dot(wv2_ref[...], g1.astype(jnp.bfloat16),
                      preferred_element_type=jnp.float32) + col_ref[0:R, 3:4]
        y = vmx + xc                                   # (R, pred)

        # ---- write (bb, pred, C): one small XLU transpose + static lane slices
        yt = jnp.transpose(y)                          # (pred, R)
        for b in range(bb):
            out_ref[b] = yt[:, b * C:(b + 1) * C].astype(out_ref.dtype)

    return kernel


# ------------------------------------------------------------ one-time weight preparation
def prepare_whp_weights(mixers, block, *, B, C, pred):
    """Host-side weight folding (kron / tile / softmax / BN fold) -- run ONCE, outside jit."""
    bb = _pick_batch_block(B, C)
    nw = jax.nn.softmax(block['mix_w'])

    w_mix, m_mix = [], []
    for i, p in enumerate(mixers):
        Lp, P, D, stride = p['Lp'], p['P'], p['D'], p['stride']
        eyeP = jnp.eye(P, dtype=jnp.float32)
        eyeD = jnp.eye(D, dtype=jnp.float32)

        wemb = jnp.kron(eyeP, p['emb_w'].T).astype(jnp.bfloat16)          # (P*Lp, P*D)
        ad = jnp.kron(eyeP, jnp.full((D, D), 1.0 / D, jnp.float32))       # LN(D) averaging
        ap = jnp.kron(jnp.full((P, P), 1.0 / P, jnp.float32), eyeD)       # LN(P) averaging
        w1 = jnp.kron(eyeP, p['pm1_w'].T)                                 # (P*D, 2P*D)
        w3 = jnp.kron(p['tm1_w'].T, eyeD)                                 # (P*D, 2P*D)
        whead = nw[i] * p['head_w'].T                                     # (P*D, pred)
        matA = jnp.concatenate([ad, ap, w1, w3, whead], axis=1).astype(jnp.bfloat16)

        w2 = jnp.kron(eyeP, p['pm2_w'].T)                                 # (2P*D, P*D)
        w4 = jnp.kron(p['tm2_w'].T, eyeD)                                 # (2P*D, P*D)
        matB = jnp.concatenate([w2, w4], axis=1).astype(jnp.bfloat16)

        ro = _row_offsets(P, D)
        segs = {
            'eb': jnp.tile(p['emb_b'], P),
            'g1': jnp.tile(p['ln1_g'], P),
            'b1ln': jnp.tile(p['ln1_b'], P),
            'b1': jnp.tile(p['pm1_b'], P),
            'b2': jnp.tile(p['pm2_b'], P),
            'g2': jnp.repeat(p['ln2_g'], D),
            'b2ln': jnp.repeat(p['ln2_b'], D),
            'b3': jnp.repeat(p['tm1_b'], D),
            'b4': jnp.repeat(p['tm2_b'], D),
        }
        slab = jnp.zeros((1, ro['_total']), jnp.float32)
        for name, vec in segs.items():
            slab = slab.at[0, ro[name]:ro[name] + vec.shape[0]].set(vec)

        # BatchNorm2d (eval) as a per-channel affine of the raw series
        sc = p['bn_gamma'] / jnp.sqrt(p['bn_var'] + 1e-5)
        sh = p['bn_beta'] - p['bn_mean'] * sc

        w_mix.append(dict(wemb=wemb, matA=matA, matB=matB, rowslab=slab,
                          bn_sc=sc, bn_sh=sh))
        m_mix.append(dict(P=P, D=D, Lp=Lp, stride=stride))

    # tail (head bias combine + variable mixer), block-diagonal over the batch block
    R, R2 = bb * C, bb * 2 * C
    hb = sum(nw[i] * mixers[i]['head_b'] for i in range(len(mixers)))
    hb = hb.reshape(1, pred).astype(jnp.float32)
    eyeb = jnp.eye(bb, dtype=jnp.float32)
    ac = jnp.kron(eyeb, jnp.full((C, C), 1.0 / C, jnp.float32)).astype(jnp.bfloat16)
    wv1 = jnp.kron(eyeb, block['vm1_w']).astype(jnp.bfloat16)            # (bb*2C, bb*C)
    wv2 = jnp.kron(eyeb, block['vm2_w']).astype(jnp.bfloat16)            # (bb*C, bb*2C)
    colslab = jnp.zeros((R2, 4), jnp.float32)
    colslab = colslab.at[:R, 0].set(jnp.tile(block['lnv_g'], bb))
    colslab = colslab.at[:R, 1].set(jnp.tile(block['lnv_b'], bb))
    colslab = colslab.at[:, 2].set(jnp.tile(block['vm1_b'], bb))
    colslab = colslab.at[:R, 3].set(jnp.tile(block['vm2_b'], bb))

    weights = dict(mixers=w_mix, tail=[ac, wv1, wv2, colslab, hb])
    meta = dict(B=B, C=C, pred=pred, bb=bb, mixers=m_mix)
    return weights, meta


# ----------------------------------------------------------------------------- forward
def whp_mixer_forward(xL, weights, *, meta):
    """xL: (batch, seq_len, channel) -> (batch, pred_length, channel)."""
    B, C, pred, bb = meta['B'], meta['C'], meta['pred'], meta['bb']
    x = jnp.transpose(xL, (0, 2, 1))                                     # (B, C, L)
    # TODO(synk): Decomposition.transform (wavelet DWT) not provided; identity path only.

    inputs, in_specs = [], []
    for mm, wm in zip(meta['mixers'], weights['mixers']):
        P, D, Lp, stride = mm['P'], mm['D'], mm['Lp'], mm['stride']
        # BN (eval) folded into a per-channel affine, then patch + per-channel flatten.
        xb = x * wm['bn_sc'][None, :, None] + wm['bn_sh'][None, :, None]
        xp = do_patching(xb, Lp, stride).reshape(B * C, P * Lp)
        inputs.append(xp)
        in_specs.append(pl.BlockSpec((bb * C, P * Lp), lambda i: (i, 0)))
        for name in ('wemb', 'matA', 'matB', 'rowslab'):
            arr = wm[name]
            inputs.append(arr)
            in_specs.append(_rep_spec(arr))
    for arr in weights['tail']:
        inputs.append(arr)
        in_specs.append(_rep_spec(arr))

    return pl.pallas_call(
        _make_fused_kernel(meta),
        grid=(B // bb,),
        in_specs=in_specs,
        out_specs=pl.BlockSpec((bb, pred, C), lambda i: (i, 0, 0)),
        out_shape=jax.ShapeDtypeStruct((B, pred, C), jnp.float32),
        compiler_params=pltpu.CompilerParams(dimension_semantics=("parallel",)),
    )(*inputs)


# ----------------------------------------------------------------------- param init
def _linear_init(key, out_f, in_f):
    kw, kb = jax.random.split(key)
    bound = 1.0 / np.sqrt(in_f)
    w = jax.random.uniform(kw, (out_f, in_f), jnp.float32, minval=-bound, maxval=bound)
    b = jax.random.uniform(kb, (out_f,), jnp.float32, minval=-bound, maxval=bound)
    return w, b


def init_multi_patch_mixer_params(key, input_seq, pred_seq, patch_len, channel):
    stride = patch_len // 2
    patch_num = (input_seq - patch_len) // stride + 2
    d_model = 2 * patch_len
    ks = jax.random.split(key, 14)
    emb_w, emb_b = _linear_init(ks[4], d_model, patch_len)
    pm1_w, pm1_b = _linear_init(ks[5], 2 * d_model, d_model)
    pm2_w, pm2_b = _linear_init(ks[6], d_model, 2 * d_model)
    tm1_w, tm1_b = _linear_init(ks[7], 2 * patch_num, patch_num)
    tm2_w, tm2_b = _linear_init(ks[8], patch_num, 2 * patch_num)
    head_w, head_b = _linear_init(ks[9], pred_seq, patch_num * d_model)
    return dict(
        Lp=patch_len, stride=stride, P=patch_num, D=d_model,
        bn_gamma=1.0 + 0.1 * jax.random.normal(ks[0], (channel,)),
        bn_beta=0.1 * jax.random.normal(ks[1], (channel,)),
        bn_mean=0.1 * jax.random.normal(ks[2], (channel,)),
        bn_var=0.5 + jax.random.uniform(ks[3], (channel,)),
        emb_w=emb_w, emb_b=emb_b,
        ln1_g=1.0 + 0.1 * jax.random.normal(ks[10], (d_model,)),
        ln1_b=0.1 * jax.random.normal(ks[11], (d_model,)),
        pm1_w=pm1_w, pm1_b=pm1_b, pm2_w=pm2_w, pm2_b=pm2_b,
        ln2_g=1.0 + 0.1 * jax.random.normal(ks[12], (patch_num,)),
        ln2_b=0.1 * jax.random.normal(ks[13], (patch_num,)),
        tm1_w=tm1_w, tm1_b=tm1_b, tm2_w=tm2_w, tm2_b=tm2_b,
        head_w=head_w, head_b=head_b,
    )


def init_mpm_block_params(key, channel):
    ks = jax.random.split(key, 5)
    vm1_w, vm1_b = _linear_init(ks[2], 2 * channel, channel)
    vm2_w, vm2_b = _linear_init(ks[3], channel, 2 * channel)
    return dict(
        mix_w=0.5 * jax.random.normal(ks[4], (3,)),
        lnv_g=1.0 + 0.1 * jax.random.normal(ks[0], (channel,)),
        lnv_b=0.1 * jax.random.normal(ks[1], (channel,)),
        vm1_w=vm1_w, vm1_b=vm1_b, vm2_w=vm2_w, vm2_b=vm2_b,
    )


# --------------------------------------------------------------------- pure-JAX reference
_HI = jax.lax.Precision.HIGHEST


def _ref_layernorm(x, g, b, eps=1e-5):
    mu = x.mean(-1, keepdims=True)
    var = ((x - mu) ** 2).mean(-1, keepdims=True)
    return (x - mu) / jnp.sqrt(var + eps) * g + b


def ref_multi_patch_mixer(x, p):
    xp = do_patching(x, p['Lp'], p['stride'])
    sc = p['bn_gamma'] / jnp.sqrt(p['bn_var'] + 1e-5)
    xb = xp * sc[None, :, None, None] + (p['bn_beta'] - p['bn_mean'] * sc)[None, :, None, None]
    emb = jnp.einsum('bcpl,dl->bcpd', xb, p['emb_w'], precision=_HI) + p['emb_b']
    t = _ref_layernorm(emb, p['ln1_g'], p['ln1_b'])
    t = jax.nn.gelu(jnp.einsum('bcpd,ed->bcpe', t, p['pm1_w'], precision=_HI) + p['pm1_b'],
                    approximate=False)
    t = jnp.einsum('bcpe,de->bcpd', t, p['pm2_w'], precision=_HI) + p['pm2_b']
    u = t + emb
    ut = jnp.swapaxes(u, 2, 3)
    t = _ref_layernorm(ut, p['ln2_g'], p['ln2_b'])
    t = jax.nn.gelu(jnp.einsum('bcdp,qp->bcdq', t, p['tm1_w'], precision=_HI) + p['tm1_b'],
                    approximate=False)
    t = jnp.einsum('bcdq,pq->bcdp', t, p['tm2_w'], precision=_HI) + p['tm2_b']
    v = jnp.swapaxes(t, 2, 3) + u
    flat = v.reshape(v.shape[0], v.shape[1], -1)
    return jnp.einsum('bcf,of->bco', flat, p['head_w'], precision=_HI) + p['head_b']


def ref_forward(xL, mixers, block, pred_length):
    x = jnp.transpose(xL, (0, 2, 1))
    outs = [ref_multi_patch_mixer(x, p) for p in mixers]
    nw = jax.nn.softmax(block['mix_w'])
    xc = nw[0] * outs[0] + nw[1] * outs[1] + nw[2] * outs[2]
    xt = jnp.swapaxes(xc, 1, 2)
    t = _ref_layernorm(xt, block['lnv_g'], block['lnv_b'])
    t = jax.nn.gelu(jnp.einsum('bpc,ec->bpe', t, block['vm1_w'], precision=_HI) + block['vm1_b'],
                    approximate=False)
    t = jnp.einsum('bpe,ce->bpc', t, block['vm2_w'], precision=_HI) + block['vm2_b']
    y = jnp.swapaxes(t, 1, 2) + xc
    y = jnp.transpose(y, (0, 2, 1))
    return y[:, -pred_length:, :]


# ----------------------------------------------------------------------------- main
if __name__ == "__main__":
    B, C, L, PRED = 2, 4, 32, 16
    patch_lens = (4, 8, 16)

    key = jax.random.PRNGKey(0)
    k_in, k_par = jax.random.split(key)
    xL = jax.random.normal(k_in, (B, L, C), jnp.float32)

    mixer_keys = jax.random.split(k_par, len(patch_lens) + 1)
    mixers = [init_multi_patch_mixer_params(mixer_keys[i], L, PRED, patch_lens[i], C)
              for i in range(len(patch_lens))]
    block = init_mpm_block_params(mixer_keys[-1], C)

    # one-time host-side folding (kron / tile / softmax / BN) -- OUTSIDE the jitted path
    weights, meta = prepare_whp_weights(mixers, block, B=B, C=C, pred=PRED)

    fwd = jax.jit(functools.partial(whp_mixer_forward, meta=meta))
    out = jax.block_until_ready(fwd(xL, weights))

    ref = ref_forward(xL, mixers, block, PRED)
    err = float(jnp.max(jnp.abs(out - ref)))
    assert out.shape == (B, PRED, C), out.shape
    # bf16 MXU operands (f32 accumulation) incl. LN-statistic matmuls, plus tanh GELU
    # vs the exact-GELU f32 reference: expected deviation O(1e-3 .. 1e-2); gate at 5e-2.
    assert err < 5e-2, f"max abs err {err}"
    print("KERNEL_OK")
</pallas_src>

<mosaic_0001>
module attributes {stable_mosaic.version = 11 : i64} {
  func.func @kernel(%arg0: i32, %arg1: memref<8x64xf32, #tpu.memory_space<vmem>>, %arg2: memref<64x128xbf16, #tpu.memory_space<vmem>>, %arg3: memref<128x784xbf16, #tpu.memory_space<vmem>>, %arg4: memref<256x256xbf16, #tpu.memory_space<vmem>>, %arg5: memref<1x1408xf32, #tpu.memory_space<vmem>>, %arg6: memref<8x64xf32, #tpu.memory_space<vmem>>, %arg7: memref<64x128xbf16, #tpu.memory_space<vmem>>, %arg8: memref<128x784xbf16, #tpu.memory_space<vmem>>, %arg9: memref<256x256xbf16, #tpu.memory_space<vmem>>, %arg10: memref<1x1408xf32, #tpu.memory_space<vmem>>, %arg11: memref<8x64xf32, #tpu.memory_space<vmem>>, %arg12: memref<64x128xbf16, #tpu.memory_space<vmem>>, %arg13: memref<128x784xbf16, #tpu.memory_space<vmem>>, %arg14: memref<256x256xbf16, #tpu.memory_space<vmem>>, %arg15: memref<1x1408xf32, #tpu.memory_space<vmem>>, %arg16: memref<8x8xbf16, #tpu.memory_space<vmem>>, %arg17: memref<16x8xbf16, #tpu.memory_space<vmem>>, %arg18: memref<8x16xbf16, #tpu.memory_space<vmem>>, %arg19: memref<16x4xf32, #tpu.memory_space<vmem>>, %arg20: memref<1x16xf32, #tpu.memory_space<vmem>>, %arg21: memref<2x16x4xf32, #tpu.memory_space<vmem>>) attributes {dimension_semantics = [#tpu.dimension_semantics<parallel>], iteration_bounds = array<i64: 1>, scalar_prefetch = 0 : i64, scratch_operands = 0 : i64, tpu.core_type = #tpu.core_type<tc>, window_params = [{transform_indices = @transform_0, window_bounds = array<i64: 8, 64>}, {pipeline_mode = #tpu.pipeline_mode<synchronous>, transform_indices = @transform_1, window_bounds = array<i64: 64, 128>}, {pipeline_mode = #tpu.pipeline_mode<synchronous>, transform_indices = @transform_2, window_bounds = array<i64: 128, 784>}, {pipeline_mode = #tpu.pipeline_mode<synchronous>, transform_indices = @transform_3, window_bounds = array<i64: 256, 256>}, {pipeline_mode = #tpu.pipeline_mode<synchronous>, transform_indices = @transform_4, window_bounds = array<i64: 1, 1408>}, {transform_indices = @transform_5, window_bounds = array<i64: 8, 64>}, {pipeline_mode = #tpu.pipeline_mode<synchronous>, transform_indices = @transform_6, window_bounds = array<i64: 64, 128>}, {pipeline_mode = #tpu.pipeline_mode<synchronous>, transform_indices = @transform_7, window_bounds = array<i64: 128, 784>}, {pipeline_mode = #tpu.pipeline_mode<synchronous>, transform_indices = @transform_8, window_bounds = array<i64: 256, 256>}, {pipeline_mode = #tpu.pipeline_mode<synchronous>, transform_indices = @transform_9, window_bounds = array<i64: 1, 1408>}, {transform_indices = @transform_10, window_bounds = array<i64: 8, 64>}, {pipeline_mode = #tpu.pipeline_mode<synchronous>, transform_indices = @transform_11, window_bounds = array<i64: 64, 128>}, {pipeline_mode = #tpu.pipeline_mode<synchronous>, transform_indices = @transform_12, window_bounds = array<i64: 128, 784>}, {pipeline_mode = #tpu.pipeline_mode<synchronous>, transform_indices = @transform_13, window_bounds = array<i64: 256, 256>}, {pipeline_mode = #tpu.pipeline_mode<synchronous>, transform_indices = @transform_14, window_bounds = array<i64: 1, 1408>}, {pipeline_mode = #tpu.pipeline_mode<synchronous>, transform_indices = @transform_15, window_bounds = array<i64: 8, 8>}, {pipeline_mode = #tpu.pipeline_mode<synchronous>, transform_indices = @transform_16, window_bounds = array<i64: 16, 8>}, {pipeline_mode = #tpu.pipeline_mode<synchronous>, transform_indices = @transform_17, window_bounds = array<i64: 8, 16>}, {pipeline_mode = #tpu.pipeline_mode<synchronous>, transform_indices = @transform_18, window_bounds = array<i64: 16, 4>}, {pipeline_mode = #tpu.pipeline_mode<synchronous>, transform_indices = @transform_19, window_bounds = array<i64: 1, 16>}, {transform_indices = @transform_20, window_bounds = array<i64: 2, 16, 4>}]} {
    %c0 = arith.constant 0 : index
    %c0_0 = arith.constant 0 : index
    %0 = vector.load %arg1[%c0, %c0_0] : memref<8x64xf32, #tpu.memory_space<vmem>>, vector<8x64xf32>
    %1 = arith.truncf %0 : vector<8x64xf32> to vector<8x64xbf16>
    %c0_1 = arith.constant 0 : index
    %c0_2 = arith.constant 0 : index
    %2 = vector.load %arg2[%c0_1, %c0_2] : memref<64x128xbf16, #tpu.memory_space<vmem>>, vector<64x128xbf16>
    %cst = arith.constant dense<0.000000e+00> : vector<8x128xf32>
    %3 = tpu.matmul %1, %2, %cst {dimension_numbers = #tpu.dot_dimension_numbers<[1], [0], [0], [1], [0, 0, 1, 1], [], []>} : vector<8x64xbf16>, vector<64x128xbf16>, vector<8x128xf32> -> vector<8x128xf32>
    %c0_3 = arith.constant 0 : index
    %c0_4 = arith.constant 0 : index
    %4 = vector.load %arg5[%c0_3, %c0_4] : memref<1x1408xf32, #tpu.memory_space<vmem>>, vector<1x128xf32>
    %5 = vector.broadcast %4 : vector<1x128xf32> to vector<8x128xf32>
    %6 = arith.addf %3, %5 : vector<8x128xf32>
    %c0_5 = arith.constant 0 : index
    %c0_6 = arith.constant 0 : index
    %7 = vector.load %arg3[%c0_5, %c0_6] : memref<128x784xbf16, #tpu.memory_space<vmem>>, vector<128x128xbf16>
    %8 = arith.truncf %6 : vector<8x128xf32> to vector<8x128xbf16>
    %cst_7 = arith.constant dense<0.000000e+00> : vector<8x128xf32>
    %9 = tpu.matmul %8, %7, %cst_7 {dimension_numbers = #tpu.dot_dimension_numbers<[1], [0], [0], [1], [0, 0, 1, 1], [], []>} : vector<8x128xbf16>, vector<128x128xbf16>, vector<8x128xf32> -> vector<8x128xf32>
    %10 = arith.subf %6, %9 : vector<8x128xf32>
    %11 = arith.mulf %10, %10 : vector<8x128xf32>
    %12 = arith.truncf %11 : vector<8x128xf32> to vector<8x128xbf16>
    %cst_8 = arith.constant dense<0.000000e+00> : vector<8x128xf32>
    %13 = tpu.matmul %12, %7, %cst_8 {dimension_numbers = #tpu.dot_dimension_numbers<[1], [0], [0], [1], [0, 0, 1, 1], [], []>} : vector<8x128xbf16>, vector<128x128xbf16>, vector<8x128xf32> -> vector<8x128xf32>
    %cst_9 = arith.constant 9.99999974E-6 : f32
    %14 = vector.broadcast %cst_9 : f32 to vector<8x128xf32>
    %15 = arith.addf %13, %14 : vector<8x128xf32>
    %16 = math.rsqrt %15 : vector<8x128xf32>
    %17 = arith.mulf %10, %16 : vector<8x128xf32>
    %c0_10 = arith.constant 0 : index
    %c128 = arith.constant 128 : index
    %18 = vector.load %arg5[%c0_10, %c128] : memref<1x1408xf32, #tpu.memory_space<vmem>>, vector<1x128xf32>
    %19 = vector.broadcast %18 : vector<1x128xf32> to vector<8x128xf32>
    %20 = arith.mulf %17, %19 : vector<8x128xf32>
    %c0_11 = arith.constant 0 : index
    %c256 = arith.constant 256 : index
    %21 = vector.load %arg5[%c0_11, %c256] : memref<1x1408xf32, #tpu.memory_space<vmem>>, vector<1x128xf32>
    %22 = vector.broadcast %21 : vector<1x128xf32> to vector<8x128xf32>
    %23 = arith.addf %20, %22 : vector<8x128xf32>
    %c0_12 = arith.constant 0 : index
    %c256_13 = arith.constant 256 : index
    %24 = vector.load %arg3[%c0_12, %c256_13] : memref<128x784xbf16, #tpu.memory_space<vmem>>, vector<128x256xbf16>
    %25 = arith.truncf %23 : vector<8x128xf32> to vector<8x128xbf16>
    %cst_14 = arith.constant dense<0.000000e+00> : vector<8x256xf32>
    %26 = tpu.matmul %25, %24, %cst_14 {dimension_numbers = #tpu.dot_dimension_numbers<[1], [0], [0], [1], [0, 0, 1, 1], [], []>} : vector<8x128xbf16>, vector<128x256xbf16>, vector<8x256xf32> -> vector<8x256xf32>
    %c0_15 = arith.constant 0 : index
    %c384 = arith.constant 384 : index
    %27 = vector.load %arg5[%c0_15, %c384] : memref<1x1408xf32, #tpu.memory_space<vmem>>, vector<1x256xf32>
    %28 = vector.broadcast %27 : vector<1x256xf32> to vector<8x256xf32>
    %29 = arith.addf %26, %28 : vector<8x256xf32>
    %cst_16 = arith.constant 5.000000e-01 : f32
    %30 = vector.broadcast %cst_16 : f32 to vector<8x256xf32>
    %31 = arith.mulf %30, %29 : vector<8x256xf32>
    %cst_17 = arith.constant 4.471500e-02 : f32
    %32 = vector.broadcast %cst_17 : f32 to vector<8x256xf32>
    %33 = arith.mulf %32, %29 : vector<8x256xf32>
    %34 = arith.mulf %33, %29 : vector<8x256xf32>
    %35 = arith.mulf %34, %29 : vector<8x256xf32>
    %36 = arith.addf %29, %35 : vector<8x256xf32>
    %cst_18 = arith.constant 0.797884583 : f32
    %37 = vector.broadcast %cst_18 : f32 to vector<8x256xf32>
    %38 = arith.mulf %37, %36 : vector<8x256xf32>
    %39 = math.tanh %38 : vector<8x256xf32>
    %cst_19 = arith.constant 1.000000e+00 : f32
    %40 = vector.broadcast %cst_19 : f32 to vector<8x256xf32>
    %41 = arith.addf %40, %39 : vector<8x256xf32>
    %42 = arith.mulf %31, %41 : vector<8x256xf32>
    %c0_20 = arith.constant 0 : index
    %c0_21 = arith.constant 0 : index
    %43 = vector.load %arg4[%c0_20, %c0_21] : memref<256x256xbf16, #tpu.memory_space<vmem>>, vector<256x128xbf16>
    %44 = arith.truncf %42 : vector<8x256xf32> to vector<8x256xbf16>
    %cst_22 = arith.constant dense<0.000000e+00> : vector<8x128xf32>
    %45 = tpu.matmul %44, %43, %cst_22 {dimension_numbers = #tpu.dot_dimension_numbers<[1], [0], [0], [1], [0, 0, 1, 1], [], []>} : vector<8x256xbf16>, vector<256x128xbf16>, vector<8x128xf32> -> vector<8x128xf32>
    %c0_23 = arith.constant 0 : index
    %c640 = arith.constant 640 : index
    %46 = vector.load %arg5[%c0_23, %c640] : memref<1x1408xf32, #tpu.memory_space<vmem>>, vector<1x128xf32>
    %47 = vector.broadcast %46 : vector<1x128xf32> to vector<8x128xf32>
    %48 = arith.addf %45, %47 : vector<8x128xf32>
    %49 = arith.addf %48, %6 : vector<8x128xf32>
    %c0_24 = arith.constant 0 : index
    %c128_25 = arith.constant 128 : index
    %50 = vector.load %arg3[%c0_24, %c128_25] : memref<128x784xbf16, #tpu.memory_space<vmem>>, vector<128x128xbf16>
    %51 = arith.truncf %49 : vector<8x128xf32> to vector<8x128xbf16>
    %cst_26 = arith.constant dense<0.000000e+00> : vector<8x128xf32>
    %52 = tpu.matmul %51, %50, %cst_26 {dimension_numbers = #tpu.dot_dimension_numbers<[1], [0], [0], [1], [0, 0, 1, 1], [], []>} : vector<8x128xbf16>, vector<128x128xbf16>, vector<8x128xf32> -> vector<8x128xf32>
    %53 = arith.subf %49, %52 : vector<8x128xf32>
    %54 = arith.mulf %53, %53 : vector<8x128xf32>
    %55 = arith.truncf %54 : vector<8x128xf32> to vector<8x128xbf16>
    %cst_27 = arith.constant dense<0.000000e+00> : vector<8x128xf32>
    %56 = tpu.matmul %55, %50, %cst_27 {dimension_numbers = #tpu.dot_dimension_numbers<[1], [0], [0], [1], [0, 0, 1, 1], [], []>} : vector<8x128xbf16>, vector<128x128xbf16>, vector<8x128xf32> -> vector<8x128xf32>
    %cst_28 = arith.constant 9.99999974E-6 : f32
    %57 = vector.broadcast %cst_28 : f32 to vector<8x128xf32>
    %58 = arith.addf %56, %57 : vector<8x128xf32>
    %59 = math.rsqrt %58 : vector<8x128xf32>
    %60 = arith.mulf %53, %59 : vector<8x128xf32>
    %c0_29 = arith.constant 0 : index
    %c768 = arith.constant 768 : index
    %61 = vector.load %arg5[%c0_29, %c768] : memref<1x1408xf32, #tpu.memory_space<vmem>>, vector<1x128xf32>
    %62 = vector.broadcast %61 : vector<1x128xf32> to vector<8x128xf32>
    %63 = arith.mulf %60, %62 : vector<8x128xf32>
    %c0_30 = arith.constant 0 : index
    %c896 = arith.constant 896 : index
    %64 = vector.load %arg5[%c0_30, %c896] : memref<1x1408xf32, #tpu.memory_space<vmem>>, vector<1x128xf32>
    %65 = vector.broadcast %64 : vector<1x128xf32> to vector<8x128xf32>
    %66 = arith.addf %63, %65 : vector<8x128xf32>
    %c0_31 = arith.constant 0 : index
    %c512 = arith.constant 512 : index
    %67 = vector.load %arg3[%c0_31, %c512] : memref<128x784xbf16, #tpu.memory_space<vmem>>, vector<128x256xbf16>
    %68 = arith.truncf %66 : vector<8x128xf32> to vector<8x128xbf16>
    %cst_32 = arith.constant dense<0.000000e+00> : vector<8x256xf32>
    %69 = tpu.matmul %68, %67, %cst_32 {dimension_numbers = #tpu.dot_dimension_numbers<[1], [0], [0], [1], [0, 0, 1, 1], [], []>} : vector<8x128xbf16>, vector<128x256xbf16>, vector<8x256xf32> -> vector<8x256xf32>
    %c0_33 = arith.constant 0 : index
    %c1024 = arith.constant 1024 : index
    %70 = vector.load %arg5[%c0_33, %c1024] : memref<1x1408xf32, #tpu.memory_space<vmem>>, vector<1x256xf32>
    %71 = vector.broadcast %70 : vector<1x256xf32> to vector<8x256xf32>
    %72 = arith.addf %69, %71 : vector<8x256xf32>
    %cst_34 = arith.constant 5.000000e-01 : f32
    %73 = vector.broadcast %cst_34 : f32 to vector<8x256xf32>
    %74 = arith.mulf %73, %72 : vector<8x256xf32>
    %cst_35 = arith.constant 4.471500e-02 : f32
    %75 = vector.broadcast %cst_35 : f32 to vector<8x256xf32>
    %76 = arith.mulf %75, %72 : vector<8x256xf32>
    %77 = arith.mulf %76, %72 : vector<8x256xf32>
    %78 = arith.mulf %77, %72 : vector<8x256xf32>
    %79 = arith.addf %72, %78 : vector<8x256xf32>
    %cst_36 = arith.constant 0.797884583 : f32
    %80 = vector.broadcast %cst_36 : f32 to vector<8x256xf32>
    %81 = arith.mulf %80, %79 : vector<8x256xf32>
    %82 = math.tanh %81 : vector<8x256xf32>
    %cst_37 = arith.constant 1.000000e+00 : f32
    %83 = vector.broadcast %cst_37 : f32 to vector<8x256xf32>
    %84 = arith.addf %83, %82 : vector<8x256xf32>
    %85 = arith.mulf %74, %84 : vector<8x256xf32>
    %c0_38 = arith.constant 0 : index
    %c128_39 = arith.constant 128 : index
    %86 = vector.load %arg4[%c0_38, %c128_39] : memref<256x256xbf16, #tpu.memory_space<vmem>>, vector<256x128xbf16>
    %87 = arith.truncf %85 : vector<8x256xf32> to vector<8x256xbf16>
    %cst_40 = arith.constant dense<0.000000e+00> : vector<8x128xf32>
    %88 = tpu.matmul %87, %86, %cst_40 {dimension_numbers = #tpu.dot_dimension_numbers<[1], [0], [0], [1], [0, 0, 1, 1], [], []>} : vector<8x256xbf16>, vector<256x128xbf16>, vector<8x128xf32> -> vector<8x128xf32>
    %c0_41 = arith.constant 0 : index
    %c1280 = arith.constant 1280 : index
    %89 = vector.load %arg5[%c0_41, %c1280] : memref<1x1408xf32, #tpu.memory_space<vmem>>, vector<1x128xf32>
    %90 = vector.broadcast %89 : vector<1x128xf32> to vector<8x128xf32>
    %91 = arith.addf %88, %90 : vector<8x128xf32>
    %92 = arith.addf %91, %49 : vector<8x128xf32>
    %c0_42 = arith.constant 0 : index
    %c768_43 = arith.constant 768 : index
    %93 = vector.load %arg3[%c0_42, %c768_43] : memref<128x784xbf16, #tpu.memory_space<vmem>>, vector<128x16xbf16>
    %94 = arith.truncf %92 : vector<8x128xf32> to vector<8x128xbf16>
    %cst_44 = arith.constant dense<0.000000e+00> : vector<8x16xf32>
    %95 = tpu.matmul %94, %93, %cst_44 {dimension_numbers = #tpu.dot_dimension_numbers<[1], [0], [0], [1], [0, 0, 1, 1], [], []>} : vector<8x128xbf16>, vector<128x16xbf16>, vector<8x16xf32> -> vector<8x16xf32>
    %c0_45 = arith.constant 0 : index
    %c0_46 = arith.constant 0 : index
    %96 = vector.load %arg6[%c0_45, %c0_46] : memref<8x64xf32, #tpu.memory_space<vmem>>, vector<8x64xf32>
    %97 = arith.truncf %96 : vector<8x64xf32> to vector<8x64xbf16>
    %c0_47 = arith.constant 0 : index
    %c0_48 = arith.constant 0 : index
    %98 = vector.load %arg7[%c0_47, %c0_48] : memref<64x128xbf16, #tpu.memory_space<vmem>>, vector<64x128xbf16>
    %cst_49 = arith.constant dense<0.000000e+00> : vector<8x128xf32>
    %99 = tpu.matmul %97, %98, %cst_49 {dimension_numbers = #tpu.dot_dimension_numbers<[1], [0], [0], [1], [0, 0, 1, 1], [], []>} : vector<8x64xbf16>, vector<64x128xbf16>, vector<8x128xf32> -> vector<8x128xf32>
    %c0_50 = arith.constant 0 : index
    %c0_51 = arith.constant 0 : index
    %100 = vector.load %arg10[%c0_50, %c0_51] : memref<1x1408xf32, #tpu.memory_space<vmem>>, vector<1x128xf32>
    %101 = vector.broadcast %100 : vector<1x128xf32> to vector<8x128xf32>
    %102 = arith.addf %99, %101 : vector<8x128xf32>
    %c0_52 = arith.constant 0 : index
    %c0_53 = arith.constant 0 : index
    %103 = vector.load %arg8[%c0_52, %c0_53] : memref<128x784xbf16, #tpu.memory_space<vmem>>, vector<128x128xbf16>
    %104 = arith.truncf %102 : vector<8x128xf32> to vector<8x128xbf16>
    %cst_54 = arith.constant dense<0.000000e+00> : vector<8x128xf32>
    %105 = tpu.matmul %104, %103, %cst_54 {dimension_numbers = #tpu.dot_dimension_numbers<[1], [0], [0], [1], [0, 0, 1, 1], [], []>} : vector<8x128xbf16>, vector<128x128xbf16>, vector<8x128xf32> -> vector<8x128xf32>
    %106 = arith.subf %102, %105 : vector<8x128xf32>
    %107 = arith.mulf %106, %106 : vector<8x128xf32>
    %108 = arith.truncf %107 : vector<8x128xf32> to vector<8x128xbf16>
    %cst_55 = arith.constant dense<0.000000e+00> : vector<8x128xf32>
    %109 = tpu.matmul %108, %103, %cst_55 {dimension_numbers = #tpu.dot_dimension_numbers<[1], [0], [0], [1], [0, 0, 1, 1], [], []>} : vector<8x128xbf16>, vector<128x128xbf16>, vector<8x128xf32> -> vector<8x128xf32>
    %cst_56 = arith.constant 9.99999974E-6 : f32
    %110 = vector.broadcast %cst_56 : f32 to vector<8x128xf32>
    %111 = arith.addf %109, %110 : vector<8x128xf32>
    %112 = math.rsqrt %111 : vector<8x128xf32>
    %113 = arith.mulf %106, %112 : vector<8x128xf32>
    %c0_57 = arith.constant 0 : index
    %c128_58 = arith.constant 128 : index
    %114 = vector.load %arg10[%c0_57, %c128_58] : memref<1x1408xf32, #tpu.memory_space<vmem>>, vector<1x128xf32>
    %115 = vector.broadcast %114 : vector<1x128xf32> to vector<8x128xf32>
    %116 = arith.mulf %113, %115 : vector<8x128xf32>
    %c0_59 = arith.constant 0 : index
    %c256_60 = arith.constant 256 : index
    %117 = vector.load %arg10[%c0_59, %c256_60] : memref<1x1408xf32, #tpu.memory_space<vmem>>, vector<1x128xf32>
    %118 = vector.broadcast %117 : vector<1x128xf32> to vector<8x128xf32>
    %119 = arith.addf %116, %118 : vector<8x128xf32>
    %c0_61 = arith.constant 0 : index
    %c256_62 = arith.constant 256 : index
    %120 = vector.load %arg8[%c0_61, %c256_62] : memref<128x784xbf16, #tpu.memory_space<vmem>>, vector<128x256xbf16>
    %121 = arith.truncf %119 : vector<8x128xf32> to vector<8x128xbf16>
    %cst_63 = arith.constant dense<0.000000e+00> : vector<8x256xf32>
    %122 = tpu.matmul %121, %120, %cst_63 {dimension_numbers = #tpu.dot_dimension_numbers<[1], [0], [0], [1], [0, 0, 1, 1], [], []>} : vector<8x128xbf16>, vector<128x256xbf16>, vector<8x256xf32> -> vector<8x256xf32>
    %c0_64 = arith.constant 0 : index
    %c384_65 = arith.constant 384 : index
    %123 = vector.load %arg10[%c0_64, %c384_65] : memref<1x1408xf32, #tpu.memory_space<vmem>>, vector<1x256xf32>
    %124 = vector.broadcast %123 : vector<1x256xf32> to vector<8x256xf32>
    %125 = arith.addf %122, %124 : vector<8x256xf32>
    %cst_66 = arith.constant 5.000000e-01 : f32
    %126 = vector.broadcast %cst_66 : f32 to vector<8x256xf32>
    %127 = arith.mulf %126, %125 : vector<8x256xf32>
    %cst_67 = arith.constant 4.471500e-02 : f32
    %128 = vector.broadcast %cst_67 : f32 to vector<8x256xf32>
    %129 = arith.mulf %128, %125 : vector<8x256xf32>
    %130 = arith.mulf %129, %125 : vector<8x256xf32>
    %131 = arith.mulf %130, %125 : vector<8x256xf32>
    %132 = arith.addf %125, %131 : vector<8x256xf32>
    %cst_68 = arith.constant 0.797884583 : f32
    %133 = vector.broadcast %cst_68 : f32 to vector<8x256xf32>
    %134 = arith.mulf %133, %132 : vector<8x256xf32>
    %135 = math.tanh %134 : vector<8x256xf32>
    %cst_69 = arith.constant 1.000000e+00 : f32
    %136 = vector.broadcast %cst_69 : f32 to vector<8x256xf32>
    %137 = arith.addf %136, %135 : vector<8x256xf32>
    %138 = arith.mulf %127, %137 : vector<8x256xf32>
    %c0_70 = arith.constant 0 : index
    %c0_71 = arith.constant 0 : index
    %139 = vector.load %arg9[%c0_70, %c0_71] : memref<256x256xbf16, #tpu.memory_space<vmem>>, vector<256x128xbf16>
    %140 = arith.truncf %138 : vector<8x256xf32> to vector<8x256xbf16>
    %cst_72 = arith.constant dense<0.000000e+00> : vector<8x128xf32>
    %141 = tpu.matmul %140, %139, %cst_72 {dimension_numbers = #tpu.dot_dimension_numbers<[1], [0], [0], [1], [0, 0, 1, 1], [], []>} : vector<8x256xbf16>, vector<256x128xbf16>, vector<8x128xf32> -> vector<8x128xf32>
    %c0_73 = arith.constant 0 : index
    %c640_74 = arith.constant 640 : index
    %142 = vector.load %arg10[%c0_73, %c640_74] : memref<1x1408xf32, #tpu.memory_space<vmem>>, vector<1x128xf32>
    %143 = vector.broadcast %142 : vector<1x128xf32> to vector<8x128xf32>
    %144 = arith.addf %141, %143 : vector<8x128xf32>
    %145 = arith.addf %144, %102 : vector<8x128xf32>
    %c0_75 = arith.constant 0 : index
    %c128_76 = arith.constant 128 : index
    %146 = vector.load %arg8[%c0_75, %c128_76] : memref<128x784xbf16, #tpu.memory_space<vmem>>, vector<128x128xbf16>
    %147 = arith.truncf %145 : vector<8x128xf32> to vector<8x128xbf16>
    %cst_77 = arith.constant dense<0.000000e+00> : vector<8x128xf32>
    %148 = tpu.matmul %147, %146, %cst_77 {dimension_numbers = #tpu.dot_dimension_numbers<[1], [0], [0], [1], [0, 0, 1, 1], [], []>} : vector<8x128xbf16>, vector<128x128xbf16>, vector<8x128xf32> -> vector<8x128xf32>
    %149 = arith.subf %145, %148 : vector<8x128xf32>
    %150 = arith.mulf %149, %149 : vector<8x128xf32>
    %151 = arith.truncf %150 : vector<8x128xf32> to vector<8x128xbf16>
    %cst_78 = arith.constant dense<0.000000e+00> : vector<8x128xf32>
    %152 = tpu.matmul %151, %146, %cst_78 {dimension_numbers = #tpu.dot_dimension_numbers<[1], [0], [0], [1], [0, 0, 1, 1], [], []>} : vector<8x128xbf16>, vector<128x128xbf16>, vector<8x128xf32> -> vector<8x128xf32>
    %cst_79 = arith.constant 9.99999974E-6 : f32
    %153 = vector.broadcast %cst_79 : f32 to vector<8x128xf32>
    %154 = arith.addf %152, %153 : vector<8x128xf32>
    %155 = math.rsqrt %154 : vector<8x128xf32>
    %156 = arith.mulf %149, %155 : vector<8x128xf32>
    %c0_80 = arith.constant 0 : index
    %c768_81 = arith.constant 768 : index
    %157 = vector.load %arg10[%c0_80, %c768_81] : memref<1x1408xf32, #tpu.memory_space<vmem>>, vector<1x128xf32>
    %158 = vector.broadcast %157 : vector<1x128xf32> to vector<8x128xf32>
    %159 = arith.mulf %156, %158 : vector<8x128xf32>
    %c0_82 = arith.constant 0 : index
    %c896_83 = arith.constant 896 : index
    %160 = vector.load %arg10[%c0_82, %c896_83] : memref<1x1408xf32, #tpu.memory_space<vmem>>, vector<1x128xf32>
    %161 = vector.broadcast %160 : vector<1x128xf32> to vector<8x128xf32>
    %162 = arith.addf %159, %161 : vector<8x128xf32>
    %c0_84 = arith.constant 0 : index
    %c512_85 = arith.constant 512 : index
    %163 = vector.load %arg8[%c0_84, %c512_85] : memref<128x784xbf16, #tpu.memory_space<vmem>>, vector<128x256xbf16>
    %164 = arith.truncf %162 : vector<8x128xf32> to vector<8x128xbf16>
    %cst_86 = arith.constant dense<0.000000e+00> : vector<8x256xf32>
    %165 = tpu.matmul %164, %163, %cst_86 {dimension_numbers = #tpu.dot_dimension_numbers<[1], [0], [0], [1], [0, 0, 1, 1], [], []>} : vector<8x128xbf16>, vector<128x256xbf16>, vector<8x256xf32> -> vector<8x256xf32>
    %c0_87 = arith.constant 0 : index
    %c1024_88 = arith.constant 1024 : index
    %166 = vector.load %arg10[%c0_87, %c1024_88] : memref<1x1408xf32, #tpu.memory_space<vmem>>, vector<1x256xf32>
    %167 = vector.broadcast %166 : vector<1x256xf32> to vector<8x256xf32>
    %168 = arith.addf %165, %167 : vector<8x256xf32>
    %cst_89 = arith.constant 5.000000e-01 : f32
    %169 = vector.broadcast %cst_89 : f32 to vector<8x256xf32>
    %170 = arith.mulf %169, %168 : vector<8x256xf32>
    %cst_90 = arith.constant 4.471500e-02 : f32
    %171 = vector.broadcast %cst_90 : f32 to vector<8x256xf32>
    %172 = arith.mulf %171, %168 : vector<8x256xf32>
    %173 = arith.mulf %172, %168 : vector<8x256xf32>
    %174 = arith.mulf %173, %168 : vector<8x256xf32>
    %175 = arith.addf %168, %174 : vector<8x256xf32>
    %cst_91 = arith.constant 0.797884583 : f32
    %176 = vector.broadcast %cst_91 : f32 to vector<8x256xf32>
    %177 = arith.mulf %176, %175 : vector<8x256xf32>
    %178 = math.tanh %177 : vector<8x256xf32>
    %cst_92 = arith.constant 1.000000e+00 : f32
    %179 = vector.broadcast %cst_92 : f32 to vector<8x256xf32>
    %180 = arith.addf %179, %178 : vector<8x256xf32>
    %181 = arith.mulf %170, %180 : vector<8x256xf32>
    %c0_93 = arith.constant 0 : index
    %c128_94 = arith.constant 128 : index
    %182 = vector.load %arg9[%c0_93, %c128_94] : memref<256x256xbf16, #tpu.memory_space<vmem>>, vector<256x128xbf16>
    %183 = arith.truncf %181 : vector<8x256xf32> to vector<8x256xbf16>
    %cst_95 = arith.constant dense<0.000000e+00> : vector<8x128xf32>
    %184 = tpu.matmul %183, %182, %cst_95 {dimension_numbers = #tpu.dot_dimension_numbers<[1], [0], [0], [1], [0, 0, 1, 1], [], []>} : vector<8x256xbf16>, vector<256x128xbf16>, vector<8x128xf32> -> vector<8x128xf32>
    %c0_96 = arith.constant 0 : index
    %c1280_97 = arith.constant 1280 : index
    %185 = vector.load %arg10[%c0_96, %c1280_97] : memref<1x1408xf32, #tpu.memory_space<vmem>>, vector<1x128xf32>
    %186 = vector.broadcast %185 : vector<1x128xf32> to vector<8x128xf32>
    %187 = arith.addf %184, %186 : vector<8x128xf32>
    %188 = arith.addf %187, %145 : vector<8x128xf32>
    %c0_98 = arith.constant 0 : index
    %c768_99 = arith.constant 768 : index
    %189 = vector.load %arg8[%c0_98, %c768_99] : memref<128x784xbf16, #tpu.memory_space<vmem>>, vector<128x16xbf16>
    %190 = arith.truncf %188 : vector<8x128xf32> to vector<8x128xbf16>
    %cst_100 = arith.constant dense<0.000000e+00> : vector<8x16xf32>
    %191 = tpu.matmul %190, %189, %cst_100 {dimension_numbers = #tpu.dot_dimension_numbers<[1], [0], [0], [1], [0, 0, 1, 1], [], []>} : vector<8x128xbf16>, vector<128x16xbf16>, vector<8x16xf32> -> vector<8x16xf32>
    %192 = arith.addf %95, %191 : vector<8x16xf32>
    %c0_101 = arith.constant 0 : index
    %c0_102 = arith.constant 0 : index
    %193 = vector.load %arg11[%c0_101, %c0_102] : memref<8x64xf32, #tpu.memory_space<vmem>>, vector<8x64xf32>
    %194 = arith.truncf %193 : vector<8x64xf32> to vector<8x64xbf16>
    %c0_103 = arith.constant 0 : index
    %c0_104 = arith.constant 0 : index
    %195 = vector.load %arg12[%c0_103, %c0_104] : memref<64x128xbf16, #tpu.memory_space<vmem>>, vector<64x128xbf16>
    %cst_105 = arith.constant dense<0.000000e+00> : vector<8x128xf32>
    %196 = tpu.matmul %194, %195, %cst_105 {dimension_numbers = #tpu.dot_dimension_numbers<[1], [0], [0], [1], [0, 0, 1, 1], [], []>} : vector<8x64xbf16>, vector<64x128xbf16>, vector<8x128xf32> -> vector<8x128xf32>
    %c0_106 = arith.constant 0 : index
    %c0_107 = arith.constant 0 : index
    %197 = vector.load %arg15[%c0_106, %c0_107] : memref<1x1408xf32, #tpu.memory_space<vmem>>, vector<1x128xf32>
    %198 = vector.broadcast %197 : vector<1x128xf32> to vector<8x128xf32>
    %199 = arith.addf %196, %198 : vector<8x128xf32>
    %c0_108 = arith.constant 0 : index
    %c0_109 = arith.constant 0 : index
    %200 = vector.load %arg13[%c0_108, %c0_109] : memref<128x784xbf16, #tpu.memory_space<vmem>>, vector<128x128xbf16>
    %201 = arith.truncf %199 : vector<8x128xf32> to vector<8x128xbf16>
    %cst_110 = arith.constant dense<0.000000e+00> : vector<8x128xf32>
    %202 = tpu.matmul %201, %200, %cst_110 {dimension_numbers = #tpu.dot_dimension_numbers<[1], [0], [0], [1], [0, 0, 1, 1], [], []>} : vector<8x128xbf16>, vector<128x128xbf16>, vector<8x128xf32> -> vector<8x128xf32>
    %203 = arith.subf %199, %202 : vector<8x128xf32>
    %204 = arith.mulf %203, %203 : vector<8x128xf32>
    %205 = arith.truncf %204 : vector<8x128xf32> to vector<8x128xbf16>
    %cst_111 = arith.constant dense<0.000000e+00> : vector<8x128xf32>
    %206 = tpu.matmul %205, %200, %cst_111 {dimension_numbers = #tpu.dot_dimension_numbers<[1], [0], [0], [1], [0, 0, 1, 1], [], []>} : vector<8x128xbf16>, vector<128x128xbf16>, vector<8x128xf32> -> vector<8x128xf32>
    %cst_112 = arith.constant 9.99999974E-6 : f32
    %207 = vector.broadcast %cst_112 : f32 to vector<8x128xf32>
    %208 = arith.addf %206, %207 : vector<8x128xf32>
    %209 = math.rsqrt %208 : vector<8x128xf32>
    %210 = arith.mulf %203, %209 : vector<8x128xf32>
    %c0_113 = arith.constant 0 : index
    %c128_114 = arith.constant 128 : index
    %211 = vector.load %arg15[%c0_113, %c128_114] : memref<1x1408xf32, #tpu.memory_space<vmem>>, vector<1x128xf32>
    %212 = vector.broadcast %211 : vector<1x128xf32> to vector<8x128xf32>
    %213 = arith.mulf %210, %212 : vector<8x128xf32>
    %c0_115 = arith.constant 0 : index
    %c256_116 = arith.constant 256 : index
    %214 = vector.load %arg15[%c0_115, %c256_116] : memref<1x1408xf32, #tpu.memory_space<vmem>>, vector<1x128xf32>
    %215 = vector.broadcast %214 : vector<1x128xf32> to vector<8x128xf32>
    %216 = arith.addf %213, %215 : vector<8x128xf32>
    %c0_117 = arith.constant 0 : index
    %c256_118 = arith.constant 256 : index
    %217 = vector.load %arg13[%c0_117, %c256_118] : memref<128x784xbf16, #tpu.memory_space<vmem>>, vector<128x256xbf16>
    %218 = arith.truncf %216 : vector<8x128xf32> to vector<8x128xbf16>
    %cst_119 = arith.constant dense<0.000000e+00> : vector<8x256xf32>
    %219 = tpu.matmul %218, %217, %cst_119 {dimension_numbers = #tpu.dot_dimension_numbers<[1], [0], [0], [1], [0, 0, 1, 1], [], []>} : vector<8x128xbf16>, vector<128x256xbf16>, vector<8x256xf32> -> vector<8x256xf32>
    %c0_120 = arith.constant 0 : index
    %c384_121 = arith.constant 384 : index
    %220 = vector.load %arg15[%c0_120, %c384_121] : memref<1x1408xf32, #tpu.memory_space<vmem>>, vector<1x256xf32>
    %221 = vector.broadcast %220 : vector<1x256xf32> to vector<8x256xf32>
    %222 = arith.addf %219, %221 : vector<8x256xf32>
    %cst_122 = arith.constant 5.000000e-01 : f32
    %223 = vector.broadcast %cst_122 : f32 to vector<8x256xf32>
    %224 = arith.mulf %223, %222 : vector<8x256xf32>
    %cst_123 = arith.constant 4.471500e-02 : f32
    %225 = vector.broadcast %cst_123 : f32 to vector<8x256xf32>
    %226 = arith.mulf %225, %222 : vector<8x256xf32>
    %227 = arith.mulf %226, %222 : vector<8x256xf32>
    %228 = arith.mulf %227, %222 : vector<8x256xf32>
    %229 = arith.addf %222, %228 : vector<8x256xf32>
    %cst_124 = arith.constant 0.797884583 : f32
    %230 = vector.broadcast %cst_124 : f32 to vector<8x256xf32>
    %231 = arith.mulf %230, %229 : vector<8x256xf32>
    %232 = math.tanh %231 : vector<8x256xf32>
    %cst_125 = arith.constant 1.000000e+00 : f32
    %233 = vector.broadcast %cst_125 : f32 to vector<8x256xf32>
    %234 = arith.addf %233, %232 : vector<8x256xf32>
    %235 = arith.mulf %224, %234 : vector<8x256xf32>
    %c0_126 = arith.constant 0 : index
    %c0_127 = arith.constant 0 : index
    %236 = vector.load %arg14[%c0_126, %c0_127] : memref<256x256xbf16, #tpu.memory_space<vmem>>, vector<256x128xbf16>
    %237 = arith.truncf %235 : vector<8x256xf32> to vector<8x256xbf16>
    %cst_128 = arith.constant dense<0.000000e+00> : vector<8x128xf32>
    %238 = tpu.matmul %237, %236, %cst_128 {dimension_numbers = #tpu.dot_dimension_numbers<[1], [0], [0], [1], [0, 0, 1, 1], [], []>} : vector<8x256xbf16>, vector<256x128xbf16>, vector<8x128xf32> -> vector<8x128xf32>
    %c0_129 = arith.constant 0 : index
    %c640_130 = arith.constant 640 : index
    %239 = vector.load %arg15[%c0_129, %c640_130] : memref<1x1408xf32, #tpu.memory_space<vmem>>, vector<1x128xf32>
    %240 = vector.broadcast %239 : vector<1x128xf32> to vector<8x128xf32>
    %241 = arith.addf %238, %240 : vector<8x128xf32>
    %242 = arith.addf %241, %199 : vector<8x128xf32>
    %c0_131 = arith.constant 0 : index
    %c128_132 = arith.constant 128 : index
    %243 = vector.load %arg13[%c0_131, %c128_132] : memref<128x784xbf16, #tpu.memory_space<vmem>>, vector<128x128xbf16>
    %244 = arith.truncf %242 : vector<8x128xf32> to vector<8x128xbf16>
    %cst_133 = arith.constant dense<0.000000e+00> : vector<8x128xf32>
    %245 = tpu.matmul %244, %243, %cst_133 {dimension_numbers = #tpu.dot_dimension_numbers<[1], [0], [0], [1], [0, 0, 1, 1], [], []>} : vector<8x128xbf16>, vector<128x128xbf16>, vector<8x128xf32> -> vector<8x128xf32>
    %246 = arith.subf %242, %245 : vector<8x128xf32>
    %247 = arith.mulf %246, %246 : vector<8x128xf32>
    %248 = arith.truncf %247 : vector<8x128xf32> to vector<8x128xbf16>
    %cst_134 = arith.constant dense<0.000000e+00> : vector<8x128xf32>
    %249 = tpu.matmul %248, %243, %cst_134 {dimension_numbers = #tpu.dot_dimension_numbers<[1], [0], [0], [1], [0, 0, 1, 1], [], []>} : vector<8x128xbf16>, vector<128x128xbf16>, vector<8x128xf32> -> vector<8x128xf32>
    %cst_135 = arith.constant 9.99999974E-6 : f32
    %250 = vector.broadcast %cst_135 : f32 to vector<8x128xf32>
    %251 = arith.addf %249, %250 : vector<8x128xf32>
    %252 = math.rsqrt %251 : vector<8x128xf32>
    %253 = arith.mulf %246, %252 : vector<8x128xf32>
    %c0_136 = arith.constant 0 : index
    %c768_137 = arith.constant 768 : index
    %254 = vector.load %arg15[%c0_136, %c768_137] : memref<1x1408xf32, #tpu.memory_space<vmem>>, vector<1x128xf32>
    %255 = vector.broadcast %254 : vector<1x128xf32> to vector<8x128xf32>
    %256 = arith.mulf %253, %255 : vector<8x128xf32>
    %c0_138 = arith.constant 0 : index
    %c896_139 = arith.constant 896 : index
    %257 = vector.load %arg15[%c0_138, %c896_139] : memref<1x1408xf32, #tpu.memory_space<vmem>>, vector<1x128xf32>
    %258 = vector.broadcast %257 : vector<1x128xf32> to vector<8x128xf32>
    %259 = arith.addf %256, %258 : vector<8x128xf32>
    %c0_140 = arith.constant 0 : index
    %c512_141 = arith.constant 512 : index
    %260 = vector.load %arg13[%c0_140, %c512_141] : memref<128x784xbf16, #tpu.memory_space<vmem>>, vector<128x256xbf16>
    %261 = arith.truncf %259 : vector<8x128xf32> to vector<8x128xbf16>
    %cst_142 = arith.constant dense<0.000000e+00> : vector<8x256xf32>
    %262 = tpu.matmul %261, %260, %cst_142 {dimension_numbers = #tpu.dot_dimension_numbers<[1], [0], [0], [1], [0, 0, 1, 1], [], []>} : vector<8x128xbf16>, vector<128x256xbf16>, vector<8x256xf32> -> vector<8x256xf32>
    %c0_143 = arith.constant 0 : index
    %c1024_144 = arith.constant 1024 : index
    %263 = vector.load %arg15[%c0_143, %c1024_144] : memref<1x1408xf32, #tpu.memory_space<vmem>>, vector<1x256xf32>
    %264 = vector.broadcast %263 : vector<1x256xf32> to vector<8x256xf32>
    %265 = arith.addf %262, %264 : vector<8x256xf32>
    %cst_145 = arith.constant 5.000000e-01 : f32
    %266 = vector.broadcast %cst_145 : f32 to vector<8x256xf32>
    %267 = arith.mulf %266, %265 : vector<8x256xf32>
    %cst_146 = arith.constant 4.471500e-02 : f32
    %268 = vector.broadcast %cst_146 : f32 to vector<8x256xf32>
    %269 = arith.mulf %268, %265 : vector<8x256xf32>
    %270 = arith.mulf %269, %265 : vector<8x256xf32>
    %271 = arith.mulf %270, %265 : vector<8x256xf32>
    %272 = arith.addf %265, %271 : vector<8x256xf32>
    %cst_147 = arith.constant 0.797884583 : f32
    %273 = vector.broadcast %cst_147 : f32 to vector<8x256xf32>
    %274 = arith.mulf %273, %272 : vector<8x256xf32>
    %275 = math.tanh %274 : vector<8x256xf32>
    %cst_148 = arith.constant 1.000000e+00 : f32
    %276 = vector.broadcast %cst_148 : f32 to vector<8x256xf32>
    %277 = arith.addf %276, %275 : vector<8x256xf32>
    %278 = arith.mulf %267, %277 : vector<8x256xf32>
    %c0_149 = arith.constant 0 : index
    %c128_150 = arith.constant 128 : index
    %279 = vector.load %arg14[%c0_149, %c128_150] : memref<256x256xbf16, #tpu.memory_space<vmem>>, vector<256x128xbf16>
    %280 = arith.truncf %278 : vector<8x256xf32> to vector<8x256xbf16>
    %cst_151 = arith.constant dense<0.000000e+00> : vector<8x128xf32>
    %281 = tpu.matmul %280, %279, %cst_151 {dimension_numbers = #tpu.dot_dimension_numbers<[1], [0], [0], [1], [0, 0, 1, 1], [], []>} : vector<8x256xbf16>, vector<256x128xbf16>, vector<8x128xf32> -> vector<8x128xf32>
    %c0_152 = arith.constant 0 : index
    %c1280_153 = arith.constant 1280 : index
    %282 = vector.load %arg15[%c0_152, %c1280_153] : memref<1x1408xf32, #tpu.memory_space<vmem>>, vector<1x128xf32>
    %283 = vector.broadcast %282 : vector<1x128xf32> to vector<8x128xf32>
    %284 = arith.addf %281, %283 : vector<8x128xf32>
    %285 = arith.addf %284, %242 : vector<8x128xf32>
    %c0_154 = arith.constant 0 : index
    %c768_155 = arith.constant 768 : index
    %286 = vector.load %arg13[%c0_154, %c768_155] : memref<128x784xbf16, #tpu.memory_space<vmem>>, vector<128x16xbf16>
    %287 = arith.truncf %285 : vector<8x128xf32> to vector<8x128xbf16>
    %cst_156 = arith.constant dense<0.000000e+00> : vector<8x16xf32>
    %288 = tpu.matmul %287, %286, %cst_156 {dimension_numbers = #tpu.dot_dimension_numbers<[1], [0], [0], [1], [0, 0, 1, 1], [], []>} : vector<8x128xbf16>, vector<128x16xbf16>, vector<8x16xf32> -> vector<8x16xf32>
    %289 = arith.addf %192, %288 : vector<8x16xf32>
    %c0_157 = arith.constant 0 : index
    %c0_158 = arith.constant 0 : index
    %290 = vector.load %arg20[%c0_157, %c0_158] : memref<1x16xf32, #tpu.memory_space<vmem>>, vector<1x16xf32>
    %291 = vector.broadcast %290 : vector<1x16xf32> to vector<8x16xf32>
    %292 = arith.addf %289, %291 : vector<8x16xf32>
    %c0_159 = arith.constant 0 : index
    %c0_160 = arith.constant 0 : index
    %293 = vector.load %arg16[%c0_159, %c0_160] : memref<8x8xbf16, #tpu.memory_space<vmem>>, vector<8x8xbf16>
    %294 = arith.truncf %292 : vector<8x16xf32> to vector<8x16xbf16>
    %cst_161 = arith.constant dense<0.000000e+00> : vector<8x16xf32>
    %295 = tpu.matmul %293, %294, %cst_161 {dimension_numbers = #tpu.dot_dimension_numbers<[1], [0], [0], [1], [0, 0, 1, 1], [], []>} : vector<8x8xbf16>, vector<8x16xbf16>, vector<8x16xf32> -> vector<8x16xf32>
    %296 = arith.subf %292, %295 : vector<8x16xf32>
    %c0_162 = arith.constant 0 : index
    %c0_163 = arith.constant 0 : index
    %297 = vector.load %arg16[%c0_162, %c0_163] : memref<8x8xbf16, #tpu.memory_space<vmem>>, vector<8x8xbf16>
    %298 = arith.mulf %296, %296 : vector<8x16xf32>
    %299 = arith.truncf %298 : vector<8x16xf32> to vector<8x16xbf16>
    %cst_164 = arith.constant dense<0.000000e+00> : vector<8x16xf32>
    %300 = tpu.matmul %297, %299, %cst_164 {dimension_numbers = #tpu.dot_dimension_numbers<[1], [0], [0], [1], [0, 0, 1, 1], [], []>} : vector<8x8xbf16>, vector<8x16xbf16>, vector<8x16xf32> -> vector<8x16xf32>
    %cst_165 = arith.constant 9.99999974E-6 : f32
    %301 = vector.broadcast %cst_165 : f32 to vector<8x16xf32>
    %302 = arith.addf %300, %301 : vector<8x16xf32>
    %303 = math.rsqrt %302 : vector<8x16xf32>
    %304 = arith.mulf %296, %303 : vector<8x16xf32>
    %c0_166 = arith.constant 0 : index
    %c0_167 = arith.constant 0 : index
    %305 = vector.load %arg19[%c0_166, %c0_167] : memref<16x4xf32, #tpu.memory_space<vmem>>, vector<8x1xf32>
    %306 = vector.broadcast %305 : vector<8x1xf32> to vector<8x16xf32>
    %307 = arith.mulf %304, %306 : vector<8x16xf32>
    %c0_168 = arith.constant 0 : index
    %c1 = arith.constant 1 : index
    %308 = vector.load %arg19[%c0_168, %c1] : memref<16x4xf32, #tpu.memory_space<vmem>>, vector<8x1xf32>
    %309 = vector.broadcast %308 : vector<8x1xf32> to vector<8x16xf32>
    %310 = arith.addf %307, %309 : vector<8x16xf32>
    %c0_169 = arith.constant 0 : index
    %c0_170 = arith.constant 0 : index
    %311 = vector.load %arg17[%c0_169, %c0_170] : memref<16x8xbf16, #tpu.memory_space<vmem>>, vector<16x8xbf16>
    %312 = arith.truncf %310 : vector<8x16xf32> to vector<8x16xbf16>
    %cst_171 = arith.constant dense<0.000000e+00> : vector<16x16xf32>
    %313 = tpu.matmul %311, %312, %cst_171 {dimension_numbers = #tpu.dot_dimension_numbers<[1], [0], [0], [1], [0, 0, 1, 1], [], []>} : vector<16x8xbf16>, vector<8x16xbf16>, vector<16x16xf32> -> vector<16x16xf32>
    %c0_172 = arith.constant 0 : index
    %c2 = arith.constant 2 : index
    %314 = vector.load %arg19[%c0_172, %c2] : memref<16x4xf32, #tpu.memory_space<vmem>>, vector<16x1xf32>
    %315 = vector.broadcast %314 : vector<16x1xf32> to vector<16x16xf32>
    %316 = arith.addf %313, %315 : vector<16x16xf32>
    %cst_173 = arith.constant 5.000000e-01 : f32
    %317 = vector.broadcast %cst_173 : f32 to vector<16x16xf32>
    %318 = arith.mulf %317, %316 : vector<16x16xf32>
    %cst_174 = arith.constant 4.471500e-02 : f32
    %319 = vector.broadcast %cst_174 : f32 to vector<16x16xf32>
    %320 = arith.mulf %319, %316 : vector<16x16xf32>
    %321 = arith.mulf %320, %316 : vector<16x16xf32>
    %322 = arith.mulf %321, %316 : vector<16x16xf32>
    %323 = arith.addf %316, %322 : vector<16x16xf32>
    %cst_175 = arith.constant 0.797884583 : f32
    %324 = vector.broadcast %cst_175 : f32 to vector<16x16xf32>
    %325 = arith.mulf %324, %323 : vector<16x16xf32>
    %326 = math.tanh %325 : vector<16x16xf32>
    %cst_176 = arith.constant 1.000000e+00 : f32
    %327 = vector.broadcast %cst_176 : f32 to vector<16x16xf32>
    %328 = arith.addf %327, %326 : vector<16x16xf32>
    %329 = arith.mulf %318, %328 : vector<16x16xf32>
    %c0_177 = arith.constant 0 : index
    %c0_178 = arith.constant 0 : index
    %330 = vector.load %arg18[%c0_177, %c0_178] : memref<8x16xbf16, #tpu.memory_space<vmem>>, vector<8x16xbf16>
    %331 = arith.truncf %329 : vector<16x16xf32> to vector<16x16xbf16>
    %cst_179 = arith.constant dense<0.000000e+00> : vector<8x16xf32>
    %332 = tpu.matmul %330, %331, %cst_179 {dimension_numbers = #tpu.dot_dimension_numbers<[1], [0], [0], [1], [0, 0, 1, 1], [], []>} : vector<8x16xbf16>, vector<16x16xbf16>, vector<8x16xf32> -> vector<8x16xf32>
    %c0_180 = arith.constant 0 : index
    %c3 = arith.constant 3 : index
    %333 = vector.load %arg19[%c0_180, %c3] : memref<16x4xf32, #tpu.memory_space<vmem>>, vector<8x1xf32>
    %334 = vector.broadcast %333 : vector<8x1xf32> to vector<8x16xf32>
    %335 = arith.addf %332, %334 : vector<8x16xf32>
    %336 = arith.addf %335, %292 : vector<8x16xf32>
    %337 = tpu.transpose %336, [1, 0] : vector<8x16xf32> -> vector<16x8xf32>
    %338 = vector.extract_strided_slice %337 {offsets = [0, 0], sizes = [16, 4], strides = [1, 1]} : vector<16x8xf32> to vector<16x4xf32>
    %c0_181 = arith.constant 0 : index
    %c0_182 = arith.constant 0 : index
    %c0_183 = arith.constant 0 : index
    %339 = vector.load %arg21[%c0_181, %c0_182, %c0_183] : memref<2x16x4xf32, #tpu.memory_space<vmem>>, vector<1x16x4xf32>
    %340 = vector.shape_cast %339 : vector<1x16x4xf32> to vector<16x4xf32>
    %341 = vector.shape_cast %338 : vector<16x4xf32> to vector<1x16x4xf32>
    tpu.vector_store %arg21[%c0_181, %c0_182, %c0_183], %341 {strides = array<i32>} : memref<2x16x4xf32, #tpu.memory_space<vmem>>, vector<1x16x4xf32>,
    %342 = vector.extract_strided_slice %337 {offsets = [0, 4], sizes = [16, 4], strides = [1, 1]} : vector<16x8xf32> to vector<16x4xf32>
    %c1_184 = arith.constant 1 : index
    %c0_185 = arith.constant 0 : index
    %c0_186 = arith.constant 0 : index
    %343 = vector.load %arg21[%c1_184, %c0_185, %c0_186] : memref<2x16x4xf32, #tpu.memory_space<vmem>>, vector<1x16x4xf32>
    %344 = vector.shape_cast %343 : vector<1x16x4xf32> to vector<16x4xf32>
    %345 = vector.shape_cast %342 : vector<16x4xf32> to vector<1x16x4xf32>
    tpu.vector_store %arg21[%c1_184, %c0_185, %c0_186], %345 {strides = array<i32>} : memref<2x16x4xf32, #tpu.memory_space<vmem>>, vector<1x16x4xf32>,
    return
  }
  func.func @transform_0(%arg0: i32) -> (i32, i32) {
    %c0_i32 = arith.constant 0 : i32
    %c0_i32_0 = arith.constant 0 : i32
    return %arg0, %c0_i32 : i32, i32
  }
  func.func @transform_1(%arg0: i32) -> (i32, i32) {
    %c0_i32 = arith.constant 0 : i32
    %c0_i32_0 = arith.constant 0 : i32
    %c0_i32_1 = arith.constant 0 : i32
    return %c0_i32, %c0_i32_0 : i32, i32
  }
  func.func @transform_2(%arg0: i32) -> (i32, i32) {
    %c0_i32 = arith.constant 0 : i32
    %c0_i32_0 = arith.constant 0 : i32
    %c0_i32_1 = arith.constant 0 : i32
    return %c0_i32, %c0_i32_0 : i32, i32
  }
  func.func @transform_3(%arg0: i32) -> (i32, i32) {
    %c0_i32 = arith.constant 0 : i32
    %c0_i32_0 = arith.constant 0 : i32
    %c0_i32_1 = arith.constant 0 : i32
    return %c0_i32, %c0_i32_0 : i32, i32
  }
  func.func @transform_4(%arg0: i32) -> (i32, i32) {
    %c0_i32 = arith.constant 0 : i32
    %c0_i32_0 = arith.constant 0 : i32
    %c0_i32_1 = arith.constant 0 : i32
    return %c0_i32, %c0_i32_0 : i32, i32
  }
  func.func @transform_5(%arg0: i32) -> (i32, i32) {
    %c0_i32 = arith.constant 0 : i32
    %c0_i32_0 = arith.constant 0 : i32
    return %arg0, %c0_i32 : i32, i32
  }
  func.func @transform_6(%arg0: i32) -> (i32, i32) {
    %c0_i32 = arith.constant 0 : i32
    %c0_i32_0 = arith.constant 0 : i32
    %c0_i32_1 = arith.constant 0 : i32
    return %c0_i32, %c0_i32_0 : i32, i32
  }
  func.func @transform_7(%arg0: i32) -> (i32, i32) {
    %c0_i32 = arith.constant 0 : i32
    %c0_i32_0 = arith.constant 0 : i32
    %c0_i32_1 = arith.constant 0 : i32
    return %c0_i32, %c0_i32_0 : i32, i32
  }
  func.func @transform_8(%arg0: i32) -> (i32, i32) {
    %c0_i32 = arith.constant 0 : i32
    %c0_i32_0 = arith.constant 0 : i32
    %c0_i32_1 = arith.constant 0 : i32
    return %c0_i32, %c0_i32_0 : i32, i32
  }
  func.func @transform_9(%arg0: i32) -> (i32, i32) {
    %c0_i32 = arith.constant 0 : i32
    %c0_i32_0 = arith.constant 0 : i32
    %c0_i32_1 = arith.constant 0 : i32
    return %c0_i32, %c0_i32_0 : i32, i32
  }
  func.func @transform_10(%arg0: i32) -> (i32, i32) {
    %c0_i32 = arith.constant 0 : i32
    %c0_i32_0 = arith.constant 0 : i32
    return %arg0, %c0_i32 : i32, i32
  }
  func.func @transform_11(%arg0: i32) -> (i32, i32) {
    %c0_i32 = arith.constant 0 : i32
    %c0_i32_0 = arith.constant 0 : i32
    %c0_i32_1 = arith.constant 0 : i32
    return %c0_i32, %c0_i32_0 : i32, i32
  }
  func.func @transform_12(%arg0: i32) -> (i32, i32) {
    %c0_i32 = arith.constant 0 : i32
    %c0_i32_0 = arith.constant 0 : i32
    %c0_i32_1 = arith.constant 0 : i32
    return %c0_i32, %c0_i32_0 : i32, i32
  }
  func.func @transform_13(%arg0: i32) -> (i32, i32) {
    %c0_i32 = arith.constant 0 : i32
    %c0_i32_0 = arith.constant 0 : i32
    %c0_i32_1 = arith.constant 0 : i32
    return %c0_i32, %c0_i32_0 : i32, i32
  }
  func.func @transform_14(%arg0: i32) -> (i32, i32) {
    %c0_i32 = arith.constant 0 : i32
    %c0_i32_0 = arith.constant 0 : i32
    %c0_i32_1 = arith.constant 0 : i32
    return %c0_i32, %c0_i32_0 : i32, i32
  }
  func.func @transform_15(%arg0: i32) -> (i32, i32) {
    %c0_i32 = arith.constant 0 : i32
    %c0_i32_0 = arith.constant 0 : i32
    %c0_i32_1 = arith.constant 0 : i32
    return %c0_i32, %c0_i32_0 : i32, i32
  }
  func.func @transform_16(%arg0: i32) -> (i32, i32) {
    %c0_i32 = arith.constant 0 : i32
    %c0_i32_0 = arith.constant 0 : i32
    %c0_i32_1 = arith.constant 0 : i32
    return %c0_i32, %c0_i32_0 : i32, i32
  }
  func.func @transform_17(%arg0: i32) -> (i32, i32) {
    %c0_i32 = arith.constant 0 : i32
    %c0_i32_0 = arith.constant 0 : i32
    %c0_i32_1 = arith.constant 0 : i32
    return %c0_i32, %c0_i32_0 : i32, i32
  }
  func.func @transform_18(%arg0: i32) -> (i32, i32) {
    %c0_i32 = arith.constant 0 : i32
    %c0_i32_0 = arith.constant 0 : i32
    %c0_i32_1 = arith.constant 0 : i32
    return %c0_i32, %c0_i32_0 : i32, i32
  }
  func.func @transform_19(%arg0: i32) -> (i32, i32) {
    %c0_i32 = arith.constant 0 : i32
    %c0_i32_0 = arith.constant 0 : i32
    %c0_i32_1 = arith.constant 0 : i32
    return %c0_i32, %c0_i32_0 : i32, i32
  }
  func.func @transform_20(%arg0: i32) -> (i32, i32, i32) {
    %c0_i32 = arith.constant 0 : i32
    %c0_i32_0 = arith.constant 0 : i32
    %c0_i32_1 = arith.constant 0 : i32
    return %arg0, %c0_i32, %c0_i32_0 : i32, i32, i32
  }
}

</mosaic_0001>

<llo_original>
// kernel: whp_mixer_forward.1
$region0: #{whp_mixer_forward.1}
  #allocation0 [shape = 'u32[]', space=smem, size = 0x4, offset = 0x4, fixed_abs, tag = 'smem constant byte address 0x4 - core index']
  #allocation1 [shape = 'u32[144,128]{1,0:T(1,128)}', space=vmem, size = 0x12000, scoped, tag = 'internal scratch']
  %s0 = inlined_call_operand.vmem [shape: f32[8,64], index: 0, kind: input, shape index: {}]
  %s1 = inlined_call_operand.vmem [shape: bf16[64,128], index: 1, kind: input, shape index: {}]
  %s2 = inlined_call_operand.vmem [shape: bf16[128,784], index: 2, kind: input, shape index: {}]
  %s3 = inlined_call_operand.vmem [shape: bf16[256,256], index: 3, kind: input, shape index: {}]
  %s4 = inlined_call_operand.vmem [shape: f32[1,1408], index: 4, kind: input, shape index: {}]
  %s5 = inlined_call_operand.vmem [shape: f32[8,64], index: 5, kind: input, shape index: {}]
  %s6 = inlined_call_operand.vmem [shape: bf16[64,128], index: 6, kind: input, shape index: {}]
  %s7 = inlined_call_operand.vmem [shape: bf16[128,784], index: 7, kind: input, shape index: {}]
  %s8 = inlined_call_operand.vmem [shape: bf16[256,256], index: 8, kind: input, shape index: {}]
  %s9 = inlined_call_operand.vmem [shape: f32[1,1408], index: 9, kind: input, shape index: {}]
  %s10 = inlined_call_operand.vmem [shape: f32[8,64], index: 10, kind: input, shape index: {}]
  %s11 = inlined_call_operand.vmem [shape: bf16[64,128], index: 11, kind: input, shape index: {}]
  %s12 = inlined_call_operand.vmem [shape: bf16[128,784], index: 12, kind: input, shape index: {}]
  %s13 = inlined_call_operand.vmem [shape: bf16[256,256], index: 13, kind: input, shape index: {}]
  %s14 = inlined_call_operand.vmem [shape: f32[1,1408], index: 14, kind: input, shape index: {}]
  %s15 = inlined_call_operand.vmem [shape: bf16[8,8], index: 15, kind: input, shape index: {}]
  %s16 = inlined_call_operand.vmem [shape: bf16[16,8], index: 16, kind: input, shape index: {}]
  %s17 = inlined_call_operand.vmem [shape: bf16[8,16], index: 17, kind: input, shape index: {}]
  %s18 = inlined_call_operand.vmem [shape: f32[16,4], index: 18, kind: input, shape index: {}]
  %s19 = inlined_call_operand.vmem [shape: f32[1,16], index: 19, kind: input, shape index: {}]
  %s20 = inlined_call_operand.vmem [shape: f32[2,16,4], index: 20, kind: output, shape index: {}]
  %s21 = sld [smem:[#allocation0]]
  $region90: #{whp_mixer_forward.1} parent=0
    _
  %s23 = ssub.s32 1, %s21
  %s24 = scalar_select 0, %s23, %s21
  // Predicated region
  $region2: #{whp_mixer_forward.1} parent=0 // pred_check
    _
  $region3: #{whp_mixer_forward.1} parent=0 // pred_check_branch
    %26 = sbr.rel (0) target = $region5
  $region4: #{whp_mixer_forward.1} parent=0 // pred_region
    _
  $region5: #{whp_mixer_forward.1} parent=0 // pred_fallthru
    _
  // Predicated region
  $region6: #{whp_mixer_forward.1} parent=0 // pred_check
    _
  $region7: #{whp_mixer_forward.1} parent=0 // pred_check_branch
    %28 = sbr.rel (0) target = $region9
  $region8: #{whp_mixer_forward.1} parent=0 // pred_region
    _
  $region9: #{whp_mixer_forward.1} parent=0 // pred_fallthru
    _
  // Predicated region
  $region10: #{whp_mixer_forward.1} parent=0 // pred_check
    _
  $region11: #{whp_mixer_forward.1} parent=0 // pred_check_branch
    %30 = sbr.rel (0) target = $region13
  $region12: #{whp_mixer_forward.1} parent=0 // pred_region
    _
  $region13: #{whp_mixer_forward.1} parent=0 // pred_fallthru
    _
  // Predicated region
  $region14: #{whp_mixer_forward.1} parent=0 // pred_check
    _
  $region15: #{whp_mixer_forward.1} parent=0 // pred_check_branch
    %32 = sbr.rel (0) target = $region17
  $region16: #{whp_mixer_forward.1} parent=0 // pred_region
    _
  $region17: #{whp_mixer_forward.1} parent=0 // pred_fallthru
    _
  // Predicated region
  $region18: #{whp_mixer_forward.1} parent=0 // pred_check
    _
  $region19: #{whp_mixer_forward.1} parent=0 // pred_check_branch
    %34 = sbr.rel (0) target = $region21
  $region20: #{whp_mixer_forward.1} parent=0 // pred_region
    _
  $region21: #{whp_mixer_forward.1} parent=0 // pred_fallthru
    _
  // Predicated region
  $region22: #{whp_mixer_forward.1} parent=0 // pred_check
    _
  $region23: #{whp_mixer_forward.1} parent=0 // pred_check_branch
    %36 = sbr.rel (0) target = $region25
  $region24: #{whp_mixer_forward.1} parent=0 // pred_region
    _
  $region25: #{whp_mixer_forward.1} parent=0 // pred_fallthru
    _
  // Predicated region
  $region26: #{whp_mixer_forward.1} parent=0 // pred_check
    _
  $region27: #{whp_mixer_forward.1} parent=0 // pred_check_branch
    %38 = sbr.rel (0) target = $region29
  $region28: #{whp_mixer_forward.1} parent=0 // pred_region
    _
  $region29: #{whp_mixer_forward.1} parent=0 // pred_fallthru
    _
  // Predicated region
  $region30: #{whp_mixer_forward.1} parent=0 // pred_check
    _
  $region31: #{whp_mixer_forward.1} parent=0 // pred_check_branch
    %40 = sbr.rel (0) target = $region33
  $region32: #{whp_mixer_forward.1} parent=0 // pred_region
    _
  $region33: #{whp_mixer_forward.1} parent=0 // pred_fallthru
    _
  // Predicated region
  $region34: #{whp_mixer_forward.1} parent=0 // pred_check
    _
  $region35: #{whp_mixer_forward.1} parent=0 // pred_check_branch
    %42 = sbr.rel (0) target = $region37
  $region36: #{whp_mixer_forward.1} parent=0 // pred_region
    _
  $region37: #{whp_mixer_forward.1} parent=0 // pred_fallthru
    _
  // Predicated region
  $region38: #{whp_mixer_forward.1} parent=0 // pred_check
    _
  $region39: #{whp_mixer_forward.1} parent=0 // pred_check_branch
    %44 = sbr.rel (0) target = $region41
  $region40: #{whp_mixer_forward.1} parent=0 // pred_region
    _
  $region41: #{whp_mixer_forward.1} parent=0 // pred_fallthru
    _
  // Predicated region
  $region42: #{whp_mixer_forward.1} parent=0 // pred_check
    _
  $region43: #{whp_mixer_forward.1} parent=0 // pred_check_branch
    %46 = sbr.rel (0) target = $region45
  $region44: #{whp_mixer_forward.1} parent=0 // pred_region
    _
  $region45: #{whp_mixer_forward.1} parent=0 // pred_fallthru
    _
  // Predicated region
  $region46: #{whp_mixer_forward.1} parent=0 // pred_check
    _
  $region47: #{whp_mixer_forward.1} parent=0 // pred_check_branch
    %48 = sbr.rel (0) target = $region49
  $region48: #{whp_mixer_forward.1} parent=0 // pred_region
    _
  $region49: #{whp_mixer_forward.1} parent=0 // pred_fallthru
    _
  // Predicated region
  $region50: #{whp_mixer_forward.1} parent=0 // pred_check
    _
  $region51: #{whp_mixer_forward.1} parent=0 // pred_check_branch
    %50 = sbr.rel (0) target = $region53
  $region52: #{whp_mixer_forward.1} parent=0 // pred_region
    _
  $region53: #{whp_mixer_forward.1} parent=0 // pred_fallthru
    _
  // Predicated region
  $region54: #{whp_mixer_forward.1} parent=0 // pred_check
    _
  $region55: #{whp_mixer_forward.1} parent=0 // pred_check_branch
    %52 = sbr.rel (0) target = $region57
  $region56: #{whp_mixer_forward.1} parent=0 // pred_region
    _
  $region57: #{whp_mixer_forward.1} parent=0 // pred_fallthru
    _
  // Predicated region
  $region58: #{whp_mixer_forward.1} parent=0 // pred_check
    _
  $region59: #{whp_mixer_forward.1} parent=0 // pred_check_branch
    %54 = sbr.rel (0) target = $region61
  $region60: #{whp_mixer_forward.1} parent=0 // pred_region
    _
  $region61: #{whp_mixer_forward.1} parent=0 // pred_fallthru
    _
  // Predicated region
  $region62: #{whp_mixer_forward.1} parent=0 // pred_check
    _
  $region63: #{whp_mixer_forward.1} parent=0 // pred_check_branch
    %56 = sbr.rel (0) target = $region65
  $region64: #{whp_mixer_forward.1} parent=0 // pred_region
    _
  $region65: #{whp_mixer_forward.1} parent=0 // pred_fallthru
    _
  // Predicated region
  $region66: #{whp_mixer_forward.1} parent=0 // pred_check
    _
  $region67: #{whp_mixer_forward.1} parent=0 // pred_check_branch
    %58 = sbr.rel (0) target = $region69
  $region68: #{whp_mixer_forward.1} parent=0 // pred_region
    _
  $region69: #{whp_mixer_forward.1} parent=0 // pred_fallthru
    _
  // Predicated region
  $region70: #{whp_mixer_forward.1} parent=0 // pred_check
    _
  $region71: #{whp_mixer_forward.1} parent=0 // pred_check_branch
    %60 = sbr.rel (0) target = $region73
  $region72: #{whp_mixer_forward.1} parent=0 // pred_region
    _
  $region73: #{whp_mixer_forward.1} parent=0 // pred_fallthru
    _
  // Predicated region
  $region74: #{whp_mixer_forward.1} parent=0 // pred_check
    _
  $region75: #{whp_mixer_forward.1} parent=0 // pred_check_branch
    %62 = sbr.rel (0) target = $region77
  $region76: #{whp_mixer_forward.1} parent=0 // pred_region
    _
  $region77: #{whp_mixer_forward.1} parent=0 // pred_fallthru
    _
  // Predicated region
  $region78: #{whp_mixer_forward.1} parent=0 // pred_check
    _
  $region79: #{whp_mixer_forward.1} parent=0 // pred_check_branch
    %64 = sbr.rel (0) target = $region81
  $region80: #{whp_mixer_forward.1} parent=0 // pred_region
    _
  $region81: #{whp_mixer_forward.1} parent=0 // pred_fallthru
    _
  %v66 = vld [vmem:[%s0] sm:$0xff]
  %v67 = vpack.c.bf16 %v66, %v66
  %v68 = vld [vmem:[%s1] sm:$0xf]
  %v69 = vld [vmem:[%s1 + $0x4] sm:$0xf]
  %v70 = vld [vmem:[%s1 + $0x8] sm:$0xf]
  %v71 = vld [vmem:[%s1 + $0xc] sm:$0xf]
  %v72 = vld [vmem:[%s1 + $0x10] sm:$0xf]
  %v73 = vld [vmem:[%s1 + $0x14] sm:$0xf]
  %v74 = vld [vmem:[%s1 + $0x18] sm:$0xf]
  %v75 = vld [vmem:[%s1 + $0x1c] sm:$0xf]
  %v76 = vld [vmem:[%s4] sm:$0x1]
  %v78 = vlaneseq
  %v79 = vshrl.u32 %v78, 7
  %v80 = vsub.s32 0, %v79
  %v81 = vrot.slane %v76, %v80
  %v91 = vunpack.c.l.b16 %v68
  %v92 = vunpack.c.l.b16 %v69
  %v93 = vunpack.c.l.b16 %v70
  %v94 = vunpack.c.l.b16 %v71
  %v95 = vunpack.c.l.b16 %v72
  %v96 = vunpack.c.l.b16 %v73
  %v97 = vunpack.c.l.b16 %v74
  %v98 = vunpack.c.l.b16 %v75
  %v99 = vpack.c.b16 %v92, %v91
  %v100 = vpack.c.b16 %v94, %v93
  %v101 = vpack.c.b16 %v96, %v95
  %v102 = vpack.c.b16 %v98, %v97
  %vm107 = vcmask 523264
  %v109 = vsel %vm107, %v67, 0
  %111 = vmatprep.subr.bf16.mxu0 0
  %112 = vmatpush1.bf16.msra.mxu0 0
  %113 = vmatprep.subr.bf16.mxu0 0
  %114 = vmatpush1.bf16.msra.mxu0 0
  %115 = vmatprep.subr.bf16.mxu0 0
  %116 = vmatpush1.bf16.msra.mxu0 0
  %117 = vmatprep.subr.bf16.mxu0 0
  %118 = vmatpush1.bf16.msra.mxu0 0
  %119 = vmatprep.subr.bf16.mxu0 0
  %120 = vmatpush1.bf16.msra.mxu0 %v102
  %121 = vmatprep.subr.bf16.mxu0 0
  %122 = vmatpush1.bf16.msra.mxu0 %v101
  %123 = vmatprep.subr.bf16.mxu0 0
  %124 = vmatpush1.bf16.msra.mxu0 %v100
  %125 = vmatprep.subr.bf16.mxu0 0
  %126 = vmatpush1.bf16.msra.mxu0 %v99
  %127 = vmatprep.subr.bf16.mxu0 0
  %128 = vmatpush2.bf16.msra.mxu0 0
  %129 = vmatprep.subr.bf16.mxu0 0
  %130 = vmatpush2.bf16.msra.mxu0 0
  %131 = vmatprep.subr.bf16.mxu0 0
  %132 = vmatpush2.bf16.msra.mxu0 0
  %133 = vmatprep.subr.bf16.mxu0 0
  %134 = vmatpush2.bf16.msra.mxu0 0
  %135 = vmatprep.subr.bf16.mxu0 0
  %136 = vmatpush2.bf16.msra.mxu0 0
  %137 = vmatprep.subr.bf16.mxu0 0
  %138 = vmatpush2.bf16.msra.mxu0 0
  %139 = vmatprep.subr.bf16.mxu0 0
  %140 = vmatpush2.bf16.msra.mxu0 0
  %141 = vmatprep.subr.bf16.mxu0 0
  %142 = vmatpush2.bf16.msra.mxu0 0
  %143 = vmatprep.mubr.bf16.mxu0 0
  %144 = vmatmul.mubr.bf16.gmra.mxu0 %v109
  %v145 = vpop.f32.mrf.mxu0
  %v146 = vadd.f32 %v81, %v145
  %v147 = vpop.f32.mrf.mxu0
  %v148 = vpop.f32.mrf.mxu0
  %v149 = vpop.f32.mrf.mxu0
  %150 = vdwg.mxu0
  %v151 = vld [vmem:[%s2] sm:$0xf]
  %v152 = vld [vmem:[%s2 + $0x1c] sm:$0xf]
  %v153 = vld [vmem:[%s2 + $0x38] sm:$0xf]
  %v154 = vld [vmem:[%s2 + $0x54] sm:$0xf]
  %v155 = vld [vmem:[%s2 + $0x70] sm:$0xf]
  %v156 = vld [vmem:[%s2 + $0x8c] sm:$0xf]
  %v157 = vld [vmem:[%s2 + $0xa8] sm:$0xf]
  %v158 = vld [vmem:[%s2 + $0xc4] sm:$0xf]
  %v159 = vld [vmem:[%s2 + $0xe0] sm:$0xf]
  %v160 = vld [vmem:[%s2 + $0xfc] sm:$0xf]
  %v161 = vld [vmem:[%s2 + $0x118] sm:$0xf]
  %v162 = vld [vmem:[%s2 + $0x134] sm:$0xf]
  %v163 = vld [vmem:[%s2 + $0x150] sm:$0xf]
  %v164 = vld [vmem:[%s2 + $0x16c] sm:$0xf]
  %v165 = vld [vmem:[%s2 + $0x188] sm:$0xf]
  %v166 = vld [vmem:[%s2 + $0x1a4] sm:$0xf]
  %v167 = vpack.c.bf16 %v146, %v146
  %v184 = vunpack.c.l.b16 %v151
  %v185 = vunpack.c.l.b16 %v152
  %v186 = vunpack.c.l.b16 %v153
  %v187 = vunpack.c.l.b16 %v154
  %v188 = vunpack.c.l.b16 %v155
  %v189 = vunpack.c.l.b16 %v156
  %v190 = vunpack.c.l.b16 %v157
  %v191 = vunpack.c.l.b16 %v158
  %v192 = vunpack.c.l.b16 %v159
  %v193 = vunpack.c.l.b16 %v160
  %v194 = vunpack.c.l.b16 %v161
  %v195 = vunpack.c.l.b16 %v162
  %v196 = vunpack.c.l.b16 %v163
  %v197 = vunpack.c.l.b16 %v164
  %v198 = vunpack.c.l.b16 %v165
  %v199 = vunpack.c.l.b16 %v166
  %v200 = vpack.c.b16 %v185, %v184
  %v201 = vpack.c.b16 %v187, %v186
  %v202 = vpack.c.b16 %v189, %v188
  %v203 = vpack.c.b16 %v191, %v190
  %v204 = vpack.c.b16 %v193, %v192
  %v205 = vpack.c.b16 %v195, %v194
  %v206 = vpack.c.b16 %v197, %v196
  %v207 = vpack.c.b16 %v199, %v198
  %216 = vmatprep.subr.bf16.mxu0 0
  %217 = vmatpush1.bf16.msra.mxu0 %v207
  %218 = vmatprep.subr.bf16.mxu0 0
  %219 = vmatpush1.bf16.msra.mxu0 %v206
  %220 = vmatprep.subr.bf16.mxu0 0
  %221 = vmatpush1.bf16.msra.mxu0 %v205
  %222 = vmatprep.subr.bf16.mxu0 0
  %223 = vmatpush1.bf16.msra.mxu0 %v204
  %224 = vmatprep.subr.bf16.mxu0 0
  %225 = vmatpush1.bf16.msra.mxu0 %v203
  %226 = vmatprep.subr.bf16.mxu0 0
  %227 = vmatpush1.bf16.msra.mxu0 %v202
  %228 = vmatprep.subr.bf16.mxu0 0
  %229 = vmatpush1.bf16.msra.mxu0 %v201
  %230 = vmatprep.subr.bf16.mxu0 0
  %231 = vmatpush1.bf16.msra.mxu0 %v200
  %232 = vmatprep.subr.bf16.mxu0 0
  %233 = vmatpush2.bf16.msra.mxu0 0
  %234 = vmatprep.subr.bf16.mxu0 0
  %235 = vmatpush2.bf16.msra.mxu0 0
  %236 = vmatprep.subr.bf16.mxu0 0
  %237 = vmatpush2.bf16.msra.mxu0 0
  %238 = vmatprep.subr.bf16.mxu0 0
  %239 = vmatpush2.bf16.msra.mxu0 0
  %240 = vmatprep.subr.bf16.mxu0 0
  %241 = vmatpush2.bf16.msra.mxu0 0
  %242 = vmatprep.subr.bf16.mxu0 0
  %243 = vmatpush2.bf16.msra.mxu0 0
  %244 = vmatprep.subr.bf16.mxu0 0
  %245 = vmatpush2.bf16.msra.mxu0 0
  %246 = vmatprep.subr.bf16.mxu0 0
  %247 = vmatpush2.bf16.msra.mxu0 0
  %248 = vmatprep.mubr.bf16.mxu0 0
  %249 = vmatmul.mubr.bf16.gmra.mxu0 %v167
  %v250 = vpop.f32.mrf.mxu0
  %v251 = vadd.f32 0.0, %v250
  %v252 = vpop.f32.mrf.mxu0
  %v253 = vpop.f32.mrf.mxu0
  %v254 = vpop.f32.mrf.mxu0
  %255 = vdwg.mxu0
  %v256 = vsub.f32 %v146, %v251
  %v257 = vmul.f32 %v256, %v256
  %v258 = vpack.c.bf16 %v257, %v257
  %259 = vmatprep.subr.bf16.mxu0 0
  %260 = vmatpush1.bf16.msra.mxu0 %v207
  %261 = vmatprep.subr.bf16.mxu0 0
  %262 = vmatpush1.bf16.msra.mxu0 %v206
  %263 = vmatprep.subr.bf16.mxu0 0
  %264 = vmatpush1.bf16.msra.mxu0 %v205
  %265 = vmatprep.subr.bf16.mxu0 0
  %266 = vmatpush1.bf16.msra.mxu0 %v204
  %267 = vmatprep.subr.bf16.mxu0 0
  %268 = vmatpush1.bf16.msra.mxu0 %v203
  %269 = vmatprep.subr.bf16.mxu0 0
  %270 = vmatpush1.bf16.msra.mxu0 %v202
  %271 = vmatprep.subr.bf16.mxu0 0
  %272 = vmatpush1.bf16.msra.mxu0 %v201
  %273 = vmatprep.subr.bf16.mxu0 0
  %274 = vmatpush1.bf16.msra.mxu0 %v200
  %275 = vmatprep.subr.bf16.mxu0 0
  %276 = vmatpush2.bf16.msra.mxu0 0
  %277 = vmatprep.subr.bf16.mxu0 0
  %278 = vmatpush2.bf16.msra.mxu0 0
  %279 = vmatprep.subr.bf16.mxu0 0
  %280 = vmatpush2.bf16.msra.mxu0 0
  %281 = vmatprep.subr.bf16.mxu0 0
  %282 = vmatpush2.bf16.msra.mxu0 0
  %283 = vmatprep.subr.bf16.mxu0 0
  %284 = vmatpush2.bf16.msra.mxu0 0
  %285 = vmatprep.subr.bf16.mxu0 0
  %286 = vmatpush2.bf16.msra.mxu0 0
  %287 = vmatprep.subr.bf16.mxu0 0
  %288 = vmatpush2.bf16.msra.mxu0 0
  %289 = vmatprep.subr.bf16.mxu0 0
  %290 = vmatpush2.bf16.msra.mxu0 0
  %291 = vmatprep.mubr.bf16.mxu0 0
  %292 = vmatmul.mubr.bf16.gmra.mxu0 %v258
  %v293 = vpop.f32.mrf.mxu0
  %v294 = vadd.f32 1e-05, %v293
  %v295 = vpop.f32.mrf.mxu0
  %v296 = vpop.f32.mrf.mxu0
  %v297 = vpop.f32.mrf.mxu0
  %298 = vdwg.mxu0
  %v299 = vrsqrt.pop %v294
  %v300 = vmul.f32 %v256, %v299
  %v301 = vld [vmem:[%s4 + $0x1] sm:$0x1]
  %v303 = vlaneseq
  %v304 = vshrl.u32 %v303, 7
  %v305 = vsub.s32 0, %v304
  %v306 = vrot.slane %v301, %v305
  %v308 = vmul.f32 %v300, %v306
  %v309 = vld [vmem:[%s4 + $0x2] sm:$0x1]
  %v311 = vlaneseq
  %v312 = vshrl.u32 %v311, 7
  %v313 = vsub.s32 0, %v312
  %v314 = vrot.slane %v309, %v313
  %v316 = vadd.f32 %v308, %v314
  %v317 = vld [vmem:[%s2 + $0x8] sm:$0xff]
  %v318 = vld [vmem:[%s2 + $0x24] sm:$0xff]
  %v319 = vld [vmem:[%s2 + $0x40] sm:$0xff]
  %v320 = vld [vmem:[%s2 + $0x5c] sm:$0xff]
  %v321 = vld [vmem:[%s2 + $0x78] sm:$0xff]
  %v322 = vld [vmem:[%s2 + $0x94] sm:$0xff]
  %v323 = vld [vmem:[%s2 + $0xb0] sm:$0xff]
  %v324 = vld [vmem:[%s2 + $0xcc] sm:$0xff]
  %v325 = vld [vmem:[%s2 + $0xe8] sm:$0xff]
  %v326 = vld [vmem:[%s2 + $0x104] sm:$0xff]
  %v327 = vld [vmem:[%s2 + $0x120] sm:$0xff]
  %v328 = vld [vmem:[%s2 + $0x13c] sm:$0xff]
  %v329 = vld [vmem:[%s2 + $0x158] sm:$0xff]
  %v330 = vld [vmem:[%s2 + $0x174] sm:$0xff]
  %v331 = vld [vmem:[%s2 + $0x190] sm:$0xff]
  %v332 = vld [vmem:[%s2 + $0x1ac] sm:$0xff]
  %v333 = vpack.c.bf16 %v316, %v316
  %v334 = vld [vmem:[%s4 + $0x3] sm:$0x3]
  %v336 = vlaneseq
  %v337 = vshrl.u32 %v336, 7
  %v338 = vsub.s32 0, %v337
  %v339 = vrot.slane %v334, %v338
  %v340 = vlaneseq
  %v341 = vshrl.u32 %v340, 7
  %v342 = vsub.s32 1, %v341
  %v343 = vrot.slane %v334, %v342
  %v362 = vunpack.c.l.b16 %v317
  %v363 = vunpack.c.h.b16 %v317
  %v364 = vunpack.c.l.b16 %v318
  %v365 = vunpack.c.h.b16 %v318
  %v366 = vunpack.c.l.b16 %v319
  %v367 = vunpack.c.h.b16 %v319
  %v368 = vunpack.c.l.b16 %v320
  %v369 = vunpack.c.h.b16 %v320
  %v370 = vunpack.c.l.b16 %v321
  %v371 = vunpack.c.h.b16 %v321
  %v372 = vunpack.c.l.b16 %v322
  %v373 = vunpack.c.h.b16 %v322
  %v374 = vunpack.c.l.b16 %v323
  %v375 = vunpack.c.h.b16 %v323
  %v376 = vunpack.c.l.b16 %v324
  %v377 = vunpack.c.h.b16 %v324
  %v378 = vunpack.c.l.b16 %v325
  %v379 = vunpack.c.h.b16 %v325
  %v380 = vunpack.c.l.b16 %v326
  %v381 = vunpack.c.h.b16 %v326
  %v382 = vunpack.c.l.b16 %v327
  %v383 = vunpack.c.h.b16 %v327
  %v384 = vunpack.c.l.b16 %v328
  %v385 = vunpack.c.h.b16 %v328
  %v386 = vunpack.c.l.b16 %v329
  %v387 = vunpack.c.h.b16 %v329
  %v388 = vunpack.c.l.b16 %v330
  %v389 = vunpack.c.h.b16 %v330
  %v390 = vunpack.c.l.b16 %v331
  %v391 = vunpack.c.h.b16 %v331
  %v392 = vunpack.c.l.b16 %v332
  %v393 = vunpack.c.h.b16 %v332
  %v394 = vpack.c.b16 %v364, %v362
  %v395 = vpack.c.b16 %v365, %v363
  %v396 = vpack.c.b16 %v368, %v366
  %v397 = vpack.c.b16 %v369, %v367
  %v398 = vpack.c.b16 %v372, %v370
  %v399 = vpack.c.b16 %v373, %v371
  %v400 = vpack.c.b16 %v376, %v374
  %v401 = vpack.c.b16 %v377, %v375
  %v402 = vpack.c.b16 %v380, %v378
  %v403 = vpack.c.b16 %v381, %v379
  %v404 = vpack.c.b16 %v384, %v382
  %v405 = vpack.c.b16 %v385, %v383
  %v406 = vpack.c.b16 %v388, %v386
  %v407 = vpack.c.b16 %v389, %v387
  %v408 = vpack.c.b16 %v392, %v390
  %v409 = vpack.c.b16 %v393, %v391
  %426 = vmatprep.subr.bf16.mxu0 %v409
  %427 = vmatpush1.bf16.msra.mxu0 %v408
  %428 = vmatprep.subr.bf16.mxu0 %v407
  %429 = vmatpush1.bf16.msra.mxu0 %v406
  %430 = vmatprep.subr.bf16.mxu0 %v405
  %431 = vmatpush1.bf16.msra.mxu0 %v404
  %432 = vmatprep.subr.bf16.mxu0 %v403
  %433 = vmatpush1.bf16.msra.mxu0 %v402
  %434 = vmatprep.subr.bf16.mxu0 %v401
  %435 = vmatpush1.bf16.msra.mxu0 %v400
  %436 = vmatprep.subr.bf16.mxu0 %v399
  %437 = vmatpush1.bf16.msra.mxu0 %v398
  %438 = vmatprep.subr.bf16.mxu0 %v397
  %439 = vmatpush1.bf16.msra.mxu0 %v396
  %440 = vmatprep.subr.bf16.mxu0 %v395
  %441 = vmatpush1.bf16.msra.mxu0 %v394
  %442 = vmatprep.subr.bf16.mxu0 0
  %443 = vmatpush2.bf16.msra.mxu0 0
  %444 = vmatprep.subr.bf16.mxu0 0
  %445 = vmatpush2.bf16.msra.mxu0 0
  %446 = vmatprep.subr.bf16.mxu0 0
  %447 = vmatpush2.bf16.msra.mxu0 0
  %448 = vmatprep.subr.bf16.mxu0 0
  %449 = vmatpush2.bf16.msra.mxu0 0
  %450 = vmatprep.subr.bf16.mxu0 0
  %451 = vmatpush2.bf16.msra.mxu0 0
  %452 = vmatprep.subr.bf16.mxu0 0
  %453 = vmatpush2.bf16.msra.mxu0 0
  %454 = vmatprep.subr.bf16.mxu0 0
  %455 = vmatpush2.bf16.msra.mxu0 0
  %456 = vmatprep.subr.bf16.mxu0 0
  %457 = vmatpush2.bf16.msra.mxu0 0
  %458 = vmatprep.mubr.bf16.mxu0 0
  %459 = vmatmul.mubr.bf16.gmra.mxu0 %v333
  %v460 = vpop.f32.mrf.mxu0
  %v461 = vadd.f32 %v339, %v460
  %v462 = vpop.f32.mrf.mxu0
  %v463 = vadd.f32 %v343, %v462
  %v464 = vpop.f32.mrf.mxu0
  %v465 = vpop.f32.mrf.mxu0
  %466 = vdwg.mxu0
  %v467 = vmul.f32 %v461, 0.5
  %v468 = vmul.f32 %v463, 0.5
  %v469 = vmul.f32 %v461, 0.044715
  %v470 = vmul.f32 %v463, 0.044715
  %v471 = vmul.f32 %v469, %v461
  %v472 = vmul.f32 %v470, %v463
  %v473 = vmul.f32 %v471, %v461
  %v474 = vmul.f32 %v472, %v463
  %v475 = vadd.f32 %v461, %v473
  %v476 = vadd.f32 %v463, %v474
  %v477 = vmul.f32 %v475, 0.7978846
  %v478 = vmul.f32 %v476, 0.7978846
  %v479 = vtanh.pop %v477
  %v480 = vtanh.pop %v478
  %v481 = vadd.f32 %v479, 1.0
  %v482 = vadd.f32 %v480, 1.0
  %v483 = vmul.f32 %v467, %v481
  %v484 = vmul.f32 %v468, %v482
  %v485 = vld [vmem:[%s3] sm:$0xf]
  %v486 = vld [vmem:[%s3 + $0x8] sm:$0xf]
  %v487 = vld [vmem:[%s3 + $0x10] sm:$0xf]
  %v488 = vld [vmem:[%s3 + $0x18] sm:$0xf]
  %v489 = vld [vmem:[%s3 + $0x20] sm:$0xf]
  %v490 = vld [vmem:[%s3 + $0x28] sm:$0xf]
  %v491 = vld [vmem:[%s3 + $0x30] sm:$0xf]
  %v492 = vld [vmem:[%s3 + $0x38] sm:$0xf]
  %v493 = vld [vmem:[%s3 + $0x40] sm:$0xf]
  %v494 = vld [vmem:[%s3 + $0x48] sm:$0xf]
  %v495 = vld [vmem:[%s3 + $0x50] sm:$0xf]
  %v496 = vld [vmem:[%s3 + $0x58] sm:$0xf]
  %v497 = vld [vmem:[%s3 + $0x60] sm:$0xf]
  %v498 = vld [vmem:[%s3 + $0x68] sm:$0xf]
  %v499 = vld [vmem:[%s3 + $0x70] sm:$0xf]
  %v500 = vld [vmem:[%s3 + $0x78] sm:$0xf]
  %v501 = vld [vmem:[%s3 + $0x80] sm:$0xf]
  %v502 = vld [vmem:[%s3 + $0x88] sm:$0xf]
  %v503 = vld [vmem:[%s3 + $0x90] sm:$0xf]
  %v504 = vld [vmem:[%s3 + $0x98] sm:$0xf]
  %v505 = vld [vmem:[%s3 + $0xa0] sm:$0xf]
  %v506 = vld [vmem:[%s3 + $0xa8] sm:$0xf]
  %v507 = vld [vmem:[%s3 + $0xb0] sm:$0xf]
  %v508 = vld [vmem:[%s3 + $0xb8] sm:$0xf]
  %v509 = vld [vmem:[%s3 + $0xc0] sm:$0xf]
  %v510 = vld [vmem:[%s3 + $0xc8] sm:$0xf]
  %v511 = vld [vmem:[%s3 + $0xd0] sm:$0xf]
  %v512 = vld [vmem:[%s3 + $0xd8] sm:$0xf]
  %v513 = vld [vmem:[%s3 + $0xe0] sm:$0xf]
  %v514 = vld [vmem:[%s3 + $0xe8] sm:$0xf]
  %v515 = vld [vmem:[%s3 + $0xf0] sm:$0xf]
  %v516 = vld [vmem:[%s3 + $0xf8] sm:$0xf]
  %v517 = vpack.c.bf16 %v483, %v483
  %v518 = vpack.c.bf16 %v484, %v484
  %v519 = vld [vmem:[%s4 + $0x5] sm:$0x1]
  %v521 = vlaneseq
  %v522 = vshrl.u32 %v521, 7
  %v523 = vsub.s32 0, %v522
  %v524 = vrot.slane %v519, %v523
  %v558 = vunpack.c.l.b16 %v485
  %v559 = vunpack.c.l.b16 %v486
  %v560 = vunpack.c.l.b16 %v487
  %v561 = vunpack.c.l.b16 %v488
  %v562 = vunpack.c.l.b16 %v489
  %v563 = vunpack.c.l.b16 %v490
  %v564 = vunpack.c.l.b16 %v491
  %v565 = vunpack.c.l.b16 %v492
  %v566 = vunpack.c.l.b16 %v493
  %v567 = vunpack.c.l.b16 %v494
  %v568 = vunpack.c.l.b16 %v495
  %v569 = vunpack.c.l.b16 %v496
  %v570 = vunpack.c.l.b16 %v497
  %v571 = vunpack.c.l.b16 %v498
  %v572 = vunpack.c.l.b16 %v499
  %v573 = vunpack.c.l.b16 %v500
  %v574 = vunpack.c.l.b16 %v501
  %v575 = vunpack.c.l.b16 %v502
  %v576 = vunpack.c.l.b16 %v503
  %v577 = vunpack.c.l.b16 %v504
  %v578 = vunpack.c.l.b16 %v505
  %v579 = vunpack.c.l.b16 %v506
  %v580 = vunpack.c.l.b16 %v507
  %v581 = vunpack.c.l.b16 %v508
  %v582 = vunpack.c.l.b16 %v509
  %v583 = vunpack.c.l.b16 %v510
  %v584 = vunpack.c.l.b16 %v511
  %v585 = vunpack.c.l.b16 %v512
  %v586 = vunpack.c.l.b16 %v513
  %v587 = vunpack.c.l.b16 %v514
  %v588 = vunpack.c.l.b16 %v515
  %v589 = vunpack.c.l.b16 %v516
  %v590 = vpack.c.b16 %v559, %v558
  %v591 = vpack.c.b16 %v561, %v560
  %v592 = vpack.c.b16 %v563, %v562
  %v593 = vpack.c.b16 %v565, %v564
  %v594 = vpack.c.b16 %v567, %v566
  %v595 = vpack.c.b16 %v569, %v568
  %v596 = vpack.c.b16 %v571, %v570
  %v597 = vpack.c.b16 %v573, %v572
  %v598 = vpack.c.b16 %v575, %v574
  %v599 = vpack.c.b16 %v577, %v576
  %v600 = vpack.c.b16 %v579, %v578
  %v601 = vpack.c.b16 %v581, %v580
  %v602 = vpack.c.b16 %v583, %v582
  %v603 = vpack.c.b16 %v585, %v584
  %v604 = vpack.c.b16 %v587, %v586
  %v605 = vpack.c.b16 %v589, %v588
  %622 = vmatprep.subr.bf16.mxu0 0
  %623 = vmatpush1.bf16.msra.mxu0 %v597
  %624 = vmatprep.subr.bf16.mxu0 0
  %625 = vmatpush1.bf16.msra.mxu0 %v596
  %626 = vmatprep.subr.bf16.mxu0 0
  %627 = vmatpush1.bf16.msra.mxu0 %v595
  %628 = vmatprep.subr.bf16.mxu0 0
  %629 = vmatpush1.bf16.msra.mxu0 %v594
  %630 = vmatprep.subr.bf16.mxu0 0
  %631 = vmatpush1.bf16.msra.mxu0 %v593
  %632 = vmatprep.subr.bf16.mxu0 0
  %633 = vmatpush1.bf16.msra.mxu0 %v592
  %634 = vmatprep.subr.bf16.mxu0 0
  %635 = vmatpush1.bf16.msra.mxu0 %v591
  %636 = vmatprep.subr.bf16.mxu0 0
  %637 = vmatpush1.bf16.msra.mxu0 %v590
  %638 = vmatprep.subr.bf16.mxu0 0
  %639 = vmatpush2.bf16.msra.mxu0 %v605
  %640 = vmatprep.subr.bf16.mxu0 0
  %641 = vmatpush2.bf16.msra.mxu0 %v604
  %642 = vmatprep.subr.bf16.mxu0 0
  %643 = vmatpush2.bf16.msra.mxu0 %v603
  %644 = vmatprep.subr.bf16.mxu0 0
  %645 = vmatpush2.bf16.msra.mxu0 %v602
  %646 = vmatprep.subr.bf16.mxu0 0
  %647 = vmatpush2.bf16.msra.mxu0 %v601
  %648 = vmatprep.subr.bf16.mxu0 0
  %649 = vmatpush2.bf16.msra.mxu0 %v600
  %650 = vmatprep.subr.bf16.mxu0 0
  %651 = vmatpush2.bf16.msra.mxu0 %v599
  %652 = vmatprep.subr.bf16.mxu0 0
  %653 = vmatpush2.bf16.msra.mxu0 %v598
  %654 = vmatprep.mubr.bf16.mxu0 %v518
  %655 = vmatmul.mubr.bf16.gmra.mxu0 %v517
  %v656 = vpop.f32.mrf.mxu0
  %v657 = vadd.f32 %v524, %v656
  %v658 = vpop.f32.mrf.mxu0
  %v659 = vpop.f32.mrf.mxu0
  %v660 = vpop.f32.mrf.mxu0
  %661 = vdwg.mxu0
  %v662 = vadd.f32 %v657, %v146
  %v663 = vld [vmem:[%s2 + $0x4] sm:$0xf]
  %v664 = vld [vmem:[%s2 + $0x20] sm:$0xf]
  %v665 = vld [vmem:[%s2 + $0x3c] sm:$0xf]
  %v666 = vld [vmem:[%s2 + $0x58] sm:$0xf]
  %v667 = vld [vmem:[%s2 + $0x74] sm:$0xf]
  %v668 = vld [vmem:[%s2 + $0x90] sm:$0xf]
  %v669 = vld [vmem:[%s2 + $0xac] sm:$0xf]
  %v670 = vld [vmem:[%s2 + $0xc8] sm:$0xf]
  %v671 = vld [vmem:[%s2 + $0xe4] sm:$0xf]
  %v672 = vld [vmem:[%s2 + $0x100] sm:$0xf]
  %v673 = vld [vmem:[%s2 + $0x11c] sm:$0xf]
  %v674 = vld [vmem:[%s2 + $0x138] sm:$0xf]
  %v675 = vld [vmem:[%s2 + $0x154] sm:$0xf]
  %v676 = vld [vmem:[%s2 + $0x170] sm:$0xf]
  %v677 = vld [vmem:[%s2 + $0x18c] sm:$0xf]
  %v678 = vld [vmem:[%s2 + $0x1a8] sm:$0xf]
  %v679 = vpack.c.bf16 %v662, %v662
  %v696 = vunpack.c.l.b16 %v663
  %v697 = vunpack.c.l.b16 %v664
  %v698 = vunpack.c.l.b16 %v665
  %v699 = vunpack.c.l.b16 %v666
  %v700 = vunpack.c.l.b16 %v667
  %v701 = vunpack.c.l.b16 %v668
  %v702 = vunpack.c.l.b16 %v669
  %v703 = vunpack.c.l.b16 %v670
  %v704 = vunpack.c.l.b16 %v671
  %v705 = vunpack.c.l.b16 %v672
  %v706 = vunpack.c.l.b16 %v673
  %v707 = vunpack.c.l.b16 %v674
  %v708 = vunpack.c.l.b16 %v675
  %v709 = vunpack.c.l.b16 %v676
  %v710 = vunpack.c.l.b16 %v677
  %v711 = vunpack.c.l.b16 %v678
  %v712 = vpack.c.b16 %v697, %v696
  %v713 = vpack.c.b16 %v699, %v698
  %v714 = vpack.c.b16 %v701, %v700
  %v715 = vpack.c.b16 %v703, %v702
  %v716 = vpack.c.b16 %v705, %v704
  %v717 = vpack.c.b16 %v707, %v706
  %v718 = vpack.c.b16 %v709, %v708
  %v719 = vpack.c.b16 %v711, %v710
  %728 = vmatprep.subr.bf16.mxu0 0
  %729 = vmatpush1.bf16.msra.mxu0 %v719
  %730 = vmatprep.subr.bf16.mxu0 0
  %731 = vmatpush1.bf16.msra.mxu0 %v718
  %732 = vmatprep.subr.bf16.mxu0 0
  %733 = vmatpush1.bf16.msra.mxu0 %v717
  %734 = vmatprep.subr.bf16.mxu0 0
  %735 = vmatpush1.bf16.msra.mxu0 %v716
  %736 = vmatprep.subr.bf16.mxu0 0
  %737 = vmatpush1.bf16.msra.mxu0 %v715
  %738 = vmatprep.subr.bf16.mxu0 0
  %739 = vmatpush1.bf16.msra.mxu0 %v714
  %740 = vmatprep.subr.bf16.mxu0 0
  %741 = vmatpush1.bf16.msra.mxu0 %v713
  %742 = vmatprep.subr.bf16.mxu0 0
  %743 = vmatpush1.bf16.msra.mxu0 %v712
  %744 = vmatprep.subr.bf16.mxu0 0
  %745 = vmatpush2.bf16.msra.mxu0 0
  %746 = vmatprep.subr.bf16.mxu0 0
  %747 = vmatpush2.bf16.msra.mxu0 0
  %748 = vmatprep.subr.bf16.mxu0 0
  %749 = vmatpush2.bf16.msra.mxu0 0
  %750 = vmatprep.subr.bf16.mxu0 0
  %751 = vmatpush2.bf16.msra.mxu0 0
  %752 = vmatprep.subr.bf16.mxu0 0
  %753 = vmatpush2.bf16.msra.mxu0 0
  %754 = vmatprep.subr.bf16.mxu0 0
  %755 = vmatpush2.bf16.msra.mxu0 0
  %756 = vmatprep.subr.bf16.mxu0 0
  %757 = vmatpush2.bf16.msra.mxu0 0
  %758 = vmatprep.subr.bf16.mxu0 0
  %759 = vmatpush2.bf16.msra.mxu0 0
  %760 = vmatprep.mubr.bf16.mxu0 0
  %761 = vmatmul.mubr.bf16.gmra.mxu0 %v679
  %v762 = vpop.f32.mrf.mxu0
  %v763 = vadd.f32 0.0, %v762
  %v764 = vpop.f32.mrf.mxu0
  %v765 = vpop.f32.mrf.mxu0
  %v766 = vpop.f32.mrf.mxu0
  %767 = vdwg.mxu0
  %v768 = vsub.f32 %v662, %v763
  %v769 = vmul.f32 %v768, %v768
  %v770 = vpack.c.bf16 %v769, %v769
  %771 = vmatprep.subr.bf16.mxu0 0
  %772 = vmatpush1.bf16.msra.mxu0 %v719
  %773 = vmatprep.subr.bf16.mxu0 0
  %774 = vmatpush1.bf16.msra.mxu0 %v718
  %775 = vmatprep.subr.bf16.mxu0 0
  %776 = vmatpush1.bf16.msra.mxu0 %v717
  %777 = vmatprep.subr.bf16.mxu0 0
  %778 = vmatpush1.bf16.msra.mxu0 %v716
  %779 = vmatprep.subr.bf16.mxu0 0
  %780 = vmatpush1.bf16.msra.mxu0 %v715
  %781 = vmatprep.subr.bf16.mxu0 0
  %782 = vmatpush1.bf16.msra.mxu0 %v714
  %783 = vmatprep.subr.bf16.mxu0 0
  %784 = vmatpush1.bf16.msra.mxu0 %v713
  %785 = vmatprep.subr.bf16.mxu0 0
  %786 = vmatpush1.bf16.msra.mxu0 %v712
  %787 = vmatprep.subr.bf16.mxu0 0
  %788 = vmatpush2.bf16.msra.mxu0 0
  %789 = vmatprep.subr.bf16.mxu0 0
  %790 = vmatpush2.bf16.msra.mxu0 0
  %791 = vmatprep.subr.bf16.mxu0 0
  %792 = vmatpush2.bf16.msra.mxu0 0
  %793 = vmatprep.subr.bf16.mxu0 0
  %794 = vmatpush2.bf16.msra.mxu0 0
  %795 = vmatprep.subr.bf16.mxu0 0
  %796 = vmatpush2.bf16.msra.mxu0 0
  %797 = vmatprep.subr.bf16.mxu0 0
  %798 = vmatpush2.bf16.msra.mxu0 0
  %799 = vmatprep.subr.bf16.mxu0 0
  %800 = vmatpush2.bf16.msra.mxu0 0
  %801 = vmatprep.subr.bf16.mxu0 0
  %802 = vmatpush2.bf16.msra.mxu0 0
  %803 = vmatprep.mubr.bf16.mxu0 0
  %804 = vmatmul.mubr.bf16.gmra.mxu0 %v770
  %v805 = vpop.f32.mrf.mxu0
  %v806 = vadd.f32 1e-05, %v805
  %v807 = vpop.f32.mrf.mxu0
  %v808 = vpop.f32.mrf.mxu0
  %v809 = vpop.f32.mrf.mxu0
  %810 = vdwg.mxu0
  %v811 = vrsqrt.pop %v806
  %v812 = vmul.f32 %v768, %v811
  %v813 = vld [vmem:[%s4 + $0x6] sm:$0x1]
  %v815 = vlaneseq
  %v816 = vshrl.u32 %v815, 7
  %v817 = vsub.s32 0, %v816
  %v818 = vrot.slane %v813, %v817
  %v820 = vmul.f32 %v812, %v818
  %v821 = vld [vmem:[%s4 + $0x7] sm:$0x1]
  %v823 = vlaneseq
  %v824 = vshrl.u32 %v823, 7
  %v825 = vsub.s32 0, %v824
  %v826 = vrot.slane %v821, %v825
  %v828 = vadd.f32 %v820, %v826
  %v829 = vld [vmem:[%s2 + $0x10] sm:$0xff]
  %v830 = vld [vmem:[%s2 + $0x2c] sm:$0xff]
  %v831 = vld [vmem:[%s2 + $0x48] sm:$0xff]
  %v832 = vld [vmem:[%s2 + $0x64] sm:$0xff]
  %v833 = vld [vmem:[%s2 + $0x80] sm:$0xff]
  %v834 = vld [vmem:[%s2 + $0x9c] sm:$0xff]
  %v835 = vld [vmem:[%s2 + $0xb8] sm:$0xff]
  %v836 = vld [vmem:[%s2 + $0xd4] sm:$0xff]
  %v837 = vld [vmem:[%s2 + $0xf0] sm:$0xff]
  %v838 = vld [vmem:[%s2 + $0x10c] sm:$0xff]
  %v839 = vld [vmem:[%s2 + $0x128] sm:$0xff]
  %v840 = vld [vmem:[%s2 + $0x144] sm:$0xff]
  %v841 = vld [vmem:[%s2 + $0x160] sm:$0xff]
  %v842 = vld [vmem:[%s2 + $0x17c] sm:$0xff]
  %v843 = vld [vmem:[%s2 + $0x198] sm:$0xff]
  %v844 = vld [vmem:[%s2 + $0x1b4] sm:$0xff]
  %v845 = vpack.c.bf16 %v828, %v828
  %v846 = vld [vmem:[%s4 + $0x8] sm:$0x3]
  %v848 = vlaneseq
  %v849 = vshrl.u32 %v848, 7
  %v850 = vsub.s32 0, %v849
  %v851 = vrot.slane %v846, %v850
  %v852 = vlaneseq
  %v853 = vshrl.u32 %v852, 7
  %v854 = vsub.s32 1, %v853
  %v855 = vrot.slane %v846, %v854
  %v874 = vunpack.c.l.b16 %v829
  %v875 = vunpack.c.h.b16 %v829
  %v876 = vunpack.c.l.b16 %v830
  %v877 = vunpack.c.h.b16 %v830
  %v878 = vunpack.c.l.b16 %v831
  %v879 = vunpack.c.h.b16 %v831
  %v880 = vunpack.c.l.b16 %v832
  %v881 = vunpack.c.h.b16 %v832
  %v882 = vunpack.c.l.b16 %v833
  %v883 = vunpack.c.h.b16 %v833
  %v884 = vunpack.c.l.b16 %v834
  %v885 = vunpack.c.h.b16 %v834
  %v886 = vunpack.c.l.b16 %v835
  %v887 = vunpack.c.h.b16 %v835
  %v888 = vunpack.c.l.b16 %v836
  %v889 = vunpack.c.h.b16 %v836
  %v890 = vunpack.c.l.b16 %v837
  %v891 = vunpack.c.h.b16 %v837
  %v892 = vunpack.c.l.b16 %v838
  %v893 = vunpack.c.h.b16 %v838
  %v894 = vunpack.c.l.b16 %v839
  %v895 = vunpack.c.h.b16 %v839
  %v896 = vunpack.c.l.b16 %v840
  %v897 = vunpack.c.h.b16 %v840
  %v898 = vunpack.c.l.b16 %v841
  %v899 = vunpack.c.h.b16 %v841
  %v900 = vunpack.c.l.b16 %v842
  %v901 = vunpack.c.h.b16 %v842
  %v902 = vunpack.c.l.b16 %v843
  %v903 = vunpack.c.h.b16 %v843
  %v904 = vunpack.c.l.b16 %v844
  %v905 = vunpack.c.h.b16 %v844
  %v906 = vpack.c.b16 %v876, %v874
  %v907 = vpack.c.b16 %v877, %v875
  %v908 = vpack.c.b16 %v880, %v878
  %v909 = vpack.c.b16 %v881, %v879
  %v910 = vpack.c.b16 %v884, %v882
  %v911 = vpack.c.b16 %v885, %v883
  %v912 = vpack.c.b16 %v888, %v886
  %v913 = vpack.c.b16 %v889, %v887
  %v914 = vpack.c.b16 %v892, %v890
  %v915 = vpack.c.b16 %v893, %v891
  %v916 = vpack.c.b16 %v896, %v894
  %v917 = vpack.c.b16 %v897, %v895
  %v918 = vpack.c.b16 %v900, %v898
  %v919 = vpack.c.b16 %v901, %v899
  %v920 = vpack.c.b16 %v904, %v902
  %v921 = vpack.c.b16 %v905, %v903
  %938 = vmatprep.subr.bf16.mxu0 %v921
  %939 = vmatpush1.bf16.msra.mxu0 %v920
  %940 = vmatprep.subr.bf16.mxu0 %v919
  %941 = vmatpush1.bf16.msra.mxu0 %v918
  %942 = vmatprep.subr.bf16.mxu0 %v917
  %943 = vmatpush1.bf16.msra.mxu0 %v916
  %944 = vmatprep.subr.bf16.mxu0 %v915
  %945 = vmatpush1.bf16.msra.mxu0 %v914
  %946 = vmatprep.subr.bf16.mxu0 %v913
  %947 = vmatpush1.bf16.msra.mxu0 %v912
  %948 = vmatprep.subr.bf16.mxu0 %v911
  %949 = vmatpush1.bf16.msra.mxu0 %v910
  %950 = vmatprep.subr.bf16.mxu0 %v909
  %951 = vmatpush1.bf16.msra.mxu0 %v908
  %952 = vmatprep.subr.bf16.mxu0 %v907
  %953 = vmatpush1.bf16.msra.mxu0 %v906
  %954 = vmatprep.subr.bf16.mxu0 0
  %955 = vmatpush2.bf16.msra.mxu0 0
  %956 = vmatprep.subr.bf16.mxu0 0
  %957 = vmatpush2.bf16.msra.mxu0 0
  %958 = vmatprep.subr.bf16.mxu0 0
  %959 = vmatpush2.bf16.msra.mxu0 0
  %960 = vmatprep.subr.bf16.mxu0 0
  %961 = vmatpush2.bf16.msra.mxu0 0
  %962 = vmatprep.subr.bf16.mxu0 0
  %963 = vmatpush2.bf16.msra.mxu0 0
  %964 = vmatprep.subr.bf16.mxu0 0
  %965 = vmatpush2.bf16.msra.mxu0 0
  %966 = vmatprep.subr.bf16.mxu0 0
  %967 = vmatpush2.bf16.msra.mxu0 0
  %968 = vmatprep.subr.bf16.mxu0 0
  %969 = vmatpush2.bf16.msra.mxu0 0
  %970 = vmatprep.mubr.bf16.mxu0 0
  %971 = vmatmul.mubr.bf16.gmra.mxu0 %v845
  %v972 = vpop.f32.mrf.mxu0
  %v973 = vadd.f32 %v851, %v972
  %v974 = vpop.f32.mrf.mxu0
  %v975 = vadd.f32 %v855, %v974
  %v976 = vpop.f32.mrf.mxu0
  %v977 = vpop.f32.mrf.mxu0
  %978 = vdwg.mxu0
  %v979 = vmul.f32 %v973, 0.5
  %v980 = vmul.f32 %v975, 0.5
  %v981 = vmul.f32 %v973, 0.044715
  %v982 = vmul.f32 %v975, 0.044715
  %v983 = vmul.f32 %v981, %v973
  %v984 = vmul.f32 %v982, %v975
  %v985 = vmul.f32 %v983, %v973
  %v986 = vmul.f32 %v984, %v975
  %v987 = vadd.f32 %v973, %v985
  %v988 = vadd.f32 %v975, %v986
  %v989 = vmul.f32 %v987, 0.7978846
  %v990 = vmul.f32 %v988, 0.7978846
  %v991 = vtanh.pop %v989
  %v992 = vtanh.pop %v990
  %v993 = vadd.f32 %v991, 1.0
  %v994 = vadd.f32 %v992, 1.0
  %v995 = vmul.f32 %v979, %v993
  %v996 = vmul.f32 %v980, %v994
  %v997 = vld [vmem:[%s3 + $0x4] sm:$0xf]
  %v998 = vld [vmem:[%s3 + $0xc] sm:$0xf]
  %v999 = vld [vmem:[%s3 + $0x14] sm:$0xf]
  %v1000 = vld [vmem:[%s3 + $0x1c] sm:$0xf]
  %v1001 = vld [vmem:[%s3 + $0x24] sm:$0xf]
  %v1002 = vld [vmem:[%s3 + $0x2c] sm:$0xf]
  %v1003 = vld [vmem:[%s3 + $0x34] sm:$0xf]
  %v1004 = vld [vmem:[%s3 + $0x3c] sm:$0xf]
  %v1005 = vld [vmem:[%s3 + $0x44] sm:$0xf]
  %v1006 = vld [vmem:[%s3 + $0x4c] sm:$0xf]
  %v1007 = vld [vmem:[%s3 + $0x54] sm:$0xf]
  %v1008 = vld [vmem:[%s3 + $0x5c] sm:$0xf]
  %v1009 = vld [vmem:[%s3 + $0x64] sm:$0xf]
  %v1010 = vld [vmem:[%s3 + $0x6c] sm:$0xf]
  %v1011 = vld [vmem:[%s3 + $0x74] sm:$0xf]
  %v1012 = vld [vmem:[%s3 + $0x7c] sm:$0xf]
  %v1013 = vld [vmem:[%s3 + $0x84] sm:$0xf]
  %v1014 = vld [vmem:[%s3 + $0x8c] sm:$0xf]
  %v1015 = vld [vmem:[%s3 + $0x94] sm:$0xf]
  %v1016 = vld [vmem:[%s3 + $0x9c] sm:$0xf]
  %v1017 = vld [vmem:[%s3 + $0xa4] sm:$0xf]
  %v1018 = vld [vmem:[%s3 + $0xac] sm:$0xf]
  %v1019 = vld [vmem:[%s3 + $0xb4] sm:$0xf]
  %v1020 = vld [vmem:[%s3 + $0xbc] sm:$0xf]
  %v1021 = vld [vmem:[%s3 + $0xc4] sm:$0xf]
  %v1022 = vld [vmem:[%s3 + $0xcc] sm:$0xf]
  %v1023 = vld [vmem:[%s3 + $0xd4] sm:$0xf]
  %v1024 = vld [vmem:[%s3 + $0xdc] sm:$0xf]
  %v1025 = vld [vmem:[%s3 + $0xe4] sm:$0xf]
  %v1026 = vld [vmem:[%s3 + $0xec] sm:$0xf]
  %v1027 = vld [vmem:[%s3 + $0xf4] sm:$0xf]
  %v1028 = vld [vmem:[%s3 + $0xfc] sm:$0xf]
  %v1029 = vpack.c.bf16 %v995, %v995
  %v1030 = vpack.c.bf16 %v996, %v996
  %v1031 = vld [vmem:[%s4 + $0xa] sm:$0x1]
  %v1033 = vlaneseq
  %v1034 = vshrl.u32 %v1033, 7
  %v1035 = vsub.s32 0, %v1034
  %v1036 = vrot.slane %v1031, %v1035
  %v1070 = vunpack.c.l.b16 %v997
  %v1071 = vunpack.c.l.b16 %v998
  %v1072 = vunpack.c.l.b16 %v999
  %v1073 = vunpack.c.l.b16 %v1000
  %v1074 = vunpack.c.l.b16 %v1001
  %v1075 = vunpack.c.l.b16 %v1002
  %v1076 = vunpack.c.l.b16 %v1003
  %v1077 = vunpack.c.l.b16 %v1004
  %v1078 = vunpack.c.l.b16 %v1005
  %v1079 = vunpack.c.l.b16 %v1006
  %v1080 = vunpack.c.l.b16 %v1007
  %v1081 = vunpack.c.l.b16 %v1008
  %v1082 = vunpack.c.l.b16 %v1009
  %v1083 = vunpack.c.l.b16 %v1010
  %v1084 = vunpack.c.l.b16 %v1011
  %v1085 = vunpack.c.l.b16 %v1012
  %v1086 = vunpack.c.l.b16 %v1013
  %v1087 = vunpack.c.l.b16 %v1014
  %v1088 = vunpack.c.l.b16 %v1015
  %v1089 = vunpack.c.l.b16 %v1016
  %v1090 = vunpack.c.l.b16 %v1017
  %v1091 = vunpack.c.l.b16 %v1018
  %v1092 = vunpack.c.l.b16 %v1019
  %v1093 = vunpack.c.l.b16 %v1020
  %v1094 = vunpack.c.l.b16 %v1021
  %v1095 = vunpack.c.l.b16 %v1022
  %v1096 = vunpack.c.l.b16 %v1023
  %v1097 = vunpack.c.l.b16 %v1024
  %v1098 = vunpack.c.l.b16 %v1025
  %v1099 = vunpack.c.l.b16 %v1026
  %v1100 = vunpack.c.l.b16 %v1027
  %v1101 = vunpack.c.l.b16 %v1028
  %v1102 = vpack.c.b16 %v1071, %v1070
  %v1103 = vpack.c.b16 %v1073, %v1072
  %v1104 = vpack.c.b16 %v1075, %v1074
  %v1105 = vpack.c.b16 %v1077, %v1076
  %v1106 = vpack.c.b16 %v1079, %v1078
  %v1107 = vpack.c.b16 %v1081, %v1080
  %v1108 = vpack.c.b16 %v1083, %v1082
  %v1109 = vpack.c.b16 %v1085, %v1084
  %v1110 = vpack.c.b16 %v1087, %v1086
  %v1111 = vpack.c.b16 %v1089, %v1088
  %v1112 = vpack.c.b16 %v1091, %v1090
  %v1113 = vpack.c.b16 %v1093, %v1092
  %v1114 = vpack.c.b16 %v1095, %v1094
  %v1115 = vpack.c.b16 %v1097, %v1096
  %v1116 = vpack.c.b16 %v1099, %v1098
  %v1117 = vpack.c.b16 %v1101, %v1100
  %1134 = vmatprep.subr.bf16.mxu0 0
  %1135 = vmatpush1.bf16.msra.mxu0 %v1109
  %1136 = vmatprep.subr.bf16.mxu0 0
  %1137 = vmatpush1.bf16.msra.mxu0 %v1108
  %1138 = vmatprep.subr.bf16.mxu0 0
  %1139 = vmatpush1.bf16.msra.mxu0 %v1107
  %1140 = vmatprep.subr.bf16.mxu0 0
  %1141 = vmatpush1.bf16.msra.mxu0 %v1106
  %1142 = vmatprep.subr.bf16.mxu0 0
  %1143 = vmatpush1.bf16.msra.mxu0 %v1105
  %1144 = vmatprep.subr.bf16.mxu0 0
  %1145 = vmatpush1.bf16.msra.mxu0 %v1104
  %1146 = vmatprep.subr.bf16.mxu0 0
  %1147 = vmatpush1.bf16.msra.mxu0 %v1103
  %1148 = vmatprep.subr.bf16.mxu0 0
  %1149 = vmatpush1.bf16.msra.mxu0 %v1102
  %1150 = vmatprep.subr.bf16.mxu0 0
  %1151 = vmatpush2.bf16.msra.mxu0 %v1117
  %1152 = vmatprep.subr.bf16.mxu0 0
  %1153 = vmatpush2.bf16.msra.mxu0 %v1116
  %1154 = vmatprep.subr.bf16.mxu0 0
  %1155 = vmatpush2.bf16.msra.mxu0 %v1115
  %1156 = vmatprep.subr.bf16.mxu0 0
  %1157 = vmatpush2.bf16.msra.mxu0 %v1114
  %1158 = vmatprep.subr.bf16.mxu0 0
  %1159 = vmatpush2.bf16.msra.mxu0 %v1113
  %1160 = vmatprep.subr.bf16.mxu0 0
  %1161 = vmatpush2.bf16.msra.mxu0 %v1112
  %1162 = vmatprep.subr.bf16.mxu0 0
  %1163 = vmatpush2.bf16.msra.mxu0 %v1111
  %1164 = vmatprep.subr.bf16.mxu0 0
  %1165 = vmatpush2.bf16.msra.mxu0 %v1110
  %1166 = vmatprep.mubr.bf16.mxu0 %v1030
  %1167 = vmatmul.mubr.bf16.gmra.mxu0 %v1029
  %v1168 = vpop.f32.mrf.mxu0
  %v1169 = vadd.f32 %v1036, %v1168
  %v1170 = vpop.f32.mrf.mxu0
  %v1171 = vpop.f32.mrf.mxu0
  %v1172 = vpop.f32.mrf.mxu0
  %1173 = vdwg.mxu0
  %v1174 = vadd.f32 %v1169, %v662
  %v1175 = vld [vmem:[%s2 + $0x18] sm:$0xf]
  %v1176 = vld [vmem:[%s2 + $0x34] sm:$0xf]
  %v1177 = vld [vmem:[%s2 + $0x50] sm:$0xf]
  %v1178 = vld [vmem:[%s2 + $0x6c] sm:$0xf]
  %v1179 = vld [vmem:[%s2 + $0x88] sm:$0xf]
  %v1180 = vld [vmem:[%s2 + $0xa4] sm:$0xf]
  %v1181 = vld [vmem:[%s2 + $0xc0] sm:$0xf]
  %v1182 = vld [vmem:[%s2 + $0xdc] sm:$0xf]
  %v1183 = vld [vmem:[%s2 + $0xf8] sm:$0xf]
  %v1184 = vld [vmem:[%s2 + $0x114] sm:$0xf]
  %v1185 = vld [vmem:[%s2 + $0x130] sm:$0xf]
  %v1186 = vld [vmem:[%s2 + $0x14c] sm:$0xf]
  %v1187 = vld [vmem:[%s2 + $0x168] sm:$0xf]
  %v1188 = vld [vmem:[%s2 + $0x184] sm:$0xf]
  %v1189 = vld [vmem:[%s2 + $0x1a0] sm:$0xf]
  %v1190 = vld [vmem:[%s2 + $0x1bc] sm:$0xf]
  %v1191 = vpack.c.bf16 %v1174, %v1174
  %v1192 = vld [vmem:[%s5] sm:$0xff]
  %v1193 = vpack.c.bf16 %v1192, %v1192
  %v1194 = vld [vmem:[%s6] sm:$0xf]
  %v1195 = vld [vmem:[%s6 + $0x4] sm:$0xf]
  %v1196 = vld [vmem:[%s6 + $0x8] sm:$0xf]
  %v1197 = vld [vmem:[%s6 + $0xc] sm:$0xf]
  %v1198 = vld [vmem:[%s6 + $0x10] sm:$0xf]
  %v1199 = vld [vmem:[%s6 + $0x14] sm:$0xf]
  %v1200 = vld [vmem:[%s6 + $0x18] sm:$0xf]
  %v1201 = vld [vmem:[%s6 + $0x1c] sm:$0xf]
  %v1202 = vld [vmem:[%s9] sm:$0x1]
  %v1204 = vlaneseq
  %v1205 = vshrl.u32 %v1204, 7
  %v1206 = vsub.s32 0, %v1205
  %v1207 = vrot.slane %v1202, %v1206
  %v1217 = vunpack.c.l.b16 %v1194
  %v1218 = vunpack.c.l.b16 %v1195
  %v1219 = vunpack.c.l.b16 %v1196
  %v1220 = vunpack.c.l.b16 %v1197
  %v1221 = vunpack.c.l.b16 %v1198
  %v1222 = vunpack.c.l.b16 %v1199
  %v1223 = vunpack.c.l.b16 %v1200
  %v1224 = vunpack.c.l.b16 %v1201
  %v1225 = vpack.c.b16 %v1218, %v1217
  %v1226 = vpack.c.b16 %v1220, %v1219
  %v1227 = vpack.c.b16 %v1222, %v1221
  %v1228 = vpack.c.b16 %v1224, %v1223
  %v1234 = vsel %vm107, %v1193, 0
  %1236 = vmatprep.subr.bf16.mxu0 0
  %1237 = vmatpush1.bf16.msra.mxu0 0
  %1238 = vmatprep.subr.bf16.mxu0 0
  %1239 = vmatpush1.bf16.msra.mxu0 0
  %1240 = vmatprep.subr.bf16.mxu0 0
  %1241 = vmatpush1.bf16.msra.mxu0 0
  %1242 = vmatprep.subr.bf16.mxu0 0
  %1243 = vmatpush1.bf16.msra.mxu0 0
  %1244 = vmatprep.subr.bf16.mxu0 0
  %1245 = vmatpush1.bf16.msra.mxu0 %v1228
  %1246 = vmatprep.subr.bf16.mxu0 0
  %1247 = vmatpush1.bf16.msra.mxu0 %v1227
  %1248 = vmatprep.subr.bf16.mxu0 0
  %1249 = vmatpush1.bf16.msra.mxu0 %v1226
  %1250 = vmatprep.subr.bf16.mxu0 0
  %1251 = vmatpush1.bf16.msra.mxu0 %v1225
  %1252 = vmatprep.subr.bf16.mxu0 0
  %1253 = vmatpush2.bf16.msra.mxu0 0
  %1254 = vmatprep.subr.bf16.mxu0 0
  %1255 = vmatpush2.bf16.msra.mxu0 0
  %1256 = vmatprep.subr.bf16.mxu0 0
  %1257 = vmatpush2.bf16.msra.mxu0 0
  %1258 = vmatprep.subr.bf16.mxu0 0
  %1259 = vmatpush2.bf16.msra.mxu0 0
  %1260 = vmatprep.subr.bf16.mxu0 0
  %1261 = vmatpush2.bf16.msra.mxu0 0
  %1262 = vmatprep.subr.bf16.mxu0 0
  %1263 = vmatpush2.bf16.msra.mxu0 0
  %1264 = vmatprep.subr.bf16.mxu0 0
  %1265 = vmatpush2.bf16.msra.mxu0 0
  %1266 = vmatprep.subr.bf16.mxu0 0
  %1267 = vmatpush2.bf16.msra.mxu0 0
  %1268 = vmatprep.mubr.bf16.mxu0 0
  %1269 = vmatmul.mubr.bf16.gmra.mxu0 %v1234
  %v1270 = vpop.f32.mrf.mxu0
  %v1271 = vadd.f32 %v1207, %v1270
  %v1272 = vpop.f32.mrf.mxu0
  %v1273 = vpop.f32.mrf.mxu0
  %v1274 = vpop.f32.mrf.mxu0
  %1275 = vdwg.mxu0
  %v1276 = vld [vmem:[%s7] sm:$0xf]
  %v1277 = vld [vmem:[%s7 + $0x1c] sm:$0xf]
  %v1278 = vld [vmem:[%s7 + $0x38] sm:$0xf]
  %v1279 = vld [vmem:[%s7 + $0x54] sm:$0xf]
  %v1280 = vld [vmem:[%s7 + $0x70] sm:$0xf]
  %v1281 = vld [vmem:[%s7 + $0x8c] sm:$0xf]
  %v1282 = vld [vmem:[%s7 + $0xa8] sm:$0xf]
  %v1283 = vld [vmem:[%s7 + $0xc4] sm:$0xf]
  %v1284 = vld [vmem:[%s7 + $0xe0] sm:$0xf]
  %v1285 = vld [vmem:[%s7 + $0xfc] sm:$0xf]
  %v1286 = vld [vmem:[%s7 + $0x118] sm:$0xf]
  %v1287 = vld [vmem:[%s7 + $0x134] sm:$0xf]
  %v1288 = vld [vmem:[%s7 + $0x150] sm:$0xf]
  %v1289 = vld [vmem:[%s7 + $0x16c] sm:$0xf]
  %v1290 = vld [vmem:[%s7 + $0x188] sm:$0xf]
  %v1291 = vld [vmem:[%s7 + $0x1a4] sm:$0xf]
  %v1292 = vpack.c.bf16 %v1271, %v1271
  %v1309 = vunpack.c.l.b16 %v1276
  %v1310 = vunpack.c.l.b16 %v1277
  %v1311 = vunpack.c.l.b16 %v1278
  %v1312 = vunpack.c.l.b16 %v1279
  %v1313 = vunpack.c.l.b16 %v1280
  %v1314 = vunpack.c.l.b16 %v1281
  %v1315 = vunpack.c.l.b16 %v1282
  %v1316 = vunpack.c.l.b16 %v1283
  %v1317 = vunpack.c.l.b16 %v1284
  %v1318 = vunpack.c.l.b16 %v1285
  %v1319 = vunpack.c.l.b16 %v1286
  %v1320 = vunpack.c.l.b16 %v1287
  %v1321 = vunpack.c.l.b16 %v1288
  %v1322 = vunpack.c.l.b16 %v1289
  %v1323 = vunpack.c.l.b16 %v1290
  %v1324 = vunpack.c.l.b16 %v1291
  %v1325 = vpack.c.b16 %v1310, %v1309
  %v1326 = vpack.c.b16 %v1312, %v1311
  %v1327 = vpack.c.b16 %v1314, %v1313
  %v1328 = vpack.c.b16 %v1316, %v1315
  %v1329 = vpack.c.b16 %v1318, %v1317
  %v1330 = vpack.c.b16 %v1320, %v1319
  %v1331 = vpack.c.b16 %v1322, %v1321
  %v1332 = vpack.c.b16 %v1324, %v1323
  %1341 = vmatprep.subr.bf16.mxu0 0
  %1342 = vmatpush1.bf16.msra.mxu0 %v1332
  %1343 = vmatprep.subr.bf16.mxu0 0
  %1344 = vmatpush1.bf16.msra.mxu0 %v1331
  %1345 = vmatprep.subr.bf16.mxu0 0
  %1346 = vmatpush1.bf16.msra.mxu0 %v1330
  %1347 = vmatprep.subr.bf16.mxu0 0
  %1348 = vmatpush1.bf16.msra.mxu0 %v1329
  %1349 = vmatprep.subr.bf16.mxu0 0
  %1350 = vmatpush1.bf16.msra.mxu0 %v1328
  %1351 = vmatprep.subr.bf16.mxu0 0
  %1352 = vmatpush1.bf16.msra.mxu0 %v1327
  %1353 = vmatprep.subr.bf16.mxu0 0
  %1354 = vmatpush1.bf16.msra.mxu0 %v1326
  %1355 = vmatprep.subr.bf16.mxu0 0
  %1356 = vmatpush1.bf16.msra.mxu0 %v1325
  %1357 = vmatprep.subr.bf16.mxu0 0
  %1358 = vmatpush2.bf16.msra.mxu0 0
  %1359 = vmatprep.subr.bf16.mxu0 0
  %1360 = vmatpush2.bf16.msra.mxu0 0
  %1361 = vmatprep.subr.bf16.mxu0 0
  %1362 = vmatpush2.bf16.msra.mxu0 0
  %1363 = vmatprep.subr.bf16.mxu0 0
  %1364 = vmatpush2.bf16.msra.mxu0 0
  %1365 = vmatprep.subr.bf16.mxu0 0
  %1366 = vmatpush2.bf16.msra.mxu0 0
  %1367 = vmatprep.subr.bf16.mxu0 0
  %1368 = vmatpush2.bf16.msra.mxu0 0
  %1369 = vmatprep.subr.bf16.mxu0 0
  %1370 = vmatpush2.bf16.msra.mxu0 0
  %1371 = vmatprep.subr.bf16.mxu0 0
  %1372 = vmatpush2.bf16.msra.mxu0 0
  %1373 = vmatprep.mubr.bf16.mxu0 0
  %1374 = vmatmul.mubr.bf16.gmra.mxu0 %v1292
  %v1375 = vpop.f32.mrf.mxu0
  %v1376 = vadd.f32 0.0, %v1375
  %v1377 = vpop.f32.mrf.mxu0
  %v1378 = vpop.f32.mrf.mxu0
  %v1379 = vpop.f32.mrf.mxu0
  %1380 = vdwg.mxu0
  %v1381 = vsub.f32 %v1271, %v1376
  %v1382 = vmul.f32 %v1381, %v1381
  %v1383 = vpack.c.bf16 %v1382, %v1382
  %1384 = vmatprep.subr.bf16.mxu0 0
  %1385 = vmatpush1.bf16.msra.mxu0 %v1332
  %1386 = vmatprep.subr.bf16.mxu0 0
  %1387 = vmatpush1.bf16.msra.mxu0 %v1331
  %1388 = vmatprep.subr.bf16.mxu0 0
  %1389 = vmatpush1.bf16.msra.mxu0 %v1330
  %1390 = vmatprep.subr.bf16.mxu0 0
  %1391 = vmatpush1.bf16.msra.mxu0 %v1329
  %1392 = vmatprep.subr.bf16.mxu0 0
  %1393 = vmatpush1.bf16.msra.mxu0 %v1328
  %1394 = vmatprep.subr.bf16.mxu0 0
  %1395 = vmatpush1.bf16.msra.mxu0 %v1327
  %1396 = vmatprep.subr.bf16.mxu0 0
  %1397 = vmatpush1.bf16.msra.mxu0 %v1326
  %1398 = vmatprep.subr.bf16.mxu0 0
  %1399 = vmatpush1.bf16.msra.mxu0 %v1325
  %1400 = vmatprep.subr.bf16.mxu0 0
  %1401 = vmatpush2.bf16.msra.mxu0 0
  %1402 = vmatprep.subr.bf16.mxu0 0
  %1403 = vmatpush2.bf16.msra.mxu0 0
  %1404 = vmatprep.subr.bf16.mxu0 0
  %1405 = vmatpush2.bf16.msra.mxu0 0
  %1406 = vmatprep.subr.bf16.mxu0 0
  %1407 = vmatpush2.bf16.msra.mxu0 0
  %1408 = vmatprep.subr.bf16.mxu0 0
  %1409 = vmatpush2.bf16.msra.mxu0 0
  %1410 = vmatprep.subr.bf16.mxu0 0
  %1411 = vmatpush2.bf16.msra.mxu0 0
  %1412 = vmatprep.subr.bf16.mxu0 0
  %1413 = vmatpush2.bf16.msra.mxu0 0
  %1414 = vmatprep.subr.bf16.mxu0 0
  %1415 = vmatpush2.bf16.msra.mxu0 0
  %1416 = vmatprep.mubr.bf16.mxu0 0
  %1417 = vmatmul.mubr.bf16.gmra.mxu0 %v1383
  %v1418 = vpop.f32.mrf.mxu0
  %v1419 = vadd.f32 1e-05, %v1418
  %v1420 = vpop.f32.mrf.mxu0
  %v1421 = vpop.f32.mrf.mxu0
  %v1422 = vpop.f32.mrf.mxu0
  %1423 = vdwg.mxu0
  %v1424 = vrsqrt.pop %v1419
  %v1425 = vmul.f32 %v1381, %v1424
  %v1426 = vld [vmem:[%s9 + $0x1] sm:$0x1]
  %v1428 = vlaneseq
  %v1429 = vshrl.u32 %v1428, 7
  %v1430 = vsub.s32 0, %v1429
  %v1431 = vrot.slane %v1426, %v1430
  %v1433 = vmul.f32 %v1425, %v1431
  %v1434 = vld [vmem:[%s9 + $0x2] sm:$0x1]
  %v1436 = vlaneseq
  %v1437 = vshrl.u32 %v1436, 7
  %v1438 = vsub.s32 0, %v1437
  %v1439 = vrot.slane %v1434, %v1438
  %v1441 = vadd.f32 %v1433, %v1439
  %v1442 = vld [vmem:[%s7 + $0x8] sm:$0xff]
  %v1443 = vld [vmem:[%s7 + $0x24] sm:$0xff]
  %v1444 = vld [vmem:[%s7 + $0x40] sm:$0xff]
  %v1445 = vld [vmem:[%s7 + $0x5c] sm:$0xff]
  %v1446 = vld [vmem:[%s7 + $0x78] sm:$0xff]
  %v1447 = vld [vmem:[%s7 + $0x94] sm:$0xff]
  %v1448 = vld [vmem:[%s7 + $0xb0] sm:$0xff]
  %v1449 = vld [vmem:[%s7 + $0xcc] sm:$0xff]
  %v1450 = vld [vmem:[%s7 + $0xe8] sm:$0xff]
  %v1451 = vld [vmem:[%s7 + $0x104] sm:$0xff]
  %v1452 = vld [vmem:[%s7 + $0x120] sm:$0xff]
  %v1453 = vld [vmem:[%s7 + $0x13c] sm:$0xff]
  %v1454 = vld [vmem:[%s7 + $0x158] sm:$0xff]
  %v1455 = vld [vmem:[%s7 + $0x174] sm:$0xff]
  %v1456 = vld [vmem:[%s7 + $0x190] sm:$0xff]
  %v1457 = vld [vmem:[%s7 + $0x1ac] sm:$0xff]
  %v1458 = vpack.c.bf16 %v1441, %v1441
  %v1459 = vld [vmem:[%s9 + $0x3] sm:$0x3]
  %v1461 = vlaneseq
  %v1462 = vshrl.u32 %v1461, 7
  %v1463 = vsub.s32 0, %v1462
  %v1464 = vrot.slane %v1459, %v1463
  %v1465 = vlaneseq
  %v1466 = vshrl.u32 %v1465, 7
  %v1467 = vsub.s32 1, %v1466
  %v1468 = vrot.slane %v1459, %v1467
  %v1487 = vunpack.c.l.b16 %v1442
  %v1488 = vunpack.c.h.b16 %v1442
  %v1489 = vunpack.c.l.b16 %v1443
  %v1490 = vunpack.c.h.b16 %v1443
  %v1491 = vunpack.c.l.b16 %v1444
  %v1492 = vunpack.c.h.b16 %v1444
  %v1493 = vunpack.c.l.b16 %v1445
  %v1494 = vunpack.c.h.b16 %v1445
  %v1495 = vunpack.c.l.b16 %v1446
  %v1496 = vunpack.c.h.b16 %v1446
  %v1497 = vunpack.c.l.b16 %v1447
  %v1498 = vunpack.c.h.b16 %v1447
  %v1499 = vunpack.c.l.b16 %v1448
  %v1500 = vunpack.c.h.b16 %v1448
  %v1501 = vunpack.c.l.b16 %v1449
  %v1502 = vunpack.c.h.b16 %v1449
  %v1503 = vunpack.c.l.b16 %v1450
  %v1504 = vunpack.c.h.b16 %v1450
  %v1505 = vunpack.c.l.b16 %v1451
  %v1506 = vunpack.c.h.b16 %v1451
  %v1507 = vunpack.c.l.b16 %v1452
  %v1508 = vunpack.c.h.b16 %v1452
  %v1509 = vunpack.c.l.b16 %v1453
  %v1510 = vunpack.c.h.b16 %v1453
  %v1511 = vunpack.c.l.b16 %v1454
  %v1512 = vunpack.c.h.b16 %v1454
  %v1513 = vunpack.c.l.b16 %v1455
  %v1514 = vunpack.c.h.b16 %v1455
  %v1515 = vunpack.c.l.b16 %v1456
  %v1516 = vunpack.c.h.b16 %v1456
  %v1517 = vunpack.c.l.b16 %v1457
  %v1518 = vunpack.c.h.b16 %v1457
  %v1519 = vpack.c.b16 %v1489, %v1487
  %v1520 = vpack.c.b16 %v1490, %v1488
  %v1521 = vpack.c.b16 %v1493, %v1491
  %v1522 = vpack.c.b16 %v1494, %v1492
  %v1523 = vpack.c.b16 %v1497, %v1495
  %v1524 = vpack.c.b16 %v1498, %v1496
  %v1525 = vpack.c.b16 %v1501, %v1499
  %v1526 = vpack.c.b16 %v1502, %v1500
  %v1527 = vpack.c.b16 %v1505, %v1503
  %v1528 = vpack.c.b16 %v1506, %v1504
  %v1529 = vpack.c.b16 %v1509, %v1507
  %v1530 = vpack.c.b16 %v1510, %v1508
  %v1531 = vpack.c.b16 %v1513, %v1511
  %v1532 = vpack.c.b16 %v1514, %v1512
  %v1533 = vpack.c.b16 %v1517, %v1515
  %v1534 = vpack.c.b16 %v1518, %v1516
  %1551 = vmatprep.subr.bf16.mxu0 %v1534
  %1552 = vmatpush1.bf16.msra.mxu0 %v1533
  %1553 = vmatprep.subr.bf16.mxu0 %v1532
  %1554 = vmatpush1.bf16.msra.mxu0 %v1531
  %1555 = vmatprep.subr.bf16.mxu0 %v1530
  %1556 = vmatpush1.bf16.msra.mxu0 %v1529
  %1557 = vmatprep.subr.bf16.mxu0 %v1528
  %1558 = vmatpush1.bf16.msra.mxu0 %v1527
  %1559 = vmatprep.subr.bf16.mxu0 %v1526
  %1560 = vmatpush1.bf16.msra.mxu0 %v1525
  %1561 = vmatprep.subr.bf16.mxu0 %v1524
  %1562 = vmatpush1.bf16.msra.mxu0 %v1523
  %1563 = vmatprep.subr.bf16.mxu0 %v1522
  %1564 = vmatpush1.bf16.msra.mxu0 %v1521
  %1565 = vmatprep.subr.bf16.mxu0 %v1520
  %1566 = vmatpush1.bf16.msra.mxu0 %v1519
  %1567 = vmatprep.subr.bf16.mxu0 0
  %1568 = vmatpush2.bf16.msra.mxu0 0
  %1569 = vmatprep.subr.bf16.mxu0 0
  %1570 = vmatpush2.bf16.msra.mxu0 0
  %1571 = vmatprep.subr.bf16.mxu0 0
  %1572 = vmatpush2.bf16.msra.mxu0 0
  %1573 = vmatprep.subr.bf16.mxu0 0
  %1574 = vmatpush2.bf16.msra.mxu0 0
  %1575 = vmatprep.subr.bf16.mxu0 0
  %1576 = vmatpush2.bf16.msra.mxu0 0
  %1577 = vmatprep.subr.bf16.mxu0 0
  %1578 = vmatpush2.bf16.msra.mxu0 0
  %1579 = vmatprep.subr.bf16.mxu0 0
  %1580 = vmatpush2.bf16.msra.mxu0 0
  %1581 = vmatprep.subr.bf16.mxu0 0
  %1582 = vmatpush2.bf16.msra.mxu0 0
  %1583 = vmatprep.mubr.bf16.mxu0 0
  %1584 = vmatmul.mubr.bf16.gmra.mxu0 %v1458
  %v1585 = vpop.f32.mrf.mxu0
  %v1586 = vadd.f32 %v1464, %v1585
  %v1587 = vpop.f32.mrf.mxu0
  %v1588 = vadd.f32 %v1468, %v1587
  %v1589 = vpop.f32.mrf.mxu0
  %v1590 = vpop.f32.mrf.mxu0
  %1591 = vdwg.mxu0
  %v1592 = vmul.f32 %v1586, 0.5
  %v1593 = vmul.f32 %v1588, 0.5
  %v1594 = vmul.f32 %v1586, 0.044715
  %v1595 = vmul.f32 %v1588, 0.044715
  %v1596 = vmul.f32 %v1594, %v1586
  %v1597 = vmul.f32 %v1595, %v1588
  %v1598 = vmul.f32 %v1596, %v1586
  %v1599 = vmul.f32 %v1597, %v1588
  %v1600 = vadd.f32 %v1586, %v1598
  %v1601 = vadd.f32 %v1588, %v1599
  %v1602 = vmul.f32 %v1600, 0.7978846
  %v1603 = vmul.f32 %v1601, 0.7978846
  %v1604 = vtanh.pop %v1602
  %v1605 = vtanh.pop %v1603
  %v1606 = vadd.f32 %v1604, 1.0
  %v1607 = vadd.f32 %v1605, 1.0
  %v1608 = vmul.f32 %v1592, %v1606
  %v1609 = vmul.f32 %v1593, %v1607
  %v1610 = vld [vmem:[%s8] sm:$0xf]
  %v1611 = vld [vmem:[%s8 + $0x8] sm:$0xf]
  %v1612 = vld [vmem:[%s8 + $0x10] sm:$0xf]
  %v1613 = vld [vmem:[%s8 + $0x18] sm:$0xf]
  %v1614 = vld [vmem:[%s8 + $0x20] sm:$0xf]
  %v1615 = vld [vmem:[%s8 + $0x28] sm:$0xf]
  %v1616 = vld [vmem:[%s8 + $0x30] sm:$0xf]
  %v1617 = vld [vmem:[%s8 + $0x38] sm:$0xf]
  %v1618 = vld [vmem:[%s8 + $0x40] sm:$0xf]
  %v1619 = vld [vmem:[%s8 + $0x48] sm:$0xf]
  %v1620 = vld [vmem:[%s8 + $0x50] sm:$0xf]
  %v1621 = vld [vmem:[%s8 + $0x58] sm:$0xf]
  %v1622 = vld [vmem:[%s8 + $0x60] sm:$0xf]
  %v1623 = vld [vmem:[%s8 + $0x68] sm:$0xf]
  %v1624 = vld [vmem:[%s8 + $0x70] sm:$0xf]
  %v1625 = vld [vmem:[%s8 + $0x78] sm:$0xf]
  %v1626 = vld [vmem:[%s8 + $0x80] sm:$0xf]
  %v1627 = vld [vmem:[%s8 + $0x88] sm:$0xf]
  %v1628 = vld [vmem:[%s8 + $0x90] sm:$0xf]
  %v1629 = vld [vmem:[%s8 + $0x98] sm:$0xf]
  %v1630 = vld [vmem:[%s8 + $0xa0] sm:$0xf]
  %v1631 = vld [vmem:[%s8 + $0xa8] sm:$0xf]
  %v1632 = vld [vmem:[%s8 + $0xb0] sm:$0xf]
  %v1633 = vld [vmem:[%s8 + $0xb8] sm:$0xf]
  %v1634 = vld [vmem:[%s8 + $0xc0] sm:$0xf]
  %v1635 = vld [vmem:[%s8 + $0xc8] sm:$0xf]
  %v1636 = vld [vmem:[%s8 + $0xd0] sm:$0xf]
  %v1637 = vld [vmem:[%s8 + $0xd8] sm:$0xf]
  %v1638 = vld [vmem:[%s8 + $0xe0] sm:$0xf]
  %v1639 = vld [vmem:[%s8 + $0xe8] sm:$0xf]
  %v1640 = vld [vmem:[%s8 + $0xf0] sm:$0xf]
  %v1641 = vld [vmem:[%s8 + $0xf8] sm:$0xf]
  %v1642 = vpack.c.bf16 %v1608, %v1608
  %v1643 = vpack.c.bf16 %v1609, %v1609
  %v1644 = vld [vmem:[%s9 + $0x5] sm:$0x1]
  %v1646 = vlaneseq
  %v1647 = vshrl.u32 %v1646, 7
  %v1648 = vsub.s32 0, %v1647
  %v1649 = vrot.slane %v1644, %v1648
  %v1683 = vunpack.c.l.b16 %v1610
  %v1684 = vunpack.c.l.b16 %v1611
  %v1685 = vunpack.c.l.b16 %v1612
  %v1686 = vunpack.c.l.b16 %v1613
  %v1687 = vunpack.c.l.b16 %v1614
  %v1688 = vunpack.c.l.b16 %v1615
  %v1689 = vunpack.c.l.b16 %v1616
  %v1690 = vunpack.c.l.b16 %v1617
  %v1691 = vunpack.c.l.b16 %v1618
  %v1692 = vunpack.c.l.b16 %v1619
  %v1693 = vunpack.c.l.b16 %v1620
  %v1694 = vunpack.c.l.b16 %v1621
  %v1695 = vunpack.c.l.b16 %v1622
  %v1696 = vunpack.c.l.b16 %v1623
  %v1697 = vunpack.c.l.b16 %v1624
  %v1698 = vunpack.c.l.b16 %v1625
  %v1699 = vunpack.c.l.b16 %v1626
  %v1700 = vunpack.c.l.b16 %v1627
  %v1701 = vunpack.c.l.b16 %v1628
  %v1702 = vunpack.c.l.b16 %v1629
  %v1703 = vunpack.c.l.b16 %v1630
  %v1704 = vunpack.c.l.b16 %v1631
  %v1705 = vunpack.c.l.b16 %v1632
  %v1706 = vunpack.c.l.b16 %v1633
  %v1707 = vunpack.c.l.b16 %v1634
  %v1708 = vunpack.c.l.b16 %v1635
  %v1709 = vunpack.c.l.b16 %v1636
  %v1710 = vunpack.c.l.b16 %v1637
  %v1711 = vunpack.c.l.b16 %v1638
  %v1712 = vunpack.c.l.b16 %v1639
  %v1713 = vunpack.c.l.b16 %v1640
  %v1714 = vunpack.c.l.b16 %v1641
  %v1715 = vpack.c.b16 %v1684, %v1683
  %v1716 = vpack.c.b16 %v1686, %v1685
  %v1717 = vpack.c.b16 %v1688, %v1687
  %v1718 = vpack.c.b16 %v1690, %v1689
  %v1719 = vpack.c.b16 %v1692, %v1691
  %v1720 = vpack.c.b16 %v1694, %v1693
  %v1721 = vpack.c.b16 %v1696, %v1695
  %v1722 = vpack.c.b16 %v1698, %v1697
  %v1723 = vpack.c.b16 %v1700, %v1699
  %v1724 = vpack.c.b16 %v1702, %v1701
  %v1725 = vpack.c.b16 %v1704, %v1703
  %v1726 = vpack.c.b16 %v1706, %v1705
  %v1727 = vpack.c.b16 %v1708, %v1707
  %v1728 = vpack.c.b16 %v1710, %v1709
  %v1729 = vpack.c.b16 %v1712, %v1711
  %v1730 = vpack.c.b16 %v1714, %v1713
  %1747 = vmatprep.subr.bf16.mxu0 0
  %1748 = vmatpush1.bf16.msra.mxu0 %v1722
  %1749 = vmatprep.subr.bf16.mxu0 0
  %1750 = vmatpush1.bf16.msra.mxu0 %v1721
  %1751 = vmatprep.subr.bf16.mxu0 0
  %1752 = vmatpush1.bf16.msra.mxu0 %v1720
  %1753 = vmatprep.subr.bf16.mxu0 0
  %1754 = vmatpush1.bf16.msra.mxu0 %v1719
  %1755 = vmatprep.subr.bf16.mxu0 0
  %1756 = vmatpush1.bf16.msra.mxu0 %v1718
  %1757 = vmatprep.subr.bf16.mxu0 0
  %1758 = vmatpush1.bf16.msra.mxu0 %v1717
  %1759 = vmatprep.subr.bf16.mxu0 0
  %1760 = vmatpush1.bf16.msra.mxu0 %v1716
  %1761 = vmatprep.subr.bf16.mxu0 0
  %1762 = vmatpush1.bf16.msra.mxu0 %v1715
  %1763 = vmatprep.subr.bf16.mxu0 0
  %1764 = vmatpush2.bf16.msra.mxu0 %v1730
  %1765 = vmatprep.subr.bf16.mxu0 0
  %1766 = vmatpush2.bf16.msra.mxu0 %v1729
  %1767 = vmatprep.subr.bf16.mxu0 0
  %1768 = vmatpush2.bf16.msra.mxu0 %v1728
  %1769 = vmatprep.subr.bf16.mxu0 0
  %1770 = vmatpush2.bf16.msra.mxu0 %v1727
  %1771 = vmatprep.subr.bf16.mxu0 0
  %1772 = vmatpush2.bf16.msra.mxu0 %v1726
  %1773 = vmatprep.subr.bf16.mxu0 0
  %1774 = vmatpush2.bf16.msra.mxu0 %v1725
  %1775 = vmatprep.subr.bf16.mxu0 0
  %1776 = vmatpush2.bf16.msra.mxu0 %v1724
  %1777 = vmatprep.subr.bf16.mxu0 0
  %1778 = vmatpush2.bf16.msra.mxu0 %v1723
  %1779 = vmatprep.mubr.bf16.mxu0 %v1643
  %1780 = vmatmul.mubr.bf16.gmra.mxu0 %v1642
  %v1781 = vpop.f32.mrf.mxu0
  %v1782 = vadd.f32 %v1649, %v1781
  %v1783 = vpop.f32.mrf.mxu0
  %v1784 = vpop.f32.mrf.mxu0
  %v1785 = vpop.f32.mrf.mxu0
  %1786 = vdwg.mxu0
  %v1787 = vadd.f32 %v1782, %v1271
  %v1788 = vld [vmem:[%s7 + $0x4] sm:$0xf]
  %v1789 = vld [vmem:[%s7 + $0x20] sm:$0xf]
  %v1790 = vld [vmem:[%s7 + $0x3c] sm:$0xf]
  %v1791 = vld [vmem:[%s7 + $0x58] sm:$0xf]
  %v1792 = vld [vmem:[%s7 + $0x74] sm:$0xf]
  %v1793 = vld [vmem:[%s7 + $0x90] sm:$0xf]
  %v1794 = vld [vmem:[%s7 + $0xac] sm:$0xf]
  %v1795 = vld [vmem:[%s7 + $0xc8] sm:$0xf]
  %v1796 = vld [vmem:[%s7 + $0xe4] sm:$0xf]
  %v1797 = vld [vmem:[%s7 + $0x100] sm:$0xf]
  %v1798 = vld [vmem:[%s7 + $0x11c] sm:$0xf]
  %v1799 = vld [vmem:[%s7 + $0x138] sm:$0xf]
  %v1800 = vld [vmem:[%s7 + $0x154] sm:$0xf]
  %v1801 = vld [vmem:[%s7 + $0x170] sm:$0xf]
  %v1802 = vld [vmem:[%s7 + $0x18c] sm:$0xf]
  %v1803 = vld [vmem:[%s7 + $0x1a8] sm:$0xf]
  %v1804 = vpack.c.bf16 %v1787, %v1787
  %v1821 = vunpack.c.l.b16 %v1788
  %v1822 = vunpack.c.l.b16 %v1789
  %v1823 = vunpack.c.l.b16 %v1790
  %v1824 = vunpack.c.l.b16 %v1791
  %v1825 = vunpack.c.l.b16 %v1792
  %v1826 = vunpack.c.l.b16 %v1793
  %v1827 = vunpack.c.l.b16 %v1794
  %v1828 = vunpack.c.l.b16 %v1795
  %v1829 = vunpack.c.l.b16 %v1796
  %v1830 = vunpack.c.l.b16 %v1797
  %v1831 = vunpack.c.l.b16 %v1798
  %v1832 = vunpack.c.l.b16 %v1799
  %v1833 = vunpack.c.l.b16 %v1800
  %v1834 = vunpack.c.l.b16 %v1801
  %v1835 = vunpack.c.l.b16 %v1802
  %v1836 = vunpack.c.l.b16 %v1803
  %v1837 = vpack.c.b16 %v1822, %v1821
  %v1838 = vpack.c.b16 %v1824, %v1823
  %v1839 = vpack.c.b16 %v1826, %v1825
  %v1840 = vpack.c.b16 %v1828, %v1827
  %v1841 = vpack.c.b16 %v1830, %v1829
  %v1842 = vpack.c.b16 %v1832, %v1831
  %v1843 = vpack.c.b16 %v1834, %v1833
  %v1844 = vpack.c.b16 %v1836, %v1835
  %1853 = vmatprep.subr.bf16.mxu0 0
  %1854 = vmatpush1.bf16.msra.mxu0 %v1844
  %1855 = vmatprep.subr.bf16.mxu0 0
  %1856 = vmatpush1.bf16.msra.mxu0 %v1843
  %1857 = vmatprep.subr.bf16.mxu0 0
  %1858 = vmatpush1.bf16.msra.mxu0 %v1842
  %1859 = vmatprep.subr.bf16.mxu0 0
  %1860 = vmatpush1.bf16.msra.mxu0 %v1841
  %1861 = vmatprep.subr.bf16.mxu0 0
  %1862 = vmatpush1.bf16.msra.mxu0 %v1840
  %1863 = vmatprep.subr.bf16.mxu0 0
  %1864 = vmatpush1.bf16.msra.mxu0 %v1839
  %1865 = vmatprep.subr.bf16.mxu0 0
  %1866 = vmatpush1.bf16.msra.mxu0 %v1838
  %1867 = vmatprep.subr.bf16.mxu0 0
  %1868 = vmatpush1.bf16.msra.mxu0 %v1837
  %1869 = vmatprep.subr.bf16.mxu0 0
  %1870 = vmatpush2.bf16.msra.mxu0 0
  %1871 = vmatprep.subr.bf16.mxu0 0
  %1872 = vmatpush2.bf16.msra.mxu0 0
  %1873 = vmatprep.subr.bf16.mxu0 0
  %1874 = vmatpush2.bf16.msra.mxu0 0
  %1875 = vmatprep.subr.bf16.mxu0 0
  %1876 = vmatpush2.bf16.msra.mxu0 0
  %1877 = vmatprep.subr.bf16.mxu0 0
  %1878 = vmatpush2.bf16.msra.mxu0 0
  %1879 = vmatprep.subr.bf16.mxu0 0
  %1880 = vmatpush2.bf16.msra.mxu0 0
  %1881 = vmatprep.subr.bf16.mxu0 0
  %1882 = vmatpush2.bf16.msra.mxu0 0
  %1883 = vmatprep.subr.bf16.mxu0 0
  %1884 = vmatpush2.bf16.msra.mxu0 0
  %1885 = vmatprep.mubr.bf16.mxu0 0
  %1886 = vmatmul.mubr.bf16.gmra.mxu0 %v1804
  %v1887 = vpop.f32.mrf.mxu0
  %v1888 = vadd.f32 0.0, %v1887
  %v1889 = vpop.f32.mrf.mxu0
  %v1890 = vpop.f32.mrf.mxu0
  %v1891 = vpop.f32.mrf.mxu0
  %1892 = vdwg.mxu0
  %v1893 = vsub.f32 %v1787, %v1888
  %v1894 = vmul.f32 %v1893, %v1893
  %v1895 = vpack.c.bf16 %v1894, %v1894
  %1896 = vmatprep.subr.bf16.mxu0 0
  %1897 = vmatpush1.bf16.msra.mxu0 %v1844
  %1898 = vmatprep.subr.bf16.mxu0 0
  %1899 = vmatpush1.bf16.msra.mxu0 %v1843
  %1900 = vmatprep.subr.bf16.mxu0 0
  %1901 = vmatpush1.bf16.msra.mxu0 %v1842
  %1902 = vmatprep.subr.bf16.mxu0 0
  %1903 = vmatpush1.bf16.msra.mxu0 %v1841
  %1904 = vmatprep.subr.bf16.mxu0 0
  %1905 = vmatpush1.bf16.msra.mxu0 %v1840
  %1906 = vmatprep.subr.bf16.mxu0 0
  %1907 = vmatpush1.bf16.msra.mxu0 %v1839
  %1908 = vmatprep.subr.bf16.mxu0 0
  %1909 = vmatpush1.bf16.msra.mxu0 %v1838
  %1910 = vmatprep.subr.bf16.mxu0 0
  %1911 = vmatpush1.bf16.msra.mxu0 %v1837
  %1912 = vmatprep.subr.bf16.mxu0 0
  %1913 = vmatpush2.bf16.msra.mxu0 0
  %1914 = vmatprep.subr.bf16.mxu0 0
  %1915 = vmatpush2.bf16.msra.mxu0 0
  %1916 = vmatprep.subr.bf16.mxu0 0
  %1917 = vmatpush2.bf16.msra.mxu0 0
  %1918 = vmatprep.subr.bf16.mxu0 0
  %1919 = vmatpush2.bf16.msra.mxu0 0
  %1920 = vmatprep.subr.bf16.mxu0 0
  %1921 = vmatpush2.bf16.msra.mxu0 0
  %1922 = vmatprep.subr.bf16.mxu0 0
  %1923 = vmatpush2.bf16.msra.mxu0 0
  %1924 = vmatprep.subr.bf16.mxu0 0
  %1925 = vmatpush2.bf16.msra.mxu0 0
  %1926 = vmatprep.subr.bf16.mxu0 0
  %1927 = vmatpush2.bf16.msra.mxu0 0
  %1928 = vmatprep.mubr.bf16.mxu0 0
  %1929 = vmatmul.mubr.bf16.gmra.mxu0 %v1895
  %v1930 = vpop.f32.mrf.mxu0
  %v1931 = vadd.f32 1e-05, %v1930
  %v1932 = vpop.f32.mrf.mxu0
  %v1933 = vpop.f32.mrf.mxu0
  %v1934 = vpop.f32.mrf.mxu0
  %1935 = vdwg.mxu0
  %v1936 = vrsqrt.pop %v1931
  %v1937 = vmul.f32 %v1893, %v1936
  %v1938 = vld [vmem:[%s9 + $0x6] sm:$0x1]
  %v1940 = vlaneseq
  %v1941 = vshrl.u32 %v1940, 7
  %v1942 = vsub.s32 0, %v1941
  %v1943 = vrot.slane %v1938, %v1942
  %v1945 = vmul.f32 %v1937, %v1943
  %v1946 = vld [vmem:[%s9 + $0x7] sm:$0x1]
  %v1948 = vlaneseq
  %v1949 = vshrl.u32 %v1948, 7
  %v1950 = vsub.s32 0, %v1949
  %v1951 = vrot.slane %v1946, %v1950
  %v1953 = vadd.f32 %v1945, %v1951
  %v1954 = vld [vmem:[%s7 + $0x10] sm:$0xff]
  %v1955 = vld [vmem:[%s7 + $0x2c] sm:$0xff]
  %v1956 = vld [vmem:[%s7 + $0x48] sm:$0xff]
  %v1957 = vld [vmem:[%s7 + $0x64] sm:$0xff]
  %v1958 = vld [vmem:[%s7 + $0x80] sm:$0xff]
  %v1959 = vld [vmem:[%s7 + $0x9c] sm:$0xff]
  %v1960 = vld [vmem:[%s7 + $0xb8] sm:$0xff]
  %v1961 = vld [vmem:[%s7 + $0xd4] sm:$0xff]
  %v1962 = vld [vmem:[%s7 + $0xf0] sm:$0xff]
  %v1963 = vld [vmem:[%s7 + $0x10c] sm:$0xff]
  %v1964 = vld [vmem:[%s7 + $0x128] sm:$0xff]
  %v1965 = vld [vmem:[%s7 + $0x144] sm:$0xff]
  %v1966 = vld [vmem:[%s7 + $0x160] sm:$0xff]
  %v1967 = vld [vmem:[%s7 + $0x17c] sm:$0xff]
  %v1968 = vld [vmem:[%s7 + $0x198] sm:$0xff]
  %v1969 = vld [vmem:[%s7 + $0x1b4] sm:$0xff]
  %v1970 = vpack.c.bf16 %v1953, %v1953
  %v1971 = vld [vmem:[%s9 + $0x8] sm:$0x3]
  %v1973 = vlaneseq
  %v1974 = vshrl.u32 %v1973, 7
  %v1975 = vsub.s32 0, %v1974
  %v1976 = vrot.slane %v1971, %v1975
  %v1977 = vlaneseq
  %v1978 = vshrl.u32 %v1977, 7
  %v1979 = vsub.s32 1, %v1978
  %v1980 = vrot.slane %v1971, %v1979
  %v1999 = vunpack.c.l.b16 %v1954
  %v2000 = vunpack.c.h.b16 %v1954
  %v2001 = vunpack.c.l.b16 %v1955
  %v2002 = vunpack.c.h.b16 %v1955
  %v2003 = vunpack.c.l.b16 %v1956
  %v2004 = vunpack.c.h.b16 %v1956
  %v2005 = vunpack.c.l.b16 %v1957
  %v2006 = vunpack.c.h.b16 %v1957
  %v2007 = vunpack.c.l.b16 %v1958
  %v2008 = vunpack.c.h.b16 %v1958
  %v2009 = vunpack.c.l.b16 %v1959
  %v2010 = vunpack.c.h.b16 %v1959
  %v2011 = vunpack.c.l.b16 %v1960
  %v2012 = vunpack.c.h.b16 %v1960
  %v2013 = vunpack.c.l.b16 %v1961
  %v2014 = vunpack.c.h.b16 %v1961
  %v2015 = vunpack.c.l.b16 %v1962
  %v2016 = vunpack.c.h.b16 %v1962
  %v2017 = vunpack.c.l.b16 %v1963
  %v2018 = vunpack.c.h.b16 %v1963
  %v2019 = vunpack.c.l.b16 %v1964
  %v2020 = vunpack.c.h.b16 %v1964
  %v2021 = vunpack.c.l.b16 %v1965
  %v2022 = vunpack.c.h.b16 %v1965
  %v2023 = vunpack.c.l.b16 %v1966
  %v2024 = vunpack.c.h.b16 %v1966
  %v2025 = vunpack.c.l.b16 %v1967
  %v2026 = vunpack.c.h.b16 %v1967
  %v2027 = vunpack.c.l.b16 %v1968
  %v2028 = vunpack.c.h.b16 %v1968
  %v2029 = vunpack.c.l.b16 %v1969
  %v2030 = vunpack.c.h.b16 %v1969
  %v2031 = vpack.c.b16 %v2001, %v1999
  %v2032 = vpack.c.b16 %v2002, %v2000
  %v2033 = vpack.c.b16 %v2005, %v2003
  %v2034 = vpack.c.b16 %v2006, %v2004
  %v2035 = vpack.c.b16 %v2009, %v2007
  %v2036 = vpack.c.b16 %v2010, %v2008
  %v2037 = vpack.c.b16 %v2013, %v2011
  %v2038 = vpack.c.b16 %v2014, %v2012
  %v2039 = vpack.c.b16 %v2017, %v2015
  %v2040 = vpack.c.b16 %v2018, %v2016
  %v2041 = vpack.c.b16 %v2021, %v2019
  %v2042 = vpack.c.b16 %v2022, %v2020
  %v2043 = vpack.c.b16 %v2025, %v2023
  %v2044 = vpack.c.b16 %v2026, %v2024
  %v2045 = vpack.c.b16 %v2029, %v2027
  %v2046 = vpack.c.b16 %v2030, %v2028
  %2063 = vmatprep.subr.bf16.mxu0 %v2046
  %2064 = vmatpush1.bf16.msra.mxu0 %v2045
  %2065 = vmatprep.subr.bf16.mxu0 %v2044
  %2066 = vmatpush1.bf16.msra.mxu0 %v2043
  %2067 = vmatprep.subr.bf16.mxu0 %v2042
  %2068 = vmatpush1.bf16.msra.mxu0 %v2041
  %2069 = vmatprep.subr.bf16.mxu0 %v2040
  %2070 = vmatpush1.bf16.msra.mxu0 %v2039
  %2071 = vmatprep.subr.bf16.mxu0 %v2038
  %2072 = vmatpush1.bf16.msra.mxu0 %v2037
  %2073 = vmatprep.subr.bf16.mxu0 %v2036
  %2074 = vmatpush1.bf16.msra.mxu0 %v2035
  %2075 = vmatprep.subr.bf16.mxu0 %v2034
  %2076 = vmatpush1.bf16.msra.mxu0 %v2033
  %2077 = vmatprep.subr.bf16.mxu0 %v2032
  %2078 = vmatpush1.bf16.msra.mxu0 %v2031
  %2079 = vmatprep.subr.bf16.mxu0 0
  %2080 = vmatpush2.bf16.msra.mxu0 0
  %2081 = vmatprep.subr.bf16.mxu0 0
  %2082 = vmatpush2.bf16.msra.mxu0 0
  %2083 = vmatprep.subr.bf16.mxu0 0
  %2084 = vmatpush2.bf16.msra.mxu0 0
  %2085 = vmatprep.subr.bf16.mxu0 0
  %2086 = vmatpush2.bf16.msra.mxu0 0
  %2087 = vmatprep.subr.bf16.mxu0 0
  %2088 = vmatpush2.bf16.msra.mxu0 0
  %2089 = vmatprep.subr.bf16.mxu0 0
  %2090 = vmatpush2.bf16.msra.mxu0 0
  %2091 = vmatprep.subr.bf16.mxu0 0
  %2092 = vmatpush2.bf16.msra.mxu0 0
  %2093 = vmatprep.subr.bf16.mxu0 0
  %2094 = vmatpush2.bf16.msra.mxu0 0
  %2095 = vmatprep.mubr.bf16.mxu0 0
  %2096 = vmatmul.mubr.bf16.gmra.mxu0 %v1970
  %v2097 = vpop.f32.mrf.mxu0
  %v2098 = vadd.f32 %v1976, %v2097
  %v2099 = vpop.f32.mrf.mxu0
  %v2100 = vadd.f32 %v1980, %v2099
  %v2101 = vpop.f32.mrf.mxu0
  %v2102 = vpop.f32.mrf.mxu0
  %2103 = vdwg.mxu0
  %v2104 = vmul.f32 %v2098, 0.5
  %v2105 = vmul.f32 %v2100, 0.5
  %v2106 = vmul.f32 %v2098, 0.044715
  %v2107 = vmul.f32 %v2100, 0.044715
  %v2108 = vmul.f32 %v2106, %v2098
  %v2109 = vmul.f32 %v2107, %v2100
  %v2110 = vmul.f32 %v2108, %v2098
  %v2111 = vmul.f32 %v2109, %v2100
  %v2112 = vadd.f32 %v2098, %v2110
  %v2113 = vadd.f32 %v2100, %v2111
  %v2114 = vmul.f32 %v2112, 0.7978846
  %v2115 = vmul.f32 %v2113, 0.7978846
  %v2116 = vtanh.pop %v2114
  %v2117 = vtanh.pop %v2115
  %v2118 = vadd.f32 %v2116, 1.0
  %v2119 = vadd.f32 %v2117, 1.0
  %v2120 = vmul.f32 %v2104, %v2118
  %v2121 = vmul.f32 %v2105, %v2119
  %v2122 = vld [vmem:[%s8 + $0x4] sm:$0xf]
  %v2123 = vld [vmem:[%s8 + $0xc] sm:$0xf]
  %v2124 = vld [vmem:[%s8 + $0x14] sm:$0xf]
  %v2125 = vld [vmem:[%s8 + $0x1c] sm:$0xf]
  %v2126 = vld [vmem:[%s8 + $0x24] sm:$0xf]
  %v2127 = vld [vmem:[%s8 + $0x2c] sm:$0xf]
  %v2128 = vld [vmem:[%s8 + $0x34] sm:$0xf]
  %v2129 = vld [vmem:[%s8 + $0x3c] sm:$0xf]
  %v2130 = vld [vmem:[%s8 + $0x44] sm:$0xf]
  %v2131 = vld [vmem:[%s8 + $0x4c] sm:$0xf]
  %v2132 = vld [vmem:[%s8 + $0x54] sm:$0xf]
  %v2133 = vld [vmem:[%s8 + $0x5c] sm:$0xf]
  %v2134 = vld [vmem:[%s8 + $0x64] sm:$0xf]
  %v2135 = vld [vmem:[%s8 + $0x6c] sm:$0xf]
  %v2136 = vld [vmem:[%s8 + $0x74] sm:$0xf]
  %v2137 = vld [vmem:[%s8 + $0x7c] sm:$0xf]
  %v2138 = vld [vmem:[%s8 + $0x84] sm:$0xf]
  %v2139 = vld [vmem:[%s8 + $0x8c] sm:$0xf]
  %v2140 = vld [vmem:[%s8 + $0x94] sm:$0xf]
  %v2141 = vld [vmem:[%s8 + $0x9c] sm:$0xf]
  %v2142 = vld [vmem:[%s8 + $0xa4] sm:$0xf]
  %v2143 = vld [vmem:[%s8 + $0xac] sm:$0xf]
  %v2144 = vld [vmem:[%s8 + $0xb4] sm:$0xf]
  %v2145 = vld [vmem:[%s8 + $0xbc] sm:$0xf]
  %v2146 = vld [vmem:[%s8 + $0xc4] sm:$0xf]
  %v2147 = vld [vmem:[%s8 + $0xcc] sm:$0xf]
  %v2148 = vld [vmem:[%s8 + $0xd4] sm:$0xf]
  %v2149 = vld [vmem:[%s8 + $0xdc] sm:$0xf]
  %v2150 = vld [vmem:[%s8 + $0xe4] sm:$0xf]
  %v2151 = vld [vmem:[%s8 + $0xec] sm:$0xf]
  %v2152 = vld [vmem:[%s8 + $0xf4] sm:$0xf]
  %v2153 = vld [vmem:[%s8 + $0xfc] sm:$0xf]
  %v2154 = vpack.c.bf16 %v2120, %v2120
  %v2155 = vpack.c.bf16 %v2121, %v2121
  %v2156 = vld [vmem:[%s9 + $0xa] sm:$0x1]
  %v2158 = vlaneseq
  %v2159 = vshrl.u32 %v2158, 7
  %v2160 = vsub.s32 0, %v2159
  %v2161 = vrot.slane %v2156, %v2160
  %v2195 = vunpack.c.l.b16 %v2122
  %v2196 = vunpack.c.l.b16 %v2123
  %v2197 = vunpack.c.l.b16 %v2124
  %v2198 = vunpack.c.l.b16 %v2125
  %v2199 = vunpack.c.l.b16 %v2126
  %v2200 = vunpack.c.l.b16 %v2127
  %v2201 = vunpack.c.l.b16 %v2128
  %v2202 = vunpack.c.l.b16 %v2129
  %v2203 = vunpack.c.l.b16 %v2130
  %v2204 = vunpack.c.l.b16 %v2131
  %v2205 = vunpack.c.l.b16 %v2132
  %v2206 = vunpack.c.l.b16 %v2133
  %v2207 = vunpack.c.l.b16 %v2134
  %v2208 = vunpack.c.l.b16 %v2135
  %v2209 = vunpack.c.l.b16 %v2136
  %v2210 = vunpack.c.l.b16 %v2137
  %v2211 = vunpack.c.l.b16 %v2138
  %v2212 = vunpack.c.l.b16 %v2139
  %v2213 = vunpack.c.l.b16 %v2140
  %v2214 = vunpack.c.l.b16 %v2141
  %v2215 = vunpack.c.l.b16 %v2142
  %v2216 = vunpack.c.l.b16 %v2143
  %v2217 = vunpack.c.l.b16 %v2144
  %v2218 = vunpack.c.l.b16 %v2145
  %v2219 = vunpack.c.l.b16 %v2146
  %v2220 = vunpack.c.l.b16 %v2147
  %v2221 = vunpack.c.l.b16 %v2148
  %v2222 = vunpack.c.l.b16 %v2149
  %v2223 = vunpack.c.l.b16 %v2150
  %v2224 = vunpack.c.l.b16 %v2151
  %v2225 = vunpack.c.l.b16 %v2152
  %v2226 = vunpack.c.l.b16 %v2153
  %v2227 = vpack.c.b16 %v2196, %v2195
  %v2228 = vpack.c.b16 %v2198, %v2197
  %v2229 = vpack.c.b16 %v2200, %v2199
  %v2230 = vpack.c.b16 %v2202, %v2201
  %v2231 = vpack.c.b16 %v2204, %v2203
  %v2232 = vpack.c.b16 %v2206, %v2205
  %v2233 = vpack.c.b16 %v2208, %v2207
  %v2234 = vpack.c.b16 %v2210, %v2209
  %v2235 = vpack.c.b16 %v2212, %v2211
  %v2236 = vpack.c.b16 %v2214, %v2213
  %v2237 = vpack.c.b16 %v2216, %v2215
  %v2238 = vpack.c.b16 %v2218, %v2217
  %v2239 = vpack.c.b16 %v2220, %v2219
  %v2240 = vpack.c.b16 %v2222, %v2221
  %v2241 = vpack.c.b16 %v2224, %v2223
  %v2242 = vpack.c.b16 %v2226, %v2225
  %2259 = vmatprep.subr.bf16.mxu0 0
  %2260 = vmatpush1.bf16.msra.mxu0 %v2234
  %2261 = vmatprep.subr.bf16.mxu0 0
  %2262 = vmatpush1.bf16.msra.mxu0 %v2233
  %2263 = vmatprep.subr.bf16.mxu0 0
  %2264 = vmatpush1.bf16.msra.mxu0 %v2232
  %2265 = vmatprep.subr.bf16.mxu0 0
  %2266 = vmatpush1.bf16.msra.mxu0 %v2231
  %2267 = vmatprep.subr.bf16.mxu0 0
  %2268 = vmatpush1.bf16.msra.mxu0 %v2230
  %2269 = vmatprep.subr.bf16.mxu0 0
  %2270 = vmatpush1.bf16.msra.mxu0 %v2229
  %2271 = vmatprep.subr.bf16.mxu0 0
  %2272 = vmatpush1.bf16.msra.mxu0 %v2228
  %2273 = vmatprep.subr.bf16.mxu0 0
  %2274 = vmatpush1.bf16.msra.mxu0 %v2227
  %2275 = vmatprep.subr.bf16.mxu0 0
  %2276 = vmatpush2.bf16.msra.mxu0 %v2242
  %2277 = vmatprep.subr.bf16.mxu0 0
  %2278 = vmatpush2.bf16.msra.mxu0 %v2241
  %2279 = vmatprep.subr.bf16.mxu0 0
  %2280 = vmatpush2.bf16.msra.mxu0 %v2240
  %2281 = vmatprep.subr.bf16.mxu0 0
  %2282 = vmatpush2.bf16.msra.mxu0 %v2239
  %2283 = vmatprep.subr.bf16.mxu0 0
  %2284 = vmatpush2.bf16.msra.mxu0 %v2238
  %2285 = vmatprep.subr.bf16.mxu0 0
  %2286 = vmatpush2.bf16.msra.mxu0 %v2237
  %2287 = vmatprep.subr.bf16.mxu0 0
  %2288 = vmatpush2.bf16.msra.mxu0 %v2236
  %2289 = vmatprep.subr.bf16.mxu0 0
  %2290 = vmatpush2.bf16.msra.mxu0 %v2235
  %2291 = vmatprep.mubr.bf16.mxu0 %v2155
  %2292 = vmatmul.mubr.bf16.gmra.mxu0 %v2154
  %v2293 = vpop.f32.mrf.mxu0
  %v2294 = vadd.f32 %v2161, %v2293
  %v2295 = vpop.f32.mrf.mxu0
  %v2296 = vpop.f32.mrf.mxu0
  %v2297 = vpop.f32.mrf.mxu0
  %2298 = vdwg.mxu0
  %v2299 = vadd.f32 %v2294, %v1787
  %v2300 = vld [vmem:[%s7 + $0x18] sm:$0xf]
  %v2301 = vld [vmem:[%s7 + $0x34] sm:$0xf]
  %v2302 = vld [vmem:[%s7 + $0x50] sm:$0xf]
  %v2303 = vld [vmem:[%s7 + $0x6c] sm:$0xf]
  %v2304 = vld [vmem:[%s7 + $0x88] sm:$0xf]
  %v2305 = vld [vmem:[%s7 + $0xa4] sm:$0xf]
  %v2306 = vld [vmem:[%s7 + $0xc0] sm:$0xf]
  %v2307 = vld [vmem:[%s7 + $0xdc] sm:$0xf]
  %v2308 = vld [vmem:[%s7 + $0xf8] sm:$0xf]
  %v2309 = vld [vmem:[%s7 + $0x114] sm:$0xf]
  %v2310 = vld [vmem:[%s7 + $0x130] sm:$0xf]
  %v2311 = vld [vmem:[%s7 + $0x14c] sm:$0xf]
  %v2312 = vld [vmem:[%s7 + $0x168] sm:$0xf]
  %v2313 = vld [vmem:[%s7 + $0x184] sm:$0xf]
  %v2314 = vld [vmem:[%s7 + $0x1a0] sm:$0xf]
  %v2315 = vld [vmem:[%s7 + $0x1bc] sm:$0xf]
  %v2316 = vpack.c.bf16 %v2299, %v2299
  %v2333 = vunpack.c.l.b16 %v2300
  %v2334 = vunpack.c.l.b16 %v2301
  %v2335 = vunpack.c.l.b16 %v2302
  %v2336 = vunpack.c.l.b16 %v2303
  %v2337 = vunpack.c.l.b16 %v2304
  %v2338 = vunpack.c.l.b16 %v2305
  %v2339 = vunpack.c.l.b16 %v2306
  %v2340 = vunpack.c.l.b16 %v2307
  %v2341 = vunpack.c.l.b16 %v2308
  %v2342 = vunpack.c.l.b16 %v2309
  %v2343 = vunpack.c.l.b16 %v2310
  %v2344 = vunpack.c.l.b16 %v2311
  %v2345 = vunpack.c.l.b16 %v2312
  %v2346 = vunpack.c.l.b16 %v2313
  %v2347 = vunpack.c.l.b16 %v2314
  %v2348 = vunpack.c.l.b16 %v2315
  %v2349 = vpack.c.b16 %v2334, %v2333
  %v2350 = vpack.c.b16 %v2336, %v2335
  %v2351 = vpack.c.b16 %v2338, %v2337
  %v2352 = vpack.c.b16 %v2340, %v2339
  %v2353 = vpack.c.b16 %v2342, %v2341
  %v2354 = vpack.c.b16 %v2344, %v2343
  %v2355 = vpack.c.b16 %v2346, %v2345
  %v2356 = vpack.c.b16 %v2348, %v2347
  %2365 = vmatprep.subr.bf16.mxu0 0
  %2366 = vmatpush1.bf16.msra.mxu0 %v2356
  %2367 = vmatprep.subr.bf16.mxu0 0
  %2368 = vmatpush1.bf16.msra.mxu0 %v2355
  %2369 = vmatprep.subr.bf16.mxu0 0
  %2370 = vmatpush1.bf16.msra.mxu0 %v2354
  %2371 = vmatprep.subr.bf16.mxu0 0
  %2372 = vmatpush1.bf16.msra.mxu0 %v2353
  %2373 = vmatprep.subr.bf16.mxu0 0
  %2374 = vmatpush1.bf16.msra.mxu0 %v2352
  %2375 = vmatprep.subr.bf16.mxu0 0
  %2376 = vmatpush1.bf16.msra.mxu0 %v2351
  %2377 = vmatprep.subr.bf16.mxu0 0
  %2378 = vmatpush1.bf16.msra.mxu0 %v2350
  %2379 = vmatprep.subr.bf16.mxu0 0
  %2380 = vmatpush1.bf16.msra.mxu0 %v2349
  %2381 = vmatprep.subr.bf16.mxu0 0
  %2382 = vmatpush2.bf16.msra.mxu0 0
  %2383 = vmatprep.subr.bf16.mxu0 0
  %2384 = vmatpush2.bf16.msra.mxu0 0
  %2385 = vmatprep.subr.bf16.mxu0 0
  %2386 = vmatpush2.bf16.msra.mxu0 0
  %2387 = vmatprep.subr.bf16.mxu0 0
  %2388 = vmatpush2.bf16.msra.mxu0 0
  %2389 = vmatprep.subr.bf16.mxu0 0
  %2390 = vmatpush2.bf16.msra.mxu0 0
  %2391 = vmatprep.subr.bf16.mxu0 0
  %2392 = vmatpush2.bf16.msra.mxu0 0
  %2393 = vmatprep.subr.bf16.mxu0 0
  %2394 = vmatpush2.bf16.msra.mxu0 0
  %2395 = vmatprep.subr.bf16.mxu0 0
  %2396 = vmatpush2.bf16.msra.mxu0 0
  %2397 = vmatprep.mubr.bf16.mxu0 0
  %2398 = vmatmul.mubr.bf16.gmra.mxu0 %v2316
  %v2399 = vpop.f32.mrf.mxu0
  %v2400 = vadd.f32 0.0, %v2399
  %v2401 = vpop.f32.mrf.mxu0
  %v2402 = vpop.f32.mrf.mxu0
  %v2403 = vpop.f32.mrf.mxu0
  %2404 = vdwg.mxu0
  %v2421 = vunpack.c.l.b16 %v1175
  %v2422 = vunpack.c.l.b16 %v1176
  %v2423 = vunpack.c.l.b16 %v1177
  %v2424 = vunpack.c.l.b16 %v1178
  %v2425 = vunpack.c.l.b16 %v1179
  %v2426 = vunpack.c.l.b16 %v1180
  %v2427 = vunpack.c.l.b16 %v1181
  %v2428 = vunpack.c.l.b16 %v1182
  %v2429 = vunpack.c.l.b16 %v1183
  %v2430 = vunpack.c.l.b16 %v1184
  %v2431 = vunpack.c.l.b16 %v1185
  %v2432 = vunpack.c.l.b16 %v1186
  %v2433 = vunpack.c.l.b16 %v1187
  %v2434 = vunpack.c.l.b16 %v1188
  %v2435 = vunpack.c.l.b16 %v1189
  %v2436 = vunpack.c.l.b16 %v1190
  %v2437 = vpack.c.b16 %v2422, %v2421
  %v2438 = vpack.c.b16 %v2424, %v2423
  %v2439 = vpack.c.b16 %v2426, %v2425
  %v2440 = vpack.c.b16 %v2428, %v2427
  %v2441 = vpack.c.b16 %v2430, %v2429
  %v2442 = vpack.c.b16 %v2432, %v2431
  %v2443 = vpack.c.b16 %v2434, %v2433
  %v2444 = vpack.c.b16 %v2436, %v2435
  %2453 = vmatprep.subr.bf16.mxu0 0
  %2454 = vmatpush1.bf16.msra.mxu0 %v2444
  %2455 = vmatprep.subr.bf16.mxu0 0
  %2456 = vmatpush1.bf16.msra.mxu0 %v2443
  %2457 = vmatprep.subr.bf16.mxu0 0
  %2458 = vmatpush1.bf16.msra.mxu0 %v2442
  %2459 = vmatprep.subr.bf16.mxu0 0
  %2460 = vmatpush1.bf16.msra.mxu0 %v2441
  %2461 = vmatprep.subr.bf16.mxu0 0
  %2462 = vmatpush1.bf16.msra.mxu0 %v2440
  %2463 = vmatprep.subr.bf16.mxu0 0
  %2464 = vmatpush1.bf16.msra.mxu0 %v2439
  %2465 = vmatprep.subr.bf16.mxu0 0
  %2466 = vmatpush1.bf16.msra.mxu0 %v2438
  %2467 = vmatprep.subr.bf16.mxu0 0
  %2468 = vmatpush1.bf16.msra.mxu0 %v2437
  %2469 = vmatprep.subr.bf16.mxu0 0
  %2470 = vmatpush2.bf16.msra.mxu0 0
  %2471 = vmatprep.subr.bf16.mxu0 0
  %2472 = vmatpush2.bf16.msra.mxu0 0
  %2473 = vmatprep.subr.bf16.mxu0 0
  %2474 = vmatpush2.bf16.msra.mxu0 0
  %2475 = vmatprep.subr.bf16.mxu0 0
  %2476 = vmatpush2.bf16.msra.mxu0 0
  %2477 = vmatprep.subr.bf16.mxu0 0
  %2478 = vmatpush2.bf16.msra.mxu0 0
  %2479 = vmatprep.subr.bf16.mxu0 0
  %2480 = vmatpush2.bf16.msra.mxu0 0
  %2481 = vmatprep.subr.bf16.mxu0 0
  %2482 = vmatpush2.bf16.msra.mxu0 0
  %2483 = vmatprep.subr.bf16.mxu0 0
  %2484 = vmatpush2.bf16.msra.mxu0 0
  %2485 = vmatprep.mubr.bf16.mxu0 0
  %2486 = vmatmul.mubr.bf16.gmra.mxu0 %v1191
  %v2487 = vpop.f32.mrf.mxu0
  %v2488 = vadd.f32 %v2400, %v2487
  %v2489 = vpop.f32.mrf.mxu0
  %v2490 = vpop.f32.mrf.mxu0
  %v2491 = vpop.f32.mrf.mxu0
  %2492 = vdwg.mxu0
  %v2493 = vld [vmem:[%s10] sm:$0xff]
  %v2494 = vpack.c.bf16 %v2493, %v2493
  %v2495 = vld [vmem:[%s11] sm:$0xf]
  %v2496 = vld [vmem:[%s11 + $0x4] sm:$0xf]
  %v2497 = vld [vmem:[%s11 + $0x8] sm:$0xf]
  %v2498 = vld [vmem:[%s11 + $0xc] sm:$0xf]
  %v2499 = vld [vmem:[%s11 + $0x10] sm:$0xf]
  %v2500 = vld [vmem:[%s11 + $0x14] sm:$0xf]
  %v2501 = vld [vmem:[%s11 + $0x18] sm:$0xf]
  %v2502 = vld [vmem:[%s11 + $0x1c] sm:$0xf]
  %v2503 = vld [vmem:[%s14] sm:$0x1]
  %v2505 = vlaneseq
  %v2506 = vshrl.u32 %v2505, 7
  %v2507 = vsub.s32 0, %v2506
  %v2508 = vrot.slane %v2503, %v2507
  %v2518 = vunpack.c.l.b16 %v2495
  %v2519 = vunpack.c.l.b16 %v2496
  %v2520 = vunpack.c.l.b16 %v2497
  %v2521 = vunpack.c.l.b16 %v2498
  %v2522 = vunpack.c.l.b16 %v2499
  %v2523 = vunpack.c.l.b16 %v2500
  %v2524 = vunpack.c.l.b16 %v2501
  %v2525 = vunpack.c.l.b16 %v2502
  %v2526 = vpack.c.b16 %v2519, %v2518
  %v2527 = vpack.c.b16 %v2521, %v2520
  %v2528 = vpack.c.b16 %v2523, %v2522
  %v2529 = vpack.c.b16 %v2525, %v2524
  %v2535 = vsel %vm107, %v2494, 0
  %2537 = vmatprep.subr.bf16.mxu0 0
  %2538 = vmatpush1.bf16.msra.mxu0 0
  %2539 = vmatprep.subr.bf16.mxu0 0
  %2540 = vmatpush1.bf16.msra.mxu0 0
  %2541 = vmatprep.subr.bf16.mxu0 0
  %2542 = vmatpush1.bf16.msra.mxu0 0
  %2543 = vmatprep.subr.bf16.mxu0 0
  %2544 = vmatpush1.bf16.msra.mxu0 0
  %2545 = vmatprep.subr.bf16.mxu0 0
  %2546 = vmatpush1.bf16.msra.mxu0 %v2529
  %2547 = vmatprep.subr.bf16.mxu0 0
  %2548 = vmatpush1.bf16.msra.mxu0 %v2528
  %2549 = vmatprep.subr.bf16.mxu0 0
  %2550 = vmatpush1.bf16.msra.mxu0 %v2527
  %2551 = vmatprep.subr.bf16.mxu0 0
  %2552 = vmatpush1.bf16.msra.mxu0 %v2526
  %2553 = vmatprep.subr.bf16.mxu0 0
  %2554 = vmatpush2.bf16.msra.mxu0 0
  %2555 = vmatprep.subr.bf16.mxu0 0
  %2556 = vmatpush2.bf16.msra.mxu0 0
  %2557 = vmatprep.subr.bf16.mxu0 0
  %2558 = vmatpush2.bf16.msra.mxu0 0
  %2559 = vmatprep.subr.bf16.mxu0 0
  %2560 = vmatpush2.bf16.msra.mxu0 0
  %2561 = vmatprep.subr.bf16.mxu0 0
  %2562 = vmatpush2.bf16.msra.mxu0 0
  %2563 = vmatprep.subr.bf16.mxu0 0
  %2564 = vmatpush2.bf16.msra.mxu0 0
  %2565 = vmatprep.subr.bf16.mxu0 0
  %2566 = vmatpush2.bf16.msra.mxu0 0
  %2567 = vmatprep.subr.bf16.mxu0 0
  %2568 = vmatpush2.bf16.msra.mxu0 0
  %2569 = vmatprep.mubr.bf16.mxu0 0
  %2570 = vmatmul.mubr.bf16.gmra.mxu0 %v2535
  %v2571 = vpop.f32.mrf.mxu0
  %v2572 = vadd.f32 %v2508, %v2571
  %v2573 = vpop.f32.mrf.mxu0
  %v2574 = vpop.f32.mrf.mxu0
  %v2575 = vpop.f32.mrf.mxu0
  %2576 = vdwg.mxu0
  %v2577 = vld [vmem:[%s12] sm:$0xf]
  %v2578 = vld [vmem:[%s12 + $0x1c] sm:$0xf]
  %v2579 = vld [vmem:[%s12 + $0x38] sm:$0xf]
  %v2580 = vld [vmem:[%s12 + $0x54] sm:$0xf]
  %v2581 = vld [vmem:[%s12 + $0x70] sm:$0xf]
  %v2582 = vld [vmem:[%s12 + $0x8c] sm:$0xf]
  %v2583 = vld [vmem:[%s12 + $0xa8] sm:$0xf]
  %v2584 = vld [vmem:[%s12 + $0xc4] sm:$0xf]
  %v2585 = vld [vmem:[%s12 + $0xe0] sm:$0xf]
  %v2586 = vld [vmem:[%s12 + $0xfc] sm:$0xf]
  %v2587 = vld [vmem:[%s12 + $0x118] sm:$0xf]
  %v2588 = vld [vmem:[%s12 + $0x134] sm:$0xf]
  %v2589 = vld [vmem:[%s12 + $0x150] sm:$0xf]
  %v2590 = vld [vmem:[%s12 + $0x16c] sm:$0xf]
  %v2591 = vld [vmem:[%s12 + $0x188] sm:$0xf]
  %v2592 = vld [vmem:[%s12 + $0x1a4] sm:$0xf]
  %v2593 = vpack.c.bf16 %v2572, %v2572
  %v2610 = vunpack.c.l.b16 %v2577
  %v2611 = vunpack.c.l.b16 %v2578
  %v2612 = vunpack.c.l.b16 %v2579
  %v2613 = vunpack.c.l.b16 %v2580
  %v2614 = vunpack.c.l.b16 %v2581
  %v2615 = vunpack.c.l.b16 %v2582
  %v2616 = vunpack.c.l.b16 %v2583
  %v2617 = vunpack.c.l.b16 %v2584
  %v2618 = vunpack.c.l.b16 %v2585
  %v2619 = vunpack.c.l.b16 %v2586
  %v2620 = vunpack.c.l.b16 %v2587
  %v2621 = vunpack.c.l.b16 %v2588
  %v2622 = vunpack.c.l.b16 %v2589
  %v2623 = vunpack.c.l.b16 %v2590
  %v2624 = vunpack.c.l.b16 %v2591
  %v2625 = vunpack.c.l.b16 %v2592
  %v2626 = vpack.c.b16 %v2611, %v2610
  %v2627 = vpack.c.b16 %v2613, %v2612
  %v2628 = vpack.c.b16 %v2615, %v2614
  %v2629 = vpack.c.b16 %v2617, %v2616
  %v2630 = vpack.c.b16 %v2619, %v2618
  %v2631 = vpack.c.b16 %v2621, %v2620
  %v2632 = vpack.c.b16 %v2623, %v2622
  %v2633 = vpack.c.b16 %v2625, %v2624
  %2642 = vmatprep.subr.bf16.mxu0 0
  %2643 = vmatpush1.bf16.msra.mxu0 %v2633
  %2644 = vmatprep.subr.bf16.mxu0 0
  %2645 = vmatpush1.bf16.msra.mxu0 %v2632
  %2646 = vmatprep.subr.bf16.mxu0 0
  %2647 = vmatpush1.bf16.msra.mxu0 %v2631
  %2648 = vmatprep.subr.bf16.mxu0 0
  %2649 = vmatpush1.bf16.msra.mxu0 %v2630
  %2650 = vmatprep.subr.bf16.mxu0 0
  %2651 = vmatpush1.bf16.msra.mxu0 %v2629
  %2652 = vmatprep.subr.bf16.mxu0 0
  %2653 = vmatpush1.bf16.msra.mxu0 %v2628
  %2654 = vmatprep.subr.bf16.mxu0 0
  %2655 = vmatpush1.bf16.msra.mxu0 %v2627
  %2656 = vmatprep.subr.bf16.mxu0 0
  %2657 = vmatpush1.bf16.msra.mxu0 %v2626
  %2658 = vmatprep.subr.bf16.mxu0 0
  %2659 = vmatpush2.bf16.msra.mxu0 0
  %2660 = vmatprep.subr.bf16.mxu0 0
  %2661 = vmatpush2.bf16.msra.mxu0 0
  %2662 = vmatprep.subr.bf16.mxu0 0
  %2663 = vmatpush2.bf16.msra.mxu0 0
  %2664 = vmatprep.subr.bf16.mxu0 0
  %2665 = vmatpush2.bf16.msra.mxu0 0
  %2666 = vmatprep.subr.bf16.mxu0 0
  %2667 = vmatpush2.bf16.msra.mxu0 0
  %2668 = vmatprep.subr.bf16.mxu0 0
  %2669 = vmatpush2.bf16.msra.mxu0 0
  %2670 = vmatprep.subr.bf16.mxu0 0
  %2671 = vmatpush2.bf16.msra.mxu0 0
  %2672 = vmatprep.subr.bf16.mxu0 0
  %2673 = vmatpush2.bf16.msra.mxu0 0
  %2674 = vmatprep.mubr.bf16.mxu0 0
  %2675 = vmatmul.mubr.bf16.gmra.mxu0 %v2593
  %v2676 = vpop.f32.mrf.mxu0
  %v2677 = vadd.f32 0.0, %v2676
  %v2678 = vpop.f32.mrf.mxu0
  %v2679 = vpop.f32.mrf.mxu0
  %v2680 = vpop.f32.mrf.mxu0
  %2681 = vdwg.mxu0
  %v2682 = vsub.f32 %v2572, %v2677
  %v2683 = vmul.f32 %v2682, %v2682
  %v2684 = vpack.c.bf16 %v2683, %v2683
  %2685 = vmatprep.subr.bf16.mxu0 0
  %2686 = vmatpush1.bf16.msra.mxu0 %v2633
  %2687 = vmatprep.subr.bf16.mxu0 0
  %2688 = vmatpush1.bf16.msra.mxu0 %v2632
  %2689 = vmatprep.subr.bf16.mxu0 0
  %2690 = vmatpush1.bf16.msra.mxu0 %v2631
  %2691 = vmatprep.subr.bf16.mxu0 0
  %2692 = vmatpush1.bf16.msra.mxu0 %v2630
  %2693 = vmatprep.subr.bf16.mxu0 0
  %2694 = vmatpush1.bf16.msra.mxu0 %v2629
  %2695 = vmatprep.subr.bf16.mxu0 0
  %2696 = vmatpush1.bf16.msra.mxu0 %v2628
  %2697 = vmatprep.subr.bf16.mxu0 0
  %2698 = vmatpush1.bf16.msra.mxu0 %v2627
  %2699 = vmatprep.subr.bf16.mxu0 0
  %2700 = vmatpush1.bf16.msra.mxu0 %v2626
  %2701 = vmatprep.subr.bf16.mxu0 0
  %2702 = vmatpush2.bf16.msra.mxu0 0
  %2703 = vmatprep.subr.bf16.mxu0 0
  %2704 = vmatpush2.bf16.msra.mxu0 0
  %2705 = vmatprep.subr.bf16.mxu0 0
  %2706 = vmatpush2.bf16.msra.mxu0 0
  %2707 = vmatprep.subr.bf16.mxu0 0
  %2708 = vmatpush2.bf16.msra.mxu0 0
  %2709 = vmatprep.subr.bf16.mxu0 0
  %2710 = vmatpush2.bf16.msra.mxu0 0
  %2711 = vmatprep.subr.bf16.mxu0 0
  %2712 = vmatpush2.bf16.msra.mxu0 0
  %2713 = vmatprep.subr.bf16.mxu0 0
  %2714 = vmatpush2.bf16.msra.mxu0 0
  %2715 = vmatprep.subr.bf16.mxu0 0
  %2716 = vmatpush2.bf16.msra.mxu0 0
  %2717 = vmatprep.mubr.bf16.mxu0 0
  %2718 = vmatmul.mubr.bf16.gmra.mxu0 %v2684
  %v2719 = vpop.f32.mrf.mxu0
  %v2720 = vadd.f32 1e-05, %v2719
  %v2721 = vpop.f32.mrf.mxu0
  %v2722 = vpop.f32.mrf.mxu0
  %v2723 = vpop.f32.mrf.mxu0
  %2724 = vdwg.mxu0
  %v2725 = vrsqrt.pop %v2720
  %v2726 = vmul.f32 %v2682, %v2725
  %v2727 = vld [vmem:[%s14 + $0x1] sm:$0x1]
  %v2729 = vlaneseq
  %v2730 = vshrl.u32 %v2729, 7
  %v2731 = vsub.s32 0, %v2730
  %v2732 = vrot.slane %v2727, %v2731
  %v2734 = vmul.f32 %v2726, %v2732
  %v2735 = vld [vmem:[%s14 + $0x2] sm:$0x1]
  %v2737 = vlaneseq
  %v2738 = vshrl.u32 %v2737, 7
  %v2739 = vsub.s32 0, %v2738
  %v2740 = vrot.slane %v2735, %v2739
  %v2742 = vadd.f32 %v2734, %v2740
  %v2743 = vld [vmem:[%s12 + $0x8] sm:$0xff]
  %v2744 = vld [vmem:[%s12 + $0x24] sm:$0xff]
  %v2745 = vld [vmem:[%s12 + $0x40] sm:$0xff]
  %v2746 = vld [vmem:[%s12 + $0x5c] sm:$0xff]
  %v2747 = vld [vmem:[%s12 + $0x78] sm:$0xff]
  %v2748 = vld [vmem:[%s12 + $0x94] sm:$0xff]
  %v2749 = vld [vmem:[%s12 + $0xb0] sm:$0xff]
  %v2750 = vld [vmem:[%s12 + $0xcc] sm:$0xff]
  %v2751 = vld [vmem:[%s12 + $0xe8] sm:$0xff]
  %v2752 = vld [vmem:[%s12 + $0x104] sm:$0xff]
  %v2753 = vld [vmem:[%s12 + $0x120] sm:$0xff]
  %v2754 = vld [vmem:[%s12 + $0x13c] sm:$0xff]
  %v2755 = vld [vmem:[%s12 + $0x158] sm:$0xff]
  %v2756 = vld [vmem:[%s12 + $0x174] sm:$0xff]
  %v2757 = vld [vmem:[%s12 + $0x190] sm:$0xff]
  %v2758 = vld [vmem:[%s12 + $0x1ac] sm:$0xff]
  %v2759 = vpack.c.bf16 %v2742, %v2742
  %v2760 = vld [vmem:[%s14 + $0x3] sm:$0x3]
  %v2762 = vlaneseq
  %v2763 = vshrl.u32 %v2762, 7
  %v2764 = vsub.s32 0, %v2763
  %v2765 = vrot.slane %v2760, %v2764
  %v2766 = vlaneseq
  %v2767 = vshrl.u32 %v2766, 7
  %v2768 = vsub.s32 1, %v2767
  %v2769 = vrot.slane %v2760, %v2768
  %v2788 = vunpack.c.l.b16 %v2743
  %v2789 = vunpack.c.h.b16 %v2743
  %v2790 = vunpack.c.l.b16 %v2744
  %v2791 = vunpack.c.h.b16 %v2744
  %v2792 = vunpack.c.l.b16 %v2745
  %v2793 = vunpack.c.h.b16 %v2745
  %v2794 = vunpack.c.l.b16 %v2746
  %v2795 = vunpack.c.h.b16 %v2746
  %v2796 = vunpack.c.l.b16 %v2747
  %v2797 = vunpack.c.h.b16 %v2747
  %v2798 = vunpack.c.l.b16 %v2748
  %v2799 = vunpack.c.h.b16 %v2748
  %v2800 = vunpack.c.l.b16 %v2749
  %v2801 = vunpack.c.h.b16 %v2749
  %v2802 = vunpack.c.l.b16 %v2750
  %v2803 = vunpack.c.h.b16 %v2750
  %v2804 = vunpack.c.l.b16 %v2751
  %v2805 = vunpack.c.h.b16 %v2751
  %v2806 = vunpack.c.l.b16 %v2752
  %v2807 = vunpack.c.h.b16 %v2752
  %v2808 = vunpack.c.l.b16 %v2753
  %v2809 = vunpack.c.h.b16 %v2753
  %v2810 = vunpack.c.l.b16 %v2754
  %v2811 = vunpack.c.h.b16 %v2754
  %v2812 = vunpack.c.l.b16 %v2755
  %v2813 = vunpack.c.h.b16 %v2755
  %v2814 = vunpack.c.l.b16 %v2756
  %v2815 = vunpack.c.h.b16 %v2756
  %v2816 = vunpack.c.l.b16 %v2757
  %v2817 = vunpack.c.h.b16 %v2757
  %v2818 = vunpack.c.l.b16 %v2758
  %v2819 = vunpack.c.h.b16 %v2758
  %v2820 = vpack.c.b16 %v2790, %v2788
  %v2821 = vpack.c.b16 %v2791, %v2789
  %v2822 = vpack.c.b16 %v2794, %v2792
  %v2823 = vpack.c.b16 %v2795, %v2793
  %v2824 = vpack.c.b16 %v2798, %v2796
  %v2825 = vpack.c.b16 %v2799, %v2797
  %v2826 = vpack.c.b16 %v2802, %v2800
  %v2827 = vpack.c.b16 %v2803, %v2801
  %v2828 = vpack.c.b16 %v2806, %v2804
  %v2829 = vpack.c.b16 %v2807, %v2805
  %v2830 = vpack.c.b16 %v2810, %v2808
  %v2831 = vpack.c.b16 %v2811, %v2809
  %v2832 = vpack.c.b16 %v2814, %v2812
  %v2833 = vpack.c.b16 %v2815, %v2813
  %v2834 = vpack.c.b16 %v2818, %v2816
  %v2835 = vpack.c.b16 %v2819, %v2817
  %2852 = vmatprep.subr.bf16.mxu0 %v2835
  %2853 = vmatpush1.bf16.msra.mxu0 %v2834
  %2854 = vmatprep.subr.bf16.mxu0 %v2833
  %2855 = vmatpush1.bf16.msra.mxu0 %v2832
  %2856 = vmatprep.subr.bf16.mxu0 %v2831
  %2857 = vmatpush1.bf16.msra.mxu0 %v2830
  %2858 = vmatprep.subr.bf16.mxu0 %v2829
  %2859 = vmatpush1.bf16.msra.mxu0 %v2828
  %2860 = vmatprep.subr.bf16.mxu0 %v2827
  %2861 = vmatpush1.bf16.msra.mxu0 %v2826
  %2862 = vmatprep.subr.bf16.mxu0 %v2825
  %2863 = vmatpush1.bf16.msra.mxu0 %v2824
  %2864 = vmatprep.subr.bf16.mxu0 %v2823
  %2865 = vmatpush1.bf16.msra.mxu0 %v2822
  %2866 = vmatprep.subr.bf16.mxu0 %v2821
  %2867 = vmatpush1.bf16.msra.mxu0 %v2820
  %2868 = vmatprep.subr.bf16.mxu0 0
  %2869 = vmatpush2.bf16.msra.mxu0 0
  %2870 = vmatprep.subr.bf16.mxu0 0
  %2871 = vmatpush2.bf16.msra.mxu0 0
  %2872 = vmatprep.subr.bf16.mxu0 0
  %2873 = vmatpush2.bf16.msra.mxu0 0
  %2874 = vmatprep.subr.bf16.mxu0 0
  %2875 = vmatpush2.bf16.msra.mxu0 0
  %2876 = vmatprep.subr.bf16.mxu0 0
  %2877 = vmatpush2.bf16.msra.mxu0 0
  %2878 = vmatprep.subr.bf16.mxu0 0
  %2879 = vmatpush2.bf16.msra.mxu0 0
  %2880 = vmatprep.subr.bf16.mxu0 0
  %2881 = vmatpush2.bf16.msra.mxu0 0
  %2882 = vmatprep.subr.bf16.mxu0 0
  %2883 = vmatpush2.bf16.msra.mxu0 0
  %2884 = vmatprep.mubr.bf16.mxu0 0
  %2885 = vmatmul.mubr.bf16.gmra.mxu0 %v2759
  %v2886 = vpop.f32.mrf.mxu0
  %v2887 = vadd.f32 %v2765, %v2886
  %v2888 = vpop.f32.mrf.mxu0
  %v2889 = vadd.f32 %v2769, %v2888
  %v2890 = vpop.f32.mrf.mxu0
  %v2891 = vpop.f32.mrf.mxu0
  %2892 = vdwg.mxu0
  %v2893 = vmul.f32 %v2887, 0.5
  %v2894 = vmul.f32 %v2889, 0.5
  %v2895 = vmul.f32 %v2887, 0.044715
  %v2896 = vmul.f32 %v2889, 0.044715
  %v2897 = vmul.f32 %v2895, %v2887
  %v2898 = vmul.f32 %v2896, %v2889
  %v2899 = vmul.f32 %v2897, %v2887
  %v2900 = vmul.f32 %v2898, %v2889
  %v2901 = vadd.f32 %v2887, %v2899
  %v2902 = vadd.f32 %v2889, %v2900
  %v2903 = vmul.f32 %v2901, 0.7978846
  %v2904 = vmul.f32 %v2902, 0.7978846
  %v2905 = vtanh.pop %v2903
  %v2906 = vtanh.pop %v2904
  %v2907 = vadd.f32 %v2905, 1.0
  %v2908 = vadd.f32 %v2906, 1.0
  %v2909 = vmul.f32 %v2893, %v2907
  %v2910 = vmul.f32 %v2894, %v2908
  %v2911 = vld [vmem:[%s13] sm:$0xf]
  %v2912 = vld [vmem:[%s13 + $0x8] sm:$0xf]
  %v2913 = vld [vmem:[%s13 + $0x10] sm:$0xf]
  %v2914 = vld [vmem:[%s13 + $0x18] sm:$0xf]
  %v2915 = vld [vmem:[%s13 + $0x20] sm:$0xf]
  %v2916 = vld [vmem:[%s13 + $0x28] sm:$0xf]
  %v2917 = vld [vmem:[%s13 + $0x30] sm:$0xf]
  %v2918 = vld [vmem:[%s13 + $0x38] sm:$0xf]
  %v2919 = vld [vmem:[%s13 + $0x40] sm:$0xf]
  %v2920 = vld [vmem:[%s13 + $0x48] sm:$0xf]
  %v2921 = vld [vmem:[%s13 + $0x50] sm:$0xf]
  %v2922 = vld [vmem:[%s13 + $0x58] sm:$0xf]
  %v2923 = vld [vmem:[%s13 + $0x60] sm:$0xf]
  %v2924 = vld [vmem:[%s13 + $0x68] sm:$0xf]
  %v2925 = vld [vmem:[%s13 + $0x70] sm:$0xf]
  %v2926 = vld [vmem:[%s13 + $0x78] sm:$0xf]
  %v2927 = vld [vmem:[%s13 + $0x80] sm:$0xf]
  %v2928 = vld [vmem:[%s13 + $0x88] sm:$0xf]
  %v2929 = vld [vmem:[%s13 + $0x90] sm:$0xf]
  %v2930 = vld [vmem:[%s13 + $0x98] sm:$0xf]
  %v2931 = vld [vmem:[%s13 + $0xa0] sm:$0xf]
  %v2932 = vld [vmem:[%s13 + $0xa8] sm:$0xf]
  %v2933 = vld [vmem:[%s13 + $0xb0] sm:$0xf]
  %v2934 = vld [vmem:[%s13 + $0xb8] sm:$0xf]
  %v2935 = vld [vmem:[%s13 + $0xc0] sm:$0xf]
  %v2936 = vld [vmem:[%s13 + $0xc8] sm:$0xf]
  %v2937 = vld [vmem:[%s13 + $0xd0] sm:$0xf]
  %v2938 = vld [vmem:[%s13 + $0xd8] sm:$0xf]
  %v2939 = vld [vmem:[%s13 + $0xe0] sm:$0xf]
  %v2940 = vld [vmem:[%s13 + $0xe8] sm:$0xf]
  %v2941 = vld [vmem:[%s13 + $0xf0] sm:$0xf]
  %v2942 = vld [vmem:[%s13 + $0xf8] sm:$0xf]
  %v2943 = vpack.c.bf16 %v2909, %v2909
  %v2944 = vpack.c.bf16 %v2910, %v2910
  %v2945 = vld [vmem:[%s14 + $0x5] sm:$0x1]
  %v2947 = vlaneseq
  %v2948 = vshrl.u32 %v2947, 7
  %v2949 = vsub.s32 0, %v2948
  %v2950 = vrot.slane %v2945, %v2949
  %v2984 = vunpack.c.l.b16 %v2911
  %v2985 = vunpack.c.l.b16 %v2912
  %v2986 = vunpack.c.l.b16 %v2913
  %v2987 = vunpack.c.l.b16 %v2914
  %v2988 = vunpack.c.l.b16 %v2915
  %v2989 = vunpack.c.l.b16 %v2916
  %v2990 = vunpack.c.l.b16 %v2917
  %v2991 = vunpack.c.l.b16 %v2918
  %v2992 = vunpack.c.l.b16 %v2919
  %v2993 = vunpack.c.l.b16 %v2920
  %v2994 = vunpack.c.l.b16 %v2921
  %v2995 = vunpack.c.l.b16 %v2922
  %v2996 = vunpack.c.l.b16 %v2923
  %v2997 = vunpack.c.l.b16 %v2924
  %v2998 = vunpack.c.l.b16 %v2925
  %v2999 = vunpack.c.l.b16 %v2926
  %v3000 = vunpack.c.l.b16 %v2927
  %v3001 = vunpack.c.l.b16 %v2928
  %v3002 = vunpack.c.l.b16 %v2929
  %v3003 = vunpack.c.l.b16 %v2930
  %v3004 = vunpack.c.l.b16 %v2931
  %v3005 = vunpack.c.l.b16 %v2932
  %v3006 = vunpack.c.l.b16 %v2933
  %v3007 = vunpack.c.l.b16 %v2934
  %v3008 = vunpack.c.l.b16 %v2935
  %v3009 = vunpack.c.l.b16 %v2936
  %v3010 = vunpack.c.l.b16 %v2937
  %v3011 = vunpack.c.l.b16 %v2938
  %v3012 = vunpack.c.l.b16 %v2939
  %v3013 = vunpack.c.l.b16 %v2940
  %v3014 = vunpack.c.l.b16 %v2941
  %v3015 = vunpack.c.l.b16 %v2942
  %v3016 = vpack.c.b16 %v2985, %v2984
  %v3017 = vpack.c.b16 %v2987, %v2986
  %v3018 = vpack.c.b16 %v2989, %v2988
  %v3019 = vpack.c.b16 %v2991, %v2990
  %v3020 = vpack.c.b16 %v2993, %v2992
  %v3021 = vpack.c.b16 %v2995, %v2994
  %v3022 = vpack.c.b16 %v2997, %v2996
  %v3023 = vpack.c.b16 %v2999, %v2998
  %v3024 = vpack.c.b16 %v3001, %v3000
  %v3025 = vpack.c.b16 %v3003, %v3002
  %v3026 = vpack.c.b16 %v3005, %v3004
  %v3027 = vpack.c.b16 %v3007, %v3006
  %v3028 = vpack.c.b16 %v3009, %v3008
  %v3029 = vpack.c.b16 %v3011, %v3010
  %v3030 = vpack.c.b16 %v3013, %v3012
  %v3031 = vpack.c.b16 %v3015, %v3014
  %3048 = vmatprep.subr.bf16.mxu0 0
  %3049 = vmatpush1.bf16.msra.mxu0 %v3023
  %3050 = vmatprep.subr.bf16.mxu0 0
  %3051 = vmatpush1.bf16.msra.mxu0 %v3022
  %3052 = vmatprep.subr.bf16.mxu0 0
  %3053 = vmatpush1.bf16.msra.mxu0 %v3021
  %3054 = vmatprep.subr.bf16.mxu0 0
  %3055 = vmatpush1.bf16.msra.mxu0 %v3020
  %3056 = vmatprep.subr.bf16.mxu0 0
  %3057 = vmatpush1.bf16.msra.mxu0 %v3019
  %3058 = vmatprep.subr.bf16.mxu0 0
  %3059 = vmatpush1.bf16.msra.mxu0 %v3018
  %3060 = vmatprep.subr.bf16.mxu0 0
  %3061 = vmatpush1.bf16.msra.mxu0 %v3017
  %3062 = vmatprep.subr.bf16.mxu0 0
  %3063 = vmatpush1.bf16.msra.mxu0 %v3016
  %3064 = vmatprep.subr.bf16.mxu0 0
  %3065 = vmatpush2.bf16.msra.mxu0 %v3031
  %3066 = vmatprep.subr.bf16.mxu0 0
  %3067 = vmatpush2.bf16.msra.mxu0 %v3030
  %3068 = vmatprep.subr.bf16.mxu0 0
  %3069 = vmatpush2.bf16.msra.mxu0 %v3029
  %3070 = vmatprep.subr.bf16.mxu0 0
  %3071 = vmatpush2.bf16.msra.mxu0 %v3028
  %3072 = vmatprep.subr.bf16.mxu0 0
  %3073 = vmatpush2.bf16.msra.mxu0 %v3027
  %3074 = vmatprep.subr.bf16.mxu0 0
  %3075 = vmatpush2.bf16.msra.mxu0 %v3026
  %3076 = vmatprep.subr.bf16.mxu0 0
  %3077 = vmatpush2.bf16.msra.mxu0 %v3025
  %3078 = vmatprep.subr.bf16.mxu0 0
  %3079 = vmatpush2.bf16.msra.mxu0 %v3024
  %3080 = vmatprep.mubr.bf16.mxu0 %v2944
  %3081 = vmatmul.mubr.bf16.gmra.mxu0 %v2943
  %v3082 = vpop.f32.mrf.mxu0
  %v3083 = vadd.f32 %v2950, %v3082
  %v3084 = vpop.f32.mrf.mxu0
  %v3085 = vpop.f32.mrf.mxu0
  %v3086 = vpop.f32.mrf.mxu0
  %3087 = vdwg.mxu0
  %v3088 = vadd.f32 %v3083, %v2572
  %v3089 = vld [vmem:[%s12 + $0x4] sm:$0xf]
  %v3090 = vld [vmem:[%s12 + $0x20] sm:$0xf]
  %v3091 = vld [vmem:[%s12 + $0x3c] sm:$0xf]
  %v3092 = vld [vmem:[%s12 + $0x58] sm:$0xf]
  %v3093 = vld [vmem:[%s12 + $0x74] sm:$0xf]
  %v3094 = vld [vmem:[%s12 + $0x90] sm:$0xf]
  %v3095 = vld [vmem:[%s12 + $0xac] sm:$0xf]
  %v3096 = vld [vmem:[%s12 + $0xc8] sm:$0xf]
  %v3097 = vld [vmem:[%s12 + $0xe4] sm:$0xf]
  %v3098 = vld [vmem:[%s12 + $0x100] sm:$0xf]
  %v3099 = vld [vmem:[%s12 + $0x11c] sm:$0xf]
  %v3100 = vld [vmem:[%s12 + $0x138] sm:$0xf]
  %v3101 = vld [vmem:[%s12 + $0x154] sm:$0xf]
  %v3102 = vld [vmem:[%s12 + $0x170] sm:$0xf]
  %v3103 = vld [vmem:[%s12 + $0x18c] sm:$0xf]
  %v3104 = vld [vmem:[%s12 + $0x1a8] sm:$0xf]
  %v3105 = vpack.c.bf16 %v3088, %v3088
  %v3122 = vunpack.c.l.b16 %v3089
  %v3123 = vunpack.c.l.b16 %v3090
  %v3124 = vunpack.c.l.b16 %v3091
  %v3125 = vunpack.c.l.b16 %v3092
  %v3126 = vunpack.c.l.b16 %v3093
  %v3127 = vunpack.c.l.b16 %v3094
  %v3128 = vunpack.c.l.b16 %v3095
  %v3129 = vunpack.c.l.b16 %v3096
  %v3130 = vunpack.c.l.b16 %v3097
  %v3131 = vunpack.c.l.b16 %v3098
  %v3132 = vunpack.c.l.b16 %v3099
  %v3133 = vunpack.c.l.b16 %v3100
  %v3134 = vunpack.c.l.b16 %v3101
  %v3135 = vunpack.c.l.b16 %v3102
  %v3136 = vunpack.c.l.b16 %v3103
  %v3137 = vunpack.c.l.b16 %v3104
  %v3138 = vpack.c.b16 %v3123, %v3122
  %v3139 = vpack.c.b16 %v3125, %v3124
  %v3140 = vpack.c.b16 %v3127, %v3126
  %v3141 = vpack.c.b16 %v3129, %v3128
  %v3142 = vpack.c.b16 %v3131, %v3130
  %v3143 = vpack.c.b16 %v3133, %v3132
  %v3144 = vpack.c.b16 %v3135, %v3134
  %v3145 = vpack.c.b16 %v3137, %v3136
  %3154 = vmatprep.subr.bf16.mxu0 0
  %3155 = vmatpush1.bf16.msra.mxu0 %v3145
  %3156 = vmatprep.subr.bf16.mxu0 0
  %3157 = vmatpush1.bf16.msra.mxu0 %v3144
  %3158 = vmatprep.subr.bf16.mxu0 0
  %3159 = vmatpush1.bf16.msra.mxu0 %v3143
  %3160 = vmatprep.subr.bf16.mxu0 0
  %3161 = vmatpush1.bf16.msra.mxu0 %v3142
  %3162 = vmatprep.subr.bf16.mxu0 0
  %3163 = vmatpush1.bf16.msra.mxu0 %v3141
  %3164 = vmatprep.subr.bf16.mxu0 0
  %3165 = vmatpush1.bf16.msra.mxu0 %v3140
  %3166 = vmatprep.subr.bf16.mxu0 0
  %3167 = vmatpush1.bf16.msra.mxu0 %v3139
  %3168 = vmatprep.subr.bf16.mxu0 0
  %3169 = vmatpush1.bf16.msra.mxu0 %v3138
  %3170 = vmatprep.subr.bf16.mxu0 0
  %3171 = vmatpush2.bf16.msra.mxu0 0
  %3172 = vmatprep.subr.bf16.mxu0 0
  %3173 = vmatpush2.bf16.msra.mxu0 0
  %3174 = vmatprep.subr.bf16.mxu0 0
  %3175 = vmatpush2.bf16.msra.mxu0 0
  %3176 = vmatprep.subr.bf16.mxu0 0
  %3177 = vmatpush2.bf16.msra.mxu0 0
  %3178 = vmatprep.subr.bf16.mxu0 0
  %3179 = vmatpush2.bf16.msra.mxu0 0
  %3180 = vmatprep.subr.bf16.mxu0 0
  %3181 = vmatpush2.bf16.msra.mxu0 0
  %3182 = vmatprep.subr.bf16.mxu0 0
  %3183 = vmatpush2.bf16.msra.mxu0 0
  %3184 = vmatprep.subr.bf16.mxu0 0
  %3185 = vmatpush2.bf16.msra.mxu0 0
  %3186 = vmatprep.mubr.bf16.mxu0 0
  %3187 = vmatmul.mubr.bf16.gmra.mxu0 %v3105
  %v3188 = vpop.f32.mrf.mxu0
  %v3189 = vadd.f32 0.0, %v3188
  %v3190 = vpop.f32.mrf.mxu0
  %v3191 = vpop.f32.mrf.mxu0
  %v3192 = vpop.f32.mrf.mxu0
  %3193 = vdwg.mxu0
  %v3194 = vsub.f32 %v3088, %v3189
  %v3195 = vmul.f32 %v3194, %v3194
  %v3196 = vpack.c.bf16 %v3195, %v3195
  %3197 = vmatprep.subr.bf16.mxu0 0
  %3198 = vmatpush1.bf16.msra.mxu0 %v3145
  %3199 = vmatprep.subr.bf16.mxu0 0
  %3200 = vmatpush1.bf16.msra.mxu0 %v3144
  %3201 = vmatprep.subr.bf16.mxu0 0
  %3202 = vmatpush1.bf16.msra.mxu0 %v3143
  %3203 = vmatprep.subr.bf16.mxu0 0
  %3204 = vmatpush1.bf16.msra.mxu0 %v3142
  %3205 = vmatprep.subr.bf16.mxu0 0
  %3206 = vmatpush1.bf16.msra.mxu0 %v3141
  %3207 = vmatprep.subr.bf16.mxu0 0
  %3208 = vmatpush1.bf16.msra.mxu0 %v3140
  %3209 = vmatprep.subr.bf16.mxu0 0
  %3210 = vmatpush1.bf16.msra.mxu0 %v3139
  %3211 = vmatprep.subr.bf16.mxu0 0
  %3212 = vmatpush1.bf16.msra.mxu0 %v3138
  %3213 = vmatprep.subr.bf16.mxu0 0
  %3214 = vmatpush2.bf16.msra.mxu0 0
  %3215 = vmatprep.subr.bf16.mxu0 0
  %3216 = vmatpush2.bf16.msra.mxu0 0
  %3217 = vmatprep.subr.bf16.mxu0 0
  %3218 = vmatpush2.bf16.msra.mxu0 0
  %3219 = vmatprep.subr.bf16.mxu0 0
  %3220 = vmatpush2.bf16.msra.mxu0 0
  %3221 = vmatprep.subr.bf16.mxu0 0
  %3222 = vmatpush2.bf16.msra.mxu0 0
  %3223 = vmatprep.subr.bf16.mxu0 0
  %3224 = vmatpush2.bf16.msra.mxu0 0
  %3225 = vmatprep.subr.bf16.mxu0 0
  %3226 = vmatpush2.bf16.msra.mxu0 0
  %3227 = vmatprep.subr.bf16.mxu0 0
  %3228 = vmatpush2.bf16.msra.mxu0 0
  %3229 = vmatprep.mubr.bf16.mxu0 0
  %3230 = vmatmul.mubr.bf16.gmra.mxu0 %v3196
  %v3231 = vpop.f32.mrf.mxu0
  %v3232 = vadd.f32 1e-05, %v3231
  %v3233 = vpop.f32.mrf.mxu0
  %v3234 = vpop.f32.mrf.mxu0
  %v3235 = vpop.f32.mrf.mxu0
  %3236 = vdwg.mxu0
  %v3237 = vrsqrt.pop %v3232
  %v3238 = vmul.f32 %v3194, %v3237
  %v3239 = vld [vmem:[%s14 + $0x6] sm:$0x1]
  %v3241 = vlaneseq
  %v3242 = vshrl.u32 %v3241, 7
  %v3243 = vsub.s32 0, %v3242
  %v3244 = vrot.slane %v3239, %v3243
  %v3246 = vmul.f32 %v3238, %v3244
  %v3247 = vld [vmem:[%s14 + $0x7] sm:$0x1]
  %v3249 = vlaneseq
  %v3250 = vshrl.u32 %v3249, 7
  %v3251 = vsub.s32 0, %v3250
  %v3252 = vrot.slane %v3247, %v3251
  %v3254 = vadd.f32 %v3246, %v3252
  %v3255 = vld [vmem:[%s12 + $0x10] sm:$0xff]
  %v3256 = vld [vmem:[%s12 + $0x2c] sm:$0xff]
  %v3257 = vld [vmem:[%s12 + $0x48] sm:$0xff]
  %v3258 = vld [vmem:[%s12 + $0x64] sm:$0xff]
  %v3259 = vld [vmem:[%s12 + $0x80] sm:$0xff]
  %v3260 = vld [vmem:[%s12 + $0x9c] sm:$0xff]
  %v3261 = vld [vmem:[%s12 + $0xb8] sm:$0xff]
  %v3262 = vld [vmem:[%s12 + $0xd4] sm:$0xff]
  %v3263 = vld [vmem:[%s12 + $0xf0] sm:$0xff]
  %v3264 = vld [vmem:[%s12 + $0x10c] sm:$0xff]
  %v3265 = vld [vmem:[%s12 + $0x128] sm:$0xff]
  %v3266 = vld [vmem:[%s12 + $0x144] sm:$0xff]
  %v3267 = vld [vmem:[%s12 + $0x160] sm:$0xff]
  %v3268 = vld [vmem:[%s12 + $0x17c] sm:$0xff]
  %v3269 = vld [vmem:[%s12 + $0x198] sm:$0xff]
  %v3270 = vld [vmem:[%s12 + $0x1b4] sm:$0xff]
  %v3271 = vpack.c.bf16 %v3254, %v3254
  %v3272 = vld [vmem:[%s14 + $0x8] sm:$0x3]
  %v3274 = vlaneseq
  %v3275 = vshrl.u32 %v3274, 7
  %v3276 = vsub.s32 0, %v3275
  %v3277 = vrot.slane %v3272, %v3276
  %v3278 = vlaneseq
  %v3279 = vshrl.u32 %v3278, 7
  %v3280 = vsub.s32 1, %v3279
  %v3281 = vrot.slane %v3272, %v3280
  %v3300 = vunpack.c.l.b16 %v3255
  %v3301 = vunpack.c.h.b16 %v3255
  %v3302 = vunpack.c.l.b16 %v3256
  %v3303 = vunpack.c.h.b16 %v3256
  %v3304 = vunpack.c.l.b16 %v3257
  %v3305 = vunpack.c.h.b16 %v3257
  %v3306 = vunpack.c.l.b16 %v3258
  %v3307 = vunpack.c.h.b16 %v3258
  %v3308 = vunpack.c.l.b16 %v3259
  %v3309 = vunpack.c.h.b16 %v3259
  %v3310 = vunpack.c.l.b16 %v3260
  %v3311 = vunpack.c.h.b16 %v3260
  %v3312 = vunpack.c.l.b16 %v3261
  %v3313 = vunpack.c.h.b16 %v3261
  %v3314 = vunpack.c.l.b16 %v3262
  %v3315 = vunpack.c.h.b16 %v3262
  %v3316 = vunpack.c.l.b16 %v3263
  %v3317 = vunpack.c.h.b16 %v3263
  %v3318 = vunpack.c.l.b16 %v3264
  %v3319 = vunpack.c.h.b16 %v3264
  %v3320 = vunpack.c.l.b16 %v3265
  %v3321 = vunpack.c.h.b16 %v3265
  %v3322 = vunpack.c.l.b16 %v3266
  %v3323 = vunpack.c.h.b16 %v3266
  %v3324 = vunpack.c.l.b16 %v3267
  %v3325 = vunpack.c.h.b16 %v3267
  %v3326 = vunpack.c.l.b16 %v3268
  %v3327 = vunpack.c.h.b16 %v3268
  %v3328 = vunpack.c.l.b16 %v3269
  %v3329 = vunpack.c.h.b16 %v3269
  %v3330 = vunpack.c.l.b16 %v3270
  %v3331 = vunpack.c.h.b16 %v3270
  %v3332 = vpack.c.b16 %v3302, %v3300
  %v3333 = vpack.c.b16 %v3303, %v3301
  %v3334 = vpack.c.b16 %v3306, %v3304
  %v3335 = vpack.c.b16 %v3307, %v3305
  %v3336 = vpack.c.b16 %v3310, %v3308
  %v3337 = vpack.c.b16 %v3311, %v3309
  %v3338 = vpack.c.b16 %v3314, %v3312
  %v3339 = vpack.c.b16 %v3315, %v3313
  %v3340 = vpack.c.b16 %v3318, %v3316
  %v3341 = vpack.c.b16 %v3319, %v3317
  %v3342 = vpack.c.b16 %v3322, %v3320
  %v3343 = vpack.c.b16 %v3323, %v3321
  %v3344 = vpack.c.b16 %v3326, %v3324
  %v3345 = vpack.c.b16 %v3327, %v3325
  %v3346 = vpack.c.b16 %v3330, %v3328
  %v3347 = vpack.c.b16 %v3331, %v3329
  %3364 = vmatprep.subr.bf16.mxu0 %v3347
  %3365 = vmatpush1.bf16.msra.mxu0 %v3346
  %3366 = vmatprep.subr.bf16.mxu0 %v3345
  %3367 = vmatpush1.bf16.msra.mxu0 %v3344
  %3368 = vmatprep.subr.bf16.mxu0 %v3343
  %3369 = vmatpush1.bf16.msra.mxu0 %v3342
  %3370 = vmatprep.subr.bf16.mxu0 %v3341
  %3371 = vmatpush1.bf16.msra.mxu0 %v3340
  %3372 = vmatprep.subr.bf16.mxu0 %v3339
  %3373 = vmatpush1.bf16.msra.mxu0 %v3338
  %3374 = vmatprep.subr.bf16.mxu0 %v3337
  %3375 = vmatpush1.bf16.msra.mxu0 %v3336
  %3376 = vmatprep.subr.bf16.mxu0 %v3335
  %3377 = vmatpush1.bf16.msra.mxu0 %v3334
  %3378 = vmatprep.subr.bf16.mxu0 %v3333
  %3379 = vmatpush1.bf16.msra.mxu0 %v3332
  %3380 = vmatprep.subr.bf16.mxu0 0
  %3381 = vmatpush2.bf16.msra.mxu0 0
  %3382 = vmatprep.subr.bf16.mxu0 0
  %3383 = vmatpush2.bf16.msra.mxu0 0
  %3384 = vmatprep.subr.bf16.mxu0 0
  %3385 = vmatpush2.bf16.msra.mxu0 0
  %3386 = vmatprep.subr.bf16.mxu0 0
  %3387 = vmatpush2.bf16.msra.mxu0 0
  %3388 = vmatprep.subr.bf16.mxu0 0
  %3389 = vmatpush2.bf16.msra.mxu0 0
  %3390 = vmatprep.subr.bf16.mxu0 0
  %3391 = vmatpush2.bf16.msra.mxu0 0
  %3392 = vmatprep.subr.bf16.mxu0 0
  %3393 = vmatpush2.bf16.msra.mxu0 0
  %3394 = vmatprep.subr.bf16.mxu0 0
  %3395 = vmatpush2.bf16.msra.mxu0 0
  %3396 = vmatprep.mubr.bf16.mxu0 0
  %3397 = vmatmul.mubr.bf16.gmra.mxu0 %v3271
  %v3398 = vpop.f32.mrf.mxu0
  %v3399 = vadd.f32 %v3277, %v3398
  %v3400 = vpop.f32.mrf.mxu0
  %v3401 = vadd.f32 %v3281, %v3400
  %v3402 = vpop.f32.mrf.mxu0
  %v3403 = vpop.f32.mrf.mxu0
  %3404 = vdwg.mxu0
  %v3405 = vmul.f32 %v3399, 0.5
  %v3406 = vmul.f32 %v3401, 0.5
  %v3407 = vmul.f32 %v3399, 0.044715
  %v3408 = vmul.f32 %v3401, 0.044715
  %v3409 = vmul.f32 %v3407, %v3399
  %v3410 = vmul.f32 %v3408, %v3401
  %v3411 = vmul.f32 %v3409, %v3399
  %v3412 = vmul.f32 %v3410, %v3401
  %v3413 = vadd.f32 %v3399, %v3411
  %v3414 = vadd.f32 %v3401, %v3412
  %v3415 = vmul.f32 %v3413, 0.7978846
  %v3416 = vmul.f32 %v3414, 0.7978846
  %v3417 = vtanh.pop %v3415
  %v3418 = vtanh.pop %v3416
  %v3419 = vadd.f32 %v3417, 1.0
  %v3420 = vadd.f32 %v3418, 1.0
  %v3421 = vmul.f32 %v3405, %v3419
  %v3422 = vmul.f32 %v3406, %v3420
  %v3423 = vld [vmem:[%s13 + $0x4] sm:$0xf]
  %v3424 = vld [vmem:[%s13 + $0xc] sm:$0xf]
  %v3425 = vld [vmem:[%s13 + $0x14] sm:$0xf]
  %v3426 = vld [vmem:[%s13 + $0x1c] sm:$0xf]
  %v3427 = vld [vmem:[%s13 + $0x24] sm:$0xf]
  %v3428 = vld [vmem:[%s13 + $0x2c] sm:$0xf]
  %v3429 = vld [vmem:[%s13 + $0x34] sm:$0xf]
  %v3430 = vld [vmem:[%s13 + $0x3c] sm:$0xf]
  %v3431 = vld [vmem:[%s13 + $0x44] sm:$0xf]
  %v3432 = vld [vmem:[%s13 + $0x4c] sm:$0xf]
  %v3433 = vld [vmem:[%s13 + $0x54] sm:$0xf]
  %v3434 = vld [vmem:[%s13 + $0x5c] sm:$0xf]
  %v3435 = vld [vmem:[%s13 + $0x64] sm:$0xf]
  %v3436 = vld [vmem:[%s13 + $0x6c] sm:$0xf]
  %v3437 = vld [vmem:[%s13 + $0x74] sm:$0xf]
  %v3438 = vld [vmem:[%s13 + $0x7c] sm:$0xf]
  %v3439 = vld [vmem:[%s13 + $0x84] sm:$0xf]
  %v3440 = vld [vmem:[%s13 + $0x8c] sm:$0xf]
  %v3441 = vld [vmem:[%s13 + $0x94] sm:$0xf]
  %v3442 = vld [vmem:[%s13 + $0x9c] sm:$0xf]
  %v3443 = vld [vmem:[%s13 + $0xa4] sm:$0xf]
  %v3444 = vld [vmem:[%s13 + $0xac] sm:$0xf]
  %v3445 = vld [vmem:[%s13 + $0xb4] sm:$0xf]
  %v3446 = vld [vmem:[%s13 + $0xbc] sm:$0xf]
  %v3447 = vld [vmem:[%s13 + $0xc4] sm:$0xf]
  %v3448 = vld [vmem:[%s13 + $0xcc] sm:$0xf]
  %v3449 = vld [vmem:[%s13 + $0xd4] sm:$0xf]
  %v3450 = vld [vmem:[%s13 + $0xdc] sm:$0xf]
  %v3451 = vld [vmem:[%s13 + $0xe4] sm:$0xf]
  %v3452 = vld [vmem:[%s13 + $0xec] sm:$0xf]
  %v3453 = vld [vmem:[%s13 + $0xf4] sm:$0xf]
  %v3454 = vld [vmem:[%s13 + $0xfc] sm:$0xf]
  %v3455 = vpack.c.bf16 %v3421, %v3421
  %v3456 = vpack.c.bf16 %v3422, %v3422
  %v3457 = vld [vmem:[%s14 + $0xa] sm:$0x1]
  %v3459 = vlaneseq
  %v3460 = vshrl.u32 %v3459, 7
  %v3461 = vsub.s32 0, %v3460
  %v3462 = vrot.slane %v3457, %v3461
  %v3496 = vunpack.c.l.b16 %v3423
  %v3497 = vunpack.c.l.b16 %v3424
  %v3498 = vunpack.c.l.b16 %v3425
  %v3499 = vunpack.c.l.b16 %v3426
  %v3500 = vunpack.c.l.b16 %v3427
  %v3501 = vunpack.c.l.b16 %v3428
  %v3502 = vunpack.c.l.b16 %v3429
  %v3503 = vunpack.c.l.b16 %v3430
  %v3504 = vunpack.c.l.b16 %v3431
  %v3505 = vunpack.c.l.b16 %v3432
  %v3506 = vunpack.c.l.b16 %v3433
  %v3507 = vunpack.c.l.b16 %v3434
  %v3508 = vunpack.c.l.b16 %v3435
  %v3509 = vunpack.c.l.b16 %v3436
  %v3510 = vunpack.c.l.b16 %v3437
  %v3511 = vunpack.c.l.b16 %v3438
  %v3512 = vunpack.c.l.b16 %v3439
  %v3513 = vunpack.c.l.b16 %v3440
  %v3514 = vunpack.c.l.b16 %v3441
  %v3515 = vunpack.c.l.b16 %v3442
  %v3516 = vunpack.c.l.b16 %v3443
  %v3517 = vunpack.c.l.b16 %v3444
  %v3518 = vunpack.c.l.b16 %v3445
  %v3519 = vunpack.c.l.b16 %v3446
  %v3520 = vunpack.c.l.b16 %v3447
  %v3521 = vunpack.c.l.b16 %v3448
  %v3522 = vunpack.c.l.b16 %v3449
  %v3523 = vunpack.c.l.b16 %v3450
  %v3524 = vunpack.c.l.b16 %v3451
  %v3525 = vunpack.c.l.b16 %v3452
  %v3526 = vunpack.c.l.b16 %v3453
  %v3527 = vunpack.c.l.b16 %v3454
  %v3528 = vpack.c.b16 %v3497, %v3496
  %v3529 = vpack.c.b16 %v3499, %v3498
  %v3530 = vpack.c.b16 %v3501, %v3500
  %v3531 = vpack.c.b16 %v3503, %v3502
  %v3532 = vpack.c.b16 %v3505, %v3504
  %v3533 = vpack.c.b16 %v3507, %v3506
  %v3534 = vpack.c.b16 %v3509, %v3508
  %v3535 = vpack.c.b16 %v3511, %v3510
  %v3536 = vpack.c.b16 %v3513, %v3512
  %v3537 = vpack.c.b16 %v3515, %v3514
  %v3538 = vpack.c.b16 %v3517, %v3516
  %v3539 = vpack.c.b16 %v3519, %v3518
  %v3540 = vpack.c.b16 %v3521, %v3520
  %v3541 = vpack.c.b16 %v3523, %v3522
  %v3542 = vpack.c.b16 %v3525, %v3524
  %v3543 = vpack.c.b16 %v3527, %v3526
  %3560 = vmatprep.subr.bf16.mxu0 0
  %3561 = vmatpush1.bf16.msra.mxu0 %v3535
  %3562 = vmatprep.subr.bf16.mxu0 0
  %3563 = vmatpush1.bf16.msra.mxu0 %v3534
  %3564 = vmatprep.subr.bf16.mxu0 0
  %3565 = vmatpush1.bf16.msra.mxu0 %v3533
  %3566 = vmatprep.subr.bf16.mxu0 0
  %3567 = vmatpush1.bf16.msra.mxu0 %v3532
  %3568 = vmatprep.subr.bf16.mxu0 0
  %3569 = vmatpush1.bf16.msra.mxu0 %v3531
  %3570 = vmatprep.subr.bf16.mxu0 0
  %3571 = vmatpush1.bf16.msra.mxu0 %v3530
  %3572 = vmatprep.subr.bf16.mxu0 0
  %3573 = vmatpush1.bf16.msra.mxu0 %v3529
  %3574 = vmatprep.subr.bf16.mxu0 0
  %3575 = vmatpush1.bf16.msra.mxu0 %v3528
  %3576 = vmatprep.subr.bf16.mxu0 0
  %3577 = vmatpush2.bf16.msra.mxu0 %v3543
  %3578 = vmatprep.subr.bf16.mxu0 0
  %3579 = vmatpush2.bf16.msra.mxu0 %v3542
  %3580 = vmatprep.subr.bf16.mxu0 0
  %3581 = vmatpush2.bf16.msra.mxu0 %v3541
  %3582 = vmatprep.subr.bf16.mxu0 0
  %3583 = vmatpush2.bf16.msra.mxu0 %v3540
  %3584 = vmatprep.subr.bf16.mxu0 0
  %3585 = vmatpush2.bf16.msra.mxu0 %v3539
  %3586 = vmatprep.subr.bf16.mxu0 0
  %3587 = vmatpush2.bf16.msra.mxu0 %v3538
  %3588 = vmatprep.subr.bf16.mxu0 0
  %3589 = vmatpush2.bf16.msra.mxu0 %v3537
  %3590 = vmatprep.subr.bf16.mxu0 0
  %3591 = vmatpush2.bf16.msra.mxu0 %v3536
  %3592 = vmatprep.mubr.bf16.mxu0 %v3456
  %3593 = vmatmul.mubr.bf16.gmra.mxu0 %v3455
  %v3594 = vpop.f32.mrf.mxu0
  %v3595 = vadd.f32 %v3462, %v3594
  %v3596 = vpop.f32.mrf.mxu0
  %v3597 = vpop.f32.mrf.mxu0
  %v3598 = vpop.f32.mrf.mxu0
  %3599 = vdwg.mxu0
  %v3600 = vadd.f32 %v3595, %v3088
  %v3601 = vld [vmem:[%s12 + $0x18] sm:$0xf]
  %v3602 = vld [vmem:[%s12 + $0x34] sm:$0xf]
  %v3603 = vld [vmem:[%s12 + $0x50] sm:$0xf]
  %v3604 = vld [vmem:[%s12 + $0x6c] sm:$0xf]
  %v3605 = vld [vmem:[%s12 + $0x88] sm:$0xf]
  %v3606 = vld [vmem:[%s12 + $0xa4] sm:$0xf]
  %v3607 = vld [vmem:[%s12 + $0xc0] sm:$0xf]
  %v3608 = vld [vmem:[%s12 + $0xdc] sm:$0xf]
  %v3609 = vld [vmem:[%s12 + $0xf8] sm:$0xf]
  %v3610 = vld [vmem:[%s12 + $0x114] sm:$0xf]
  %v3611 = vld [vmem:[%s12 + $0x130] sm:$0xf]
  %v3612 = vld [vmem:[%s12 + $0x14c] sm:$0xf]
  %v3613 = vld [vmem:[%s12 + $0x168] sm:$0xf]
  %v3614 = vld [vmem:[%s12 + $0x184] sm:$0xf]
  %v3615 = vld [vmem:[%s12 + $0x1a0] sm:$0xf]
  %v3616 = vld [vmem:[%s12 + $0x1bc] sm:$0xf]
  %v3617 = vpack.c.bf16 %v3600, %v3600
  %v3634 = vunpack.c.l.b16 %v3601
  %v3635 = vunpack.c.l.b16 %v3602
  %v3636 = vunpack.c.l.b16 %v3603
  %v3637 = vunpack.c.l.b16 %v3604
  %v3638 = vunpack.c.l.b16 %v3605
  %v3639 = vunpack.c.l.b16 %v3606
  %v3640 = vunpack.c.l.b16 %v3607
  %v3641 = vunpack.c.l.b16 %v3608
  %v3642 = vunpack.c.l.b16 %v3609
  %v3643 = vunpack.c.l.b16 %v3610
  %v3644 = vunpack.c.l.b16 %v3611
  %v3645 = vunpack.c.l.b16 %v3612
  %v3646 = vunpack.c.l.b16 %v3613
  %v3647 = vunpack.c.l.b16 %v3614
  %v3648 = vunpack.c.l.b16 %v3615
  %v3649 = vunpack.c.l.b16 %v3616
  %v3650 = vpack.c.b16 %v3635, %v3634
  %v3651 = vpack.c.b16 %v3637, %v3636
  %v3652 = vpack.c.b16 %v3639, %v3638
  %v3653 = vpack.c.b16 %v3641, %v3640
  %v3654 = vpack.c.b16 %v3643, %v3642
  %v3655 = vpack.c.b16 %v3645, %v3644
  %v3656 = vpack.c.b16 %v3647, %v3646
  %v3657 = vpack.c.b16 %v3649, %v3648
  %3666 = vmatprep.subr.bf16.mxu0 0
  %3667 = vmatpush1.bf16.msra.mxu0 %v3657
  %3668 = vmatprep.subr.bf16.mxu0 0
  %3669 = vmatpush1.bf16.msra.mxu0 %v3656
  %3670 = vmatprep.subr.bf16.mxu0 0
  %3671 = vmatpush1.bf16.msra.mxu0 %v3655
  %3672 = vmatprep.subr.bf16.mxu0 0
  %3673 = vmatpush1.bf16.msra.mxu0 %v3654
  %3674 = vmatprep.subr.bf16.mxu0 0
  %3675 = vmatpush1.bf16.msra.mxu0 %v3653
  %3676 = vmatprep.subr.bf16.mxu0 0
  %3677 = vmatpush1.bf16.msra.mxu0 %v3652
  %3678 = vmatprep.subr.bf16.mxu0 0
  %3679 = vmatpush1.bf16.msra.mxu0 %v3651
  %3680 = vmatprep.subr.bf16.mxu0 0
  %3681 = vmatpush1.bf16.msra.mxu0 %v3650
  %3682 = vmatprep.subr.bf16.mxu0 0
  %3683 = vmatpush2.bf16.msra.mxu0 0
  %3684 = vmatprep.subr.bf16.mxu0 0
  %3685 = vmatpush2.bf16.msra.mxu0 0
  %3686 = vmatprep.subr.bf16.mxu0 0
  %3687 = vmatpush2.bf16.msra.mxu0 0
  %3688 = vmatprep.subr.bf16.mxu0 0
  %3689 = vmatpush2.bf16.msra.mxu0 0
  %3690 = vmatprep.subr.bf16.mxu0 0
  %3691 = vmatpush2.bf16.msra.mxu0 0
  %3692 = vmatprep.subr.bf16.mxu0 0
  %3693 = vmatpush2.bf16.msra.mxu0 0
  %3694 = vmatprep.subr.bf16.mxu0 0
  %3695 = vmatpush2.bf16.msra.mxu0 0
  %3696 = vmatprep.subr.bf16.mxu0 0
  %3697 = vmatpush2.bf16.msra.mxu0 0
  %3698 = vmatprep.mubr.bf16.mxu0 0
  %3699 = vmatmul.mubr.bf16.gmra.mxu0 %v3617
  %v3700 = vpop.f32.mrf.mxu0
  %v3701 = vadd.f32 0.0, %v3700
  %v3702 = vpop.f32.mrf.mxu0
  %v3703 = vpop.f32.mrf.mxu0
  %v3704 = vpop.f32.mrf.mxu0
  %3705 = vdwg.mxu0
  %v3706 = vadd.f32 %v2488, %v3701
  %v3707 = vld [vmem:[%s19] sm:$0x1]
  %v3709 = vlaneseq
  %v3710 = vshrl.u32 %v3709, 7
  %v3711 = vsub.s32 0, %v3710
  %v3712 = vrot.slane %v3707, %v3711
  %v3714 = vadd.f32 %v3706, %v3712
  %v3715 = vld [vmem:[%s15] sm:$0xf]
  %v3716 = vpack.c.bf16 %v3714, %v3714
  %vm3717 = vcmask 64512
  %v3719 = vsel %vm3717, %v3715, 0
  %vm3721 = vcmask 1043456
  %v3723 = vsel %vm3721, %v3716, 0
  %3725 = vmatprep.subr.bf16.mxu0 0
  %3726 = vmatpush1.bf16.msra.mxu0 0
  %3727 = vmatprep.subr.bf16.mxu0 0
  %3728 = vmatpush1.bf16.msra.mxu0 0
  %3729 = vmatprep.subr.bf16.mxu0 0
  %3730 = vmatpush1.bf16.msra.mxu0 0
  %3731 = vmatprep.subr.bf16.mxu0 0
  %3732 = vmatpush1.bf16.msra.mxu0 0
  %3733 = vmatprep.subr.bf16.mxu0 0
  %3734 = vmatpush1.bf16.msra.mxu0 0
  %3735 = vmatprep.subr.bf16.mxu0 0
  %3736 = vmatpush1.bf16.msra.mxu0 0
  %3737 = vmatprep.subr.bf16.mxu0 0
  %3738 = vmatpush1.bf16.msra.mxu0 0
  %3739 = vmatprep.subr.bf16.mxu0 0
  %3740 = vmatpush1.bf16.msra.mxu0 %v3723
  %3741 = vmatprep.subr.bf16.mxu0 0
  %3742 = vmatpush2.bf16.msra.mxu0 0
  %3743 = vmatprep.subr.bf16.mxu0 0
  %3744 = vmatpush2.bf16.msra.mxu0 0
  %3745 = vmatprep.subr.bf16.mxu0 0
  %3746 = vmatpush2.bf16.msra.mxu0 0
  %3747 = vmatprep.subr.bf16.mxu0 0
  %3748 = vmatpush2.bf16.msra.mxu0 0
  %3749 = vmatprep.subr.bf16.mxu0 0
  %3750 = vmatpush2.bf16.msra.mxu0 0
  %3751 = vmatprep.subr.bf16.mxu0 0
  %3752 = vmatpush2.bf16.msra.mxu0 0
  %3753 = vmatprep.subr.bf16.mxu0 0
  %3754 = vmatpush2.bf16.msra.mxu0 0
  %3755 = vmatprep.subr.bf16.mxu0 0
  %3756 = vmatpush2.bf16.msra.mxu0 0
  %3757 = vmatprep.mubr.bf16.mxu0 0
  %3758 = vmatmul.mubr.bf16.gmra.mxu0 %v3719
  %v3759 = vpop.f32.mrf.mxu0
  %v3760 = vadd.f32 0.0, %v3759
  %v3761 = vpop.f32.mrf.mxu0
  %v3762 = vpop.f32.mrf.mxu0
  %v3763 = vpop.f32.mrf.mxu0
  %3764 = vdwg.mxu0
  %v3765 = vsub.f32 %v3714, %v3760
  %v3766 = vmul.f32 %v3765, %v3765
  %v3767 = vpack.c.bf16 %v3766, %v3766
  %v3769 = vsel %vm3721, %v3767, 0
  %3771 = vmatprep.subr.bf16.mxu0 0
  %3772 = vmatpush1.bf16.msra.mxu0 0
  %3773 = vmatprep.subr.bf16.mxu0 0
  %3774 = vmatpush1.bf16.msra.mxu0 0
  %3775 = vmatprep.subr.bf16.mxu0 0
  %3776 = vmatpush1.bf16.msra.mxu0 0
  %3777 = vmatprep.subr.bf16.mxu0 0
  %3778 = vmatpush1.bf16.msra.mxu0 0
  %3779 = vmatprep.subr.bf16.mxu0 0
  %3780 = vmatpush1.bf16.msra.mxu0 0
  %3781 = vmatprep.subr.bf16.mxu0 0
  %3782 = vmatpush1.bf16.msra.mxu0 0
  %3783 = vmatprep.subr.bf16.mxu0 0
  %3784 = vmatpush1.bf16.msra.mxu0 0
  %3785 = vmatprep.subr.bf16.mxu0 0
  %3786 = vmatpush1.bf16.msra.mxu0 %v3769
  %3787 = vmatprep.subr.bf16.mxu0 0
  %3788 = vmatpush2.bf16.msra.mxu0 0
  %3789 = vmatprep.subr.bf16.mxu0 0
  %3790 = vmatpush2.bf16.msra.mxu0 0
  %3791 = vmatprep.subr.bf16.mxu0 0
  %3792 = vmatpush2.bf16.msra.mxu0 0
  %3793 = vmatprep.subr.bf16.mxu0 0
  %3794 = vmatpush2.bf16.msra.mxu0 0
  %3795 = vmatprep.subr.bf16.mxu0 0
  %3796 = vmatpush2.bf16.msra.mxu0 0
  %3797 = vmatprep.subr.bf16.mxu0 0
  %3798 = vmatpush2.bf16.msra.mxu0 0
  %3799 = vmatprep.subr.bf16.mxu0 0
  %3800 = vmatpush2.bf16.msra.mxu0 0
  %3801 = vmatprep.subr.bf16.mxu0 0
  %3802 = vmatpush2.bf16.msra.mxu0 0
  %3803 = vmatprep.mubr.bf16.mxu0 0
  %3804 = vmatmul.mubr.bf16.gmra.mxu0 %v3719
  %v3805 = vpop.f32.mrf.mxu0
  %v3806 = vadd.f32 1e-05, %v3805
  %v3807 = vpop.f32.mrf.mxu0
  %v3808 = vpop.f32.mrf.mxu0
  %v3809 = vpop.f32.mrf.mxu0
  %3810 = vdwg.mxu0
  %v3811 = vrsqrt.pop %v3806
  %v3812 = vmul.f32 %v3765, %v3811
  %v3813 = vld [vmem:[%s18] sm:$0xff]
  %3815 = vset.pattern.permute.xlu0 0
  %3816 = vperm.xlu0 %3815, %v3813
  %v3817 = vpop.permute.xlu0 %3816
  %v3819 = vmul.f32 %v3812, %v3817
  %3820 = vset.pattern.permute.xlu0 1
  %3821 = vperm.xlu0 %3820, %v3813
  %v3822 = vpop.permute.xlu0 %3821
  %v3824 = vadd.f32 %v3819, %v3822
  %v3825 = vld [vmem:[%s16] sm:$0xf]
  %v3826 = vld [vmem:[%s16 + $0x4] sm:$0xf]
  %v3827 = vpack.c.bf16 %v3824, %v3824
  %v3828 = vld [vmem:[%s18] sm:$0xff]
  %v3829 = vld [vmem:[%s18 + $0x8] sm:$0xff]
  %3831 = vset.pattern.permute.xlu0 2
  %3832 = vperm.xlu0 %3831, %v3828
  %v3833 = vpop.permute.xlu0 %3832
  %3836 = vset.pattern.permute.xlu0 2
  %3837 = vperm.xlu0 %3836, %v3829
  %v3838 = vpop.permute.xlu0 %3837
  %v3842 = vunpack.c.l.b16 %v3825
  %v3843 = vunpack.c.l.b16 %v3826
  %v3844 = vpack.c.b16 %v3843, %v3842
  %v3846 = vsel %vm3717, %v3844, 0
  %v3849 = vsel %vm3721, %v3827, 0
  %3851 = vmatprep.subr.bf16.mxu0 0
  %3852 = vmatpush1.bf16.msra.mxu0 0
  %3853 = vmatprep.subr.bf16.mxu0 0
  %3854 = vmatpush1.bf16.msra.mxu0 0
  %3855 = vmatprep.subr.bf16.mxu0 0
  %3856 = vmatpush1.bf16.msra.mxu0 0
  %3857 = vmatprep.subr.bf16.mxu0 0
  %3858 = vmatpush1.bf16.msra.mxu0 0
  %3859 = vmatprep.subr.bf16.mxu0 0
  %3860 = vmatpush1.bf16.msra.mxu0 0
  %3861 = vmatprep.subr.bf16.mxu0 0
  %3862 = vmatpush1.bf16.msra.mxu0 0
  %3863 = vmatprep.subr.bf16.mxu0 0
  %3864 = vmatpush1.bf16.msra.mxu0 0
  %3865 = vmatprep.subr.bf16.mxu0 0
  %3866 = vmatpush1.bf16.msra.mxu0 %v3849
  %3867 = vmatprep.subr.bf16.mxu0 0
  %3868 = vmatpush2.bf16.msra.mxu0 0
  %3869 = vmatprep.subr.bf16.mxu0 0
  %3870 = vmatpush2.bf16.msra.mxu0 0
  %3871 = vmatprep.subr.bf16.mxu0 0
  %3872 = vmatpush2.bf16.msra.mxu0 0
  %3873 = vmatprep.subr.bf16.mxu0 0
  %3874 = vmatpush2.bf16.msra.mxu0 0
  %3875 = vmatprep.subr.bf16.mxu0 0
  %3876 = vmatpush2.bf16.msra.mxu0 0
  %3877 = vmatprep.subr.bf16.mxu0 0
  %3878 = vmatpush2.bf16.msra.mxu0 0
  %3879 = vmatprep.subr.bf16.mxu0 0
  %3880 = vmatpush2.bf16.msra.mxu0 0
  %3881 = vmatprep.subr.bf16.mxu0 0
  %3882 = vmatpush2.bf16.msra.mxu0 0
  %3883 = vmatprep.mubr.bf16.mxu0 0
  %3884 = vmatmul.mubr.bf16.gmra.mxu0 %v3846
  %v3885 = vpop.f32.mrf.mxu0
  %v3886 = vadd.f32 %v3833, %v3885
  %v3887 = vpop.f32.mrf.mxu0
  %v3888 = vpop.f32.mrf.mxu0
  %v3889 = vadd.f32 %v3838, %v3888
  %v3890 = vpop.f32.mrf.mxu0
  %3891 = vdwg.mxu0
  %v3892 = vmul.f32 %v3886, 0.5
  %v3893 = vmul.f32 %v3889, 0.5
  %v3894 = vmul.f32 %v3886, 0.044715
  %v3895 = vmul.f32 %v3889, 0.044715
  %v3896 = vmul.f32 %v3894, %v3886
  %v3897 = vmul.f32 %v3895, %v3889
  %v3898 = vmul.f32 %v3896, %v3886
  %v3899 = vmul.f32 %v3897, %v3889
  %v3900 = vadd.f32 %v3886, %v3898
  %v3901 = vadd.f32 %v3889, %v3899
  %v3902 = vmul.f32 %v3900, 0.7978846
  %v3903 = vmul.f32 %v3901, 0.7978846
  %v3904 = vtanh.pop %v3902
  %v3905 = vtanh.pop %v3903
  %v3906 = vadd.f32 %v3904, 1.0
  %v3907 = vadd.f32 %v3905, 1.0
  %v3908 = vmul.f32 %v3892, %v3906
  %v3909 = vmul.f32 %v3893, %v3907
  %v3910 = vld [vmem:[%s17] sm:$0xf]
  %v3911 = vpack.c.bf16 %v3909, %v3908
  %3912 = vset.pattern.permute.xlu0 3
  %3913 = vperm.xlu0 %3912, %v3813
  %v3914 = vpop.permute.xlu0 %3913
  %vm3916 = vcmask 130048
  %v3918 = vsel %vm3916, %v3910, 0
  %3920 = vmatprep.subr.bf16.mxu0 0
  %3921 = vmatpush1.bf16.msra.mxu0 0
  %3922 = vmatprep.subr.bf16.mxu0 0
  %3923 = vmatpush1.bf16.msra.mxu0 0
  %3924 = vmatprep.subr.bf16.mxu0 0
  %3925 = vmatpush1.bf16.msra.mxu0 0
  %3926 = vmatprep.subr.bf16.mxu0 0
  %3927 = vmatpush1.bf16.msra.mxu0 0
  %3928 = vmatprep.subr.bf16.mxu0 0
  %3929 = vmatpush1.bf16.msra.mxu0 0
  %3930 = vmatprep.subr.bf16.mxu0 0
  %3931 = vmatpush1.bf16.msra.mxu0 0
  %3932 = vmatprep.subr.bf16.mxu0 0
  %3933 = vmatpush1.bf16.msra.mxu0 0
  %3934 = vmatprep.subr.bf16.mxu0 0
  %3935 = vmatpush1.bf16.msra.mxu0 %v3911
  %3936 = vmatprep.subr.bf16.mxu0 0
  %3937 = vmatpush2.bf16.msra.mxu0 0
  %3938 = vmatprep.subr.bf16.mxu0 0
  %3939 = vmatpush2.bf16.msra.mxu0 0
  %3940 = vmatprep.subr.bf16.mxu0 0
  %3941 = vmatpush2.bf16.msra.mxu0 0
  %3942 = vmatprep.subr.bf16.mxu0 0
  %3943 = vmatpush2.bf16.msra.mxu0 0
  %3944 = vmatprep.subr.bf16.mxu0 0
  %3945 = vmatpush2.bf16.msra.mxu0 0
  %3946 = vmatprep.subr.bf16.mxu0 0
  %3947 = vmatpush2.bf16.msra.mxu0 0
  %3948 = vmatprep.subr.bf16.mxu0 0
  %3949 = vmatpush2.bf16.msra.mxu0 0
  %3950 = vmatprep.subr.bf16.mxu0 0
  %3951 = vmatpush2.bf16.msra.mxu0 0
  %3952 = vmatprep.mubr.bf16.mxu0 0
  %3953 = vmatmul.mubr.bf16.gmra.mxu0 %v3918
  %v3954 = vpop.f32.mrf.mxu0
  %v3955 = vadd.f32 %v3914, %v3954
  %v3956 = vpop.f32.mrf.mxu0
  %v3957 = vpop.f32.mrf.mxu0
  %v3958 = vpop.f32.mrf.mxu0
  %3959 = vdwg.mxu0
  %v3960 = vadd.f32 %v3955, %v3714
  %3961 = vxpose.xlu0.b32.start [1/16] %v3960, 128
  %3962 = vxpose.xlu0.b32.cont [2/16] 0.0, 128
  %3963 = vxpose.xlu0.b32.cont [3/16] 0.0, 128
  %3964 = vxpose.xlu0.b32.cont [4/16] 0.0, 128
  %3965 = vxpose.xlu0.b32.cont [5/16] 0.0, 128
  %3966 = vxpose.xlu0.b32.cont [6/16] 0.0, 128
  %3967 = vxpose.xlu0.b32.cont [7/16] 0.0, 128
  %3968 = vxpose.xlu0.b32.cont [8/16] 0.0, 128
  %3969 = vxpose.xlu0.b32.cont [9/16] 0.0, 128
  %3970 = vxpose.xlu0.b32.cont [10/16] 0.0, 128
  %3971 = vxpose.xlu0.b32.cont [11/16] 0.0, 128
  %3972 = vxpose.xlu0.b32.cont [12/16] 0.0, 128
  %3973 = vxpose.xlu0.b32.cont [13/16] 0.0, 128
  %3974 = vxpose.xlu0.b32.cont [14/16] 0.0, 128
  %3975 = vxpose.xlu0.b32.cont [15/16] 0.0, 128
  %3976 = vxpose.xlu0.b32.end [16/16] 0.0, 128
  %v3977 = vpop.trf.xlu0
  %v3978 = vpop.trf.xlu0
  %v3979 = vpop.trf.xlu0
  %v3980 = vpop.trf.xlu0
  %v3981 = vpop.trf.xlu0
  %v3982 = vpop.trf.xlu0
  %v3983 = vpop.trf.xlu0
  %v3984 = vpop.trf.xlu0
  %v3985 = vpop.trf.xlu0
  %v3986 = vpop.trf.xlu0
  %v3987 = vpop.trf.xlu0
  %v3988 = vpop.trf.xlu0
  %v3989 = vpop.trf.xlu0
  %v3990 = vpop.trf.xlu0
  %v3991 = vpop.trf.xlu0
  %v3992 = vpop.trf.xlu0
  %vm3993 = vcmask 31744
  %3994 = vst.msk [vmem:[%s20] sm:$0xff] %vm3993, %v3977
  %3995 = vst.msk [vmem:[%s20 + $0x8] sm:$0xff] %vm3993, %v3978
  %3998 = vrot.lane.b32.xlu0 %v3977, 124
  %v3999 = vpop.permute.xlu0 %3998
  %4000 = vrot.lane.b32.xlu0 %v3978, 124
  %v4001 = vpop.permute.xlu0 %4000
  %s4004 = scalar_lea.vmem %s20, 16
  %4005 = vst.msk [vmem:[%s4004] sm:$0xff] %vm3993, %v3999
  %4006 = vst.msk [vmem:[%s4004 + $0x8] sm:$0xff] %vm3993, %v4001
  // Predicated region
  $region82: #{whp_mixer_forward.1} parent=0 // pred_check
    _
  $region83: #{whp_mixer_forward.1} parent=0 // pred_check_branch
    %4008 = sbr.rel (0) target = $region85
  $region84: #{whp_mixer_forward.1} parent=0 // pred_region
    _
  $region85: #{whp_mixer_forward.1} parent=0 // pred_fallthru
    _
  // Predicated region
  $region86: #{whp_mixer_forward.1} parent=0 // pred_check
    _
  $region87: #{whp_mixer_forward.1} parent=0 // pred_check_branch
    %4010 = sbr.rel (0) target = $region89
  $region88: #{whp_mixer_forward.1} parent=0 // pred_region
    _
  $region89: #{whp_mixer_forward.1} parent=0 // pred_fallthru
    _

</llo_original>
